<compile_context>
chip_gen: v6e
topology: v6e:2x2x1
jax: 0.10.0
libtpu: 0.0.40
codegen_flags: <defaults>
</compile_context>

<pallas_src>
import functools

import jax
import jax.numpy as jnp
from jax import lax
from jax.experimental import pallas as pl
from jax.experimental.pallas import tpu as pltpu


def _round_up(x, m):
    return (x + m - 1) // m * m


# --------------------------------------------------------------------------
# Fused kernel: conv1(3x3,s1,p1)+BN1+ReLU  ->  conv2(3x3,s1,p1)+BN2+res+ReLU
# One grid step processes NB images; h1 never leaves VMEM.
# --------------------------------------------------------------------------
def _fused_basic_block_kernel(x_ref, w1_ref, b1_ref, w2_ref, b2_ref, res_ref,
                              o_ref, xpad_ref, h1pad_ref,
                              *, H, W, CIN_P, COUT_P, NB, mxu_dtype):
    M = NB * H * W

    def zero_border(pad_ref, c):
        # Only the 1-pixel halo needs (re)zeroing: the interior is fully
        # overwritten below.  Runs every iteration (scratch is per-core and
        # persists across grid steps) but only writes 4 thin strips, not the slab.
        pad_ref[:, 0:1, :, :] = jnp.zeros((NB, 1, W + 2, c), jnp.float32)
        pad_ref[:, H + 1:H + 2, :, :] = jnp.zeros((NB, 1, W + 2, c), jnp.float32)
        pad_ref[:, :, 0:1, :] = jnp.zeros((NB, H + 2, 1, c), jnp.float32)
        pad_ref[:, :, W + 1:W + 2, :] = jnp.zeros((NB, H + 2, 1, c), jnp.float32)

    def conv3x3(pad_ref, w_ref, c):
        # 9 accumulating MXU dots (K = c each) instead of a materialized
        # (M, 9*c) im2col slab: identical MXU work, no concat copy.
        acc = None
        tap = 0
        for kh in range(3):
            for kw in range(3):
                patch = pad_ref[:, kh:kh + H, kw:kw + W, :].reshape(M, c)
                part = jnp.dot(patch.astype(mxu_dtype), w_ref[tap],
                               preferred_element_type=jnp.float32)
                acc = part if acc is None else acc + part
                tap += 1
        return acc

    # ---- stage TSM-shifted, lane-padded input into a zero-bordered VMEM slab ----
    zero_border(xpad_ref, CIN_P)
    xpad_ref[:, 1:H + 1, 1:W + 1, :] = x_ref[...].astype(jnp.float32)

    # -------------------- conv1 (+ folded BN1) + ReLU ---------------------------
    h1 = jnp.maximum(conv3x3(xpad_ref, w1_ref, CIN_P) + b1_ref[...], 0.0)

    # ---- conv1 -> conv2 handoff stays in VMEM (own zero-bordered padded slab) ---
    zero_border(h1pad_ref, COUT_P)
    h1pad_ref[:, 1:H + 1, 1:W + 1, :] = h1.reshape(NB, H, W, COUT_P)

    # ---------------- conv2 (+ folded BN2) + residual + ReLU --------------------
    out = (conv3x3(h1pad_ref, w2_ref, COUT_P) + b2_ref[...]
           + res_ref[...].astype(jnp.float32))
    o_ref[...] = jnp.maximum(out, 0.0).astype(o_ref.dtype)


# --------------------------------------------------------------------------
# Wrapper helpers
# --------------------------------------------------------------------------
def fold_bn(gamma, beta, mean, var, eps=1e-5):
    scale = gamma / jnp.sqrt(var + eps)
    return scale, beta - mean * scale


def _prep_weight(w_oihw, bn_scale, cin_p, cout_p, dtype):
    """(Cout,Cin,3,3) torch conv weight -> (9, cin_p, cout_p) tap matrices,
    with the BatchNorm scale folded in and channels zero-padded (lane-dense)."""
    cout, cin = w_oihw.shape[:2]
    w = w_oihw * bn_scale[:, None, None, None]                # fold BN scale
    w = jnp.transpose(w, (2, 3, 1, 0))                        # (3,3,Cin,Cout)
    w = jnp.pad(w, ((0, 0), (0, 0), (0, cin_p - cin), (0, cout_p - cout)))
    return w.reshape(9, cin_p, cout_p).astype(dtype)


def _vmem_limit_bytes():
    """Generation-aware scoped-VMEM limit (v5e/v6e: 128 MiB phys, v7x: 64 MiB)."""
    cap = 64 << 20                                            # conservative (v7x)
    try:
        info = pltpu.get_tpu_info()
        cap = int(getattr(info, "vmem_capacity_bytes", cap))
    except Exception:
        pass
    return min(int(cap * 0.8), 100 << 20)


def _pick_block_n(n_images, per_image_bytes, budget_bytes):
    """Largest divisor of N giving >= 4 grid steps (>= 2 pipelined iterations per
    v7x TensorCore under megacore sharding) whose working set fits the budget."""
    best = 1
    for nb in range(1, n_images + 1):
        if (n_images % nb == 0 and n_images // nb >= 4
                and nb * per_image_bytes <= budget_bytes):
            best = nb
    return best


# --------------------------------------------------------------------------
# TSM temporal shift ('zero' version) — cheap memory shuffle, kept in XLA glue.
# --------------------------------------------------------------------------
def tsm_zero(x_nchw, duration):
    N, C, H, W = x_nchw.shape
    b = N // duration
    t = x_nchw.reshape(b, duration, C, H, W)
    fold = C // 8
    pre, post, peri = t[:, :, :fold], t[:, :, fold:2 * fold], t[:, :, 2 * fold:]
    pre = jnp.concatenate([pre[:, 1:], jnp.zeros_like(pre[:, :1])], axis=1)
    post = jnp.concatenate([jnp.zeros_like(post[:, :1]), post[:, :-1]], axis=1)
    return jnp.concatenate([pre, post, peri], axis=2).reshape(N, C, H, W)


# --------------------------------------------------------------------------
# BasicBlock forward
# --------------------------------------------------------------------------
def basic_block_forward(x_nchw, params, num_segments, *,
                        block_n=None, mxu_dtype=jnp.bfloat16):
    N, C, H, W = x_nchw.shape
    planes = params["w1"].shape[0]
    assert params["w1"].shape[1] == C and planes == C, \
        "stride=1 / downsample=None path requires inplanes == planes"

    cin_p = _round_up(C, 128)                                 # lane-dense channels
    cout_p = _round_up(planes, 128)
    mxu_sz = jnp.dtype(mxu_dtype).itemsize
    act_sz = jnp.dtype(x_nchw.dtype).itemsize

    # TSM shift + NHWC + lane padding fused by XLA in one pass each.
    out = tsm_zero(x_nchw, num_segments)
    x_nhwc = jnp.pad(jnp.transpose(out, (0, 2, 3, 1)),
                     ((0, 0), (0, 0), (0, 0), (0, cin_p - C)))          # (N,H,W,cin_p)
    id_flat = jnp.pad(jnp.transpose(x_nchw, (0, 2, 3, 1)).reshape(N * H * W, C),
                      ((0, 0), (0, cout_p - planes)))                   # (N*H*W,cout_p)

    s1, b1 = fold_bn(*params["bn1"])
    s2, b2 = fold_bn(*params["bn2"])
    w1_mat = _prep_weight(params["w1"], s1, cin_p, cout_p, mxu_dtype)
    w2_mat = _prep_weight(params["w2"], s2, cout_p, cout_p, mxu_dtype)
    b1_p = jnp.pad(b1, (0, cout_p - planes)).reshape(1, cout_p).astype(jnp.float32)
    b2_p = jnp.pad(b2, (0, cout_p - planes)).reshape(1, cout_p).astype(jnp.float32)

    # ---- per-step VMEM estimate (f32 slabs + f32 temps + buffered I/O) ----
    fixed = 2 * 9 * (cin_p + cout_p) * cout_p * mxu_sz + 4 * cout_p * 4  # weights(x2 buf)+biases
    per_img = ((H + 2) * (W + 2) * (cin_p + cout_p) * 4          # padded halo slabs (f32)
               + 2 * H * W * cout_p * 4                          # h1 + conv accumulator (f32)
               + H * W * max(cin_p, cout_p) * (4 + mxu_sz)       # per-tap patch temporaries
               + 2 * H * W * cin_p * act_sz                      # x block (double-buffered)
               + 2 * H * W * cout_p * 4                          # residual (double-buffered)
               + 2 * H * W * cout_p * act_sz)                    # output (double-buffered)
    vmem_limit = _vmem_limit_bytes()
    budget = max(int(vmem_limit * 0.85) - fixed, per_img)
    nb = block_n if block_n is not None else _pick_block_n(N, per_img, budget)
    assert N % nb == 0
    grid = (N // nb,)

    kernel = functools.partial(
        _fused_basic_block_kernel, H=H, W=W,
        CIN_P=cin_p, COUT_P=cout_p, NB=nb, mxu_dtype=mxu_dtype)

    flops = 2 * N * H * W * 9 * (cin_p * cout_p + cout_p * cout_p)
    bytes_accessed = (x_nhwc.size * act_sz + id_flat.size * act_sz
                      + (w1_mat.size + w2_mat.size) * mxu_sz
                      + N * H * W * cout_p * act_sz)

    out_flat = pl.pallas_call(
        kernel,
        out_shape=jax.ShapeDtypeStruct((N * H * W, cout_p), x_nchw.dtype),
        grid=grid,
        in_specs=[
            pl.BlockSpec((nb, H, W, cin_p), lambda n: (n, 0, 0, 0)),     # x (TSM-shifted, lane-padded)
            pl.BlockSpec((9, cin_p, cout_p), lambda n: (0, 0, 0)),       # w1 taps (BN1 folded, bf16)
            pl.BlockSpec((1, cout_p), lambda n: (0, 0)),                 # b1
            pl.BlockSpec((9, cout_p, cout_p), lambda n: (0, 0, 0)),      # w2 taps (BN2 folded, bf16)
            pl.BlockSpec((1, cout_p), lambda n: (0, 0)),                 # b2
            pl.BlockSpec((nb * H * W, cout_p), lambda n: (n, 0)),        # residual (lane-padded)
        ],
        out_specs=pl.BlockSpec((nb * H * W, cout_p), lambda n: (n, 0)),
        scratch_shapes=[
            pltpu.VMEM((nb, H + 2, W + 2, cin_p), jnp.float32),          # padded x slab
            pltpu.VMEM((nb, H + 2, W + 2, cout_p), jnp.float32),         # padded h1 slab
        ],
        compiler_params=pltpu.CompilerParams(
            dimension_semantics=("parallel",),                           # megacore on v7x
            vmem_limit_bytes=vmem_limit),
        cost_estimate=pl.CostEstimate(flops=flops, transcendentals=0,
                                      bytes_accessed=bytes_accessed),
    )(x_nhwc, w1_mat, b1_p, w2_mat, b2_p, id_flat)

    out = out_flat.reshape(N, H, W, cout_p)[..., :planes]                # drop lane pad
    return jnp.transpose(out, (0, 3, 1, 2))                              # back to NCHW


# --------------------------------------------------------------------------
# Pure-JAX reference (for correctness check)
# --------------------------------------------------------------------------
def reference_forward(x, params, num_segments):
    dn = ("NCHW", "OIHW", "NCHW")
    s1, b1 = fold_bn(*params["bn1"])
    s2, b2 = fold_bn(*params["bn2"])
    out = tsm_zero(x, num_segments)
    out = lax.conv_general_dilated(out, params["w1"], (1, 1), "SAME",
                                   dimension_numbers=dn)
    out = jnp.maximum(out * s1[None, :, None, None] + b1[None, :, None, None], 0)
    out = lax.conv_general_dilated(out, params["w2"], (1, 1), "SAME",
                                   dimension_numbers=dn)
    out = out * s2[None, :, None, None] + b2[None, :, None, None] + x
    return jnp.maximum(out, 0)


if __name__ == "__main__":
    key = jax.random.PRNGKey(0)
    batch, num_segments = 2, 4
    inplanes = planes = 8          # stride=1, downsample=None => inplanes == planes
    H = W = 8
    N = batch * num_segments       # PyTorch feeds (batch*segments, C, H, W)

    ks = jax.random.split(key, 9)
    x = jax.random.normal(ks[0], (N, inplanes, H, W), jnp.float32)
    params = {
        "w1": jax.random.normal(ks[1], (planes, inplanes, 3, 3), jnp.float32) * 0.1,
        "w2": jax.random.normal(ks[2], (planes, planes, 3, 3), jnp.float32) * 0.1,
        "bn1": (jax.random.uniform(ks[3], (planes,), jnp.float32, 0.5, 1.5),   # gamma
                jax.random.normal(ks[4], (planes,), jnp.float32) * 0.1,        # beta
                jax.random.normal(ks[5], (planes,), jnp.float32) * 0.1,        # running_mean
                jax.random.uniform(ks[6], (planes,), jnp.float32, 0.5, 1.5)),  # running_var
        "bn2": (jax.random.uniform(ks[7], (planes,), jnp.float32, 0.5, 1.5),
                jax.random.normal(ks[8], (planes,), jnp.float32) * 0.1,
                jnp.zeros((planes,), jnp.float32),
                jnp.ones((planes,), jnp.float32)),
    }

    fwd = jax.jit(basic_block_forward, static_argnums=2)
    out = jax.block_until_ready(fwd(x, params, num_segments))

    ref = reference_forward(x, params, num_segments)
    assert out.shape == x.shape
    err = jnp.max(jnp.abs(out - ref))
    # bf16 MXU operands vs f32 reference -> loosened tolerance
    assert jnp.allclose(out, ref, atol=5e-2, rtol=5e-2), f"max err {err}"

    print("KERNEL_OK")
</pallas_src>

<mosaic_0001>
module attributes {stable_mosaic.version = 11 : i64} {
  func.func @_fused_basic_block_kernel(%arg0: i32, %arg1: memref<2x8x8x128xf32, #tpu.memory_space<vmem>>, %arg2: memref<9x128x128xbf16, #tpu.memory_space<vmem>>, %arg3: memref<1x128xf32, #tpu.memory_space<vmem>>, %arg4: memref<9x128x128xbf16, #tpu.memory_space<vmem>>, %arg5: memref<1x128xf32, #tpu.memory_space<vmem>>, %arg6: memref<128x128xf32, #tpu.memory_space<vmem>>, %arg7: memref<128x128xf32, #tpu.memory_space<vmem>>, %arg8: memref<2x10x10x128xf32, #tpu.memory_space<vmem>>, %arg9: memref<2x10x10x128xf32, #tpu.memory_space<vmem>>) attributes {dimension_semantics = [#tpu.dimension_semantics<parallel>], iteration_bounds = array<i64: 4>, scalar_prefetch = 0 : i64, scratch_operands = 2 : i64, tpu.core_type = #tpu.core_type<tc>, window_params = [{transform_indices = @transform_0, window_bounds = array<i64: 2, 8, 8, 128>}, {pipeline_mode = #tpu.pipeline_mode<synchronous>, transform_indices = @transform_1, window_bounds = array<i64: 9, 128, 128>}, {pipeline_mode = #tpu.pipeline_mode<synchronous>, transform_indices = @transform_2, window_bounds = array<i64: 1, 128>}, {pipeline_mode = #tpu.pipeline_mode<synchronous>, transform_indices = @transform_3, window_bounds = array<i64: 9, 128, 128>}, {pipeline_mode = #tpu.pipeline_mode<synchronous>, transform_indices = @transform_4, window_bounds = array<i64: 1, 128>}, {transform_indices = @transform_5, window_bounds = array<i64: 128, 128>}, {transform_indices = @transform_6, window_bounds = array<i64: 128, 128>}]} {
    %cst = arith.constant 0.000000e+00 : f32
    %0 = vector.broadcast %cst : f32 to vector<2x1x10x128xf32>
    %c0 = arith.constant 0 : index
    %c0_0 = arith.constant 0 : index
    %c0_1 = arith.constant 0 : index
    %c0_2 = arith.constant 0 : index
    %1 = vector.load %arg8[%c0, %c0_0, %c0_1, %c0_2] : memref<2x10x10x128xf32, #tpu.memory_space<vmem>>, vector<2x1x10x128xf32>
    tpu.vector_store %arg8[%c0, %c0_0, %c0_1, %c0_2], %0 {strides = array<i32>} : memref<2x10x10x128xf32, #tpu.memory_space<vmem>>, vector<2x1x10x128xf32>,
    %cst_3 = arith.constant 0.000000e+00 : f32
    %2 = vector.broadcast %cst_3 : f32 to vector<2x1x10x128xf32>
    %c0_4 = arith.constant 0 : index
    %c9 = arith.constant 9 : index
    %c0_5 = arith.constant 0 : index
    %c0_6 = arith.constant 0 : index
    %3 = vector.load %arg8[%c0_4, %c9, %c0_5, %c0_6] : memref<2x10x10x128xf32, #tpu.memory_space<vmem>>, vector<2x1x10x128xf32>
    tpu.vector_store %arg8[%c0_4, %c9, %c0_5, %c0_6], %2 {strides = array<i32>} : memref<2x10x10x128xf32, #tpu.memory_space<vmem>>, vector<2x1x10x128xf32>,
    %cst_7 = arith.constant 0.000000e+00 : f32
    %4 = vector.broadcast %cst_7 : f32 to vector<2x10x1x128xf32>
    %c0_8 = arith.constant 0 : index
    %c0_9 = arith.constant 0 : index
    %c0_10 = arith.constant 0 : index
    %c0_11 = arith.constant 0 : index
    %5 = vector.load %arg8[%c0_8, %c0_9, %c0_10, %c0_11] : memref<2x10x10x128xf32, #tpu.memory_space<vmem>>, vector<2x10x1x128xf32>
    tpu.vector_store %arg8[%c0_8, %c0_9, %c0_10, %c0_11], %4 {strides = array<i32>} : memref<2x10x10x128xf32, #tpu.memory_space<vmem>>, vector<2x10x1x128xf32>,
    %cst_12 = arith.constant 0.000000e+00 : f32
    %6 = vector.broadcast %cst_12 : f32 to vector<2x10x1x128xf32>
    %c0_13 = arith.constant 0 : index
    %c0_14 = arith.constant 0 : index
    %c9_15 = arith.constant 9 : index
    %c0_16 = arith.constant 0 : index
    %7 = vector.load %arg8[%c0_13, %c0_14, %c9_15, %c0_16] : memref<2x10x10x128xf32, #tpu.memory_space<vmem>>, vector<2x10x1x128xf32>
    tpu.vector_store %arg8[%c0_13, %c0_14, %c9_15, %c0_16], %6 {strides = array<i32>} : memref<2x10x10x128xf32, #tpu.memory_space<vmem>>, vector<2x10x1x128xf32>,
    %c0_17 = arith.constant 0 : index
    %c0_18 = arith.constant 0 : index
    %c0_19 = arith.constant 0 : index
    %c0_20 = arith.constant 0 : index
    %8 = vector.load %arg1[%c0_17, %c0_18, %c0_19, %c0_20] : memref<2x8x8x128xf32, #tpu.memory_space<vmem>>, vector<2x8x8x128xf32>
    %c0_21 = arith.constant 0 : index
    %c1 = arith.constant 1 : index
    %c1_22 = arith.constant 1 : index
    %c0_23 = arith.constant 0 : index
    %9 = vector.load %arg8[%c0_21, %c1, %c1_22, %c0_23] : memref<2x10x10x128xf32, #tpu.memory_space<vmem>>, vector<2x8x8x128xf32>
    tpu.vector_store %arg8[%c0_21, %c1, %c1_22, %c0_23], %8 {strides = array<i32>} : memref<2x10x10x128xf32, #tpu.memory_space<vmem>>, vector<2x8x8x128xf32>,
    %c0_24 = arith.constant 0 : index
    %c0_25 = arith.constant 0 : index
    %c0_26 = arith.constant 0 : index
    %c0_27 = arith.constant 0 : index
    %10 = vector.load %arg8[%c0_24, %c0_25, %c0_26, %c0_27] : memref<2x10x10x128xf32, #tpu.memory_space<vmem>>, vector<2x8x8x128xf32>
    %11 = vector.shape_cast %10 : vector<2x8x8x128xf32> to vector<128x128xf32>
    %12 = arith.truncf %11 : vector<128x128xf32> to vector<128x128xbf16>
    %c0_28 = arith.constant 0 : index
    %c0_29 = arith.constant 0 : index
    %c0_30 = arith.constant 0 : index
    %13 = vector.load %arg2[%c0_28, %c0_29, %c0_30] : memref<9x128x128xbf16, #tpu.memory_space<vmem>>, vector<1x128x128xbf16>
    %14 = vector.shape_cast %13 : vector<1x128x128xbf16> to vector<128x128xbf16>
    %cst_31 = arith.constant dense<0.000000e+00> : vector<128x128xf32>
    %15 = tpu.matmul %12, %14, %cst_31 {dimension_numbers = #tpu.dot_dimension_numbers<[1], [0], [0], [1], [0, 0, 1, 1], [], []>} : vector<128x128xbf16>, vector<128x128xbf16>, vector<128x128xf32> -> vector<128x128xf32>
    %c0_32 = arith.constant 0 : index
    %c0_33 = arith.constant 0 : index
    %c1_34 = arith.constant 1 : index
    %c0_35 = arith.constant 0 : index
    %16 = vector.load %arg8[%c0_32, %c0_33, %c1_34, %c0_35] : memref<2x10x10x128xf32, #tpu.memory_space<vmem>>, vector<2x8x8x128xf32>
    %17 = vector.shape_cast %16 : vector<2x8x8x128xf32> to vector<128x128xf32>
    %18 = arith.truncf %17 : vector<128x128xf32> to vector<128x128xbf16>
    %c1_36 = arith.constant 1 : index
    %c0_37 = arith.constant 0 : index
    %c0_38 = arith.constant 0 : index
    %19 = vector.load %arg2[%c1_36, %c0_37, %c0_38] : memref<9x128x128xbf16, #tpu.memory_space<vmem>>, vector<1x128x128xbf16>
    %20 = vector.shape_cast %19 : vector<1x128x128xbf16> to vector<128x128xbf16>
    %cst_39 = arith.constant dense<0.000000e+00> : vector<128x128xf32>
    %21 = tpu.matmul %18, %20, %cst_39 {dimension_numbers = #tpu.dot_dimension_numbers<[1], [0], [0], [1], [0, 0, 1, 1], [], []>} : vector<128x128xbf16>, vector<128x128xbf16>, vector<128x128xf32> -> vector<128x128xf32>
    %22 = arith.addf %15, %21 : vector<128x128xf32>
    %c0_40 = arith.constant 0 : index
    %c0_41 = arith.constant 0 : index
    %c2 = arith.constant 2 : index
    %c0_42 = arith.constant 0 : index
    %23 = vector.load %arg8[%c0_40, %c0_41, %c2, %c0_42] : memref<2x10x10x128xf32, #tpu.memory_space<vmem>>, vector<2x8x8x128xf32>
    %24 = vector.shape_cast %23 : vector<2x8x8x128xf32> to vector<128x128xf32>
    %25 = arith.truncf %24 : vector<128x128xf32> to vector<128x128xbf16>
    %c2_43 = arith.constant 2 : index
    %c0_44 = arith.constant 0 : index
    %c0_45 = arith.constant 0 : index
    %26 = vector.load %arg2[%c2_43, %c0_44, %c0_45] : memref<9x128x128xbf16, #tpu.memory_space<vmem>>, vector<1x128x128xbf16>
    %27 = vector.shape_cast %26 : vector<1x128x128xbf16> to vector<128x128xbf16>
    %cst_46 = arith.constant dense<0.000000e+00> : vector<128x128xf32>
    %28 = tpu.matmul %25, %27, %cst_46 {dimension_numbers = #tpu.dot_dimension_numbers<[1], [0], [0], [1], [0, 0, 1, 1], [], []>} : vector<128x128xbf16>, vector<128x128xbf16>, vector<128x128xf32> -> vector<128x128xf32>
    %29 = arith.addf %22, %28 : vector<128x128xf32>
    %c0_47 = arith.constant 0 : index
    %c1_48 = arith.constant 1 : index
    %c0_49 = arith.constant 0 : index
    %c0_50 = arith.constant 0 : index
    %30 = vector.load %arg8[%c0_47, %c1_48, %c0_49, %c0_50] : memref<2x10x10x128xf32, #tpu.memory_space<vmem>>, vector<2x8x8x128xf32>
    %31 = vector.shape_cast %30 : vector<2x8x8x128xf32> to vector<128x128xf32>
    %32 = arith.truncf %31 : vector<128x128xf32> to vector<128x128xbf16>
    %c3 = arith.constant 3 : index
    %c0_51 = arith.constant 0 : index
    %c0_52 = arith.constant 0 : index
    %33 = vector.load %arg2[%c3, %c0_51, %c0_52] : memref<9x128x128xbf16, #tpu.memory_space<vmem>>, vector<1x128x128xbf16>
    %34 = vector.shape_cast %33 : vector<1x128x128xbf16> to vector<128x128xbf16>
    %cst_53 = arith.constant dense<0.000000e+00> : vector<128x128xf32>
    %35 = tpu.matmul %32, %34, %cst_53 {dimension_numbers = #tpu.dot_dimension_numbers<[1], [0], [0], [1], [0, 0, 1, 1], [], []>} : vector<128x128xbf16>, vector<128x128xbf16>, vector<128x128xf32> -> vector<128x128xf32>
    %36 = arith.addf %29, %35 : vector<128x128xf32>
    %c0_54 = arith.constant 0 : index
    %c1_55 = arith.constant 1 : index
    %c1_56 = arith.constant 1 : index
    %c0_57 = arith.constant 0 : index
    %37 = vector.load %arg8[%c0_54, %c1_55, %c1_56, %c0_57] : memref<2x10x10x128xf32, #tpu.memory_space<vmem>>, vector<2x8x8x128xf32>
    %38 = vector.shape_cast %37 : vector<2x8x8x128xf32> to vector<128x128xf32>
    %39 = arith.truncf %38 : vector<128x128xf32> to vector<128x128xbf16>
    %c4 = arith.constant 4 : index
    %c0_58 = arith.constant 0 : index
    %c0_59 = arith.constant 0 : index
    %40 = vector.load %arg2[%c4, %c0_58, %c0_59] : memref<9x128x128xbf16, #tpu.memory_space<vmem>>, vector<1x128x128xbf16>
    %41 = vector.shape_cast %40 : vector<1x128x128xbf16> to vector<128x128xbf16>
    %cst_60 = arith.constant dense<0.000000e+00> : vector<128x128xf32>
    %42 = tpu.matmul %39, %41, %cst_60 {dimension_numbers = #tpu.dot_dimension_numbers<[1], [0], [0], [1], [0, 0, 1, 1], [], []>} : vector<128x128xbf16>, vector<128x128xbf16>, vector<128x128xf32> -> vector<128x128xf32>
    %43 = arith.addf %36, %42 : vector<128x128xf32>
    %c0_61 = arith.constant 0 : index
    %c1_62 = arith.constant 1 : index
    %c2_63 = arith.constant 2 : index
    %c0_64 = arith.constant 0 : index
    %44 = vector.load %arg8[%c0_61, %c1_62, %c2_63, %c0_64] : memref<2x10x10x128xf32, #tpu.memory_space<vmem>>, vector<2x8x8x128xf32>
    %45 = vector.shape_cast %44 : vector<2x8x8x128xf32> to vector<128x128xf32>
    %46 = arith.truncf %45 : vector<128x128xf32> to vector<128x128xbf16>
    %c5 = arith.constant 5 : index
    %c0_65 = arith.constant 0 : index
    %c0_66 = arith.constant 0 : index
    %47 = vector.load %arg2[%c5, %c0_65, %c0_66] : memref<9x128x128xbf16, #tpu.memory_space<vmem>>, vector<1x128x128xbf16>
    %48 = vector.shape_cast %47 : vector<1x128x128xbf16> to vector<128x128xbf16>
    %cst_67 = arith.constant dense<0.000000e+00> : vector<128x128xf32>
    %49 = tpu.matmul %46, %48, %cst_67 {dimension_numbers = #tpu.dot_dimension_numbers<[1], [0], [0], [1], [0, 0, 1, 1], [], []>} : vector<128x128xbf16>, vector<128x128xbf16>, vector<128x128xf32> -> vector<128x128xf32>
    %50 = arith.addf %43, %49 : vector<128x128xf32>
    %c0_68 = arith.constant 0 : index
    %c2_69 = arith.constant 2 : index
    %c0_70 = arith.constant 0 : index
    %c0_71 = arith.constant 0 : index
    %51 = vector.load %arg8[%c0_68, %c2_69, %c0_70, %c0_71] : memref<2x10x10x128xf32, #tpu.memory_space<vmem>>, vector<2x8x8x128xf32>
    %52 = vector.shape_cast %51 : vector<2x8x8x128xf32> to vector<128x128xf32>
    %53 = arith.truncf %52 : vector<128x128xf32> to vector<128x128xbf16>
    %c6 = arith.constant 6 : index
    %c0_72 = arith.constant 0 : index
    %c0_73 = arith.constant 0 : index
    %54 = vector.load %arg2[%c6, %c0_72, %c0_73] : memref<9x128x128xbf16, #tpu.memory_space<vmem>>, vector<1x128x128xbf16>
    %55 = vector.shape_cast %54 : vector<1x128x128xbf16> to vector<128x128xbf16>
    %cst_74 = arith.constant dense<0.000000e+00> : vector<128x128xf32>
    %56 = tpu.matmul %53, %55, %cst_74 {dimension_numbers = #tpu.dot_dimension_numbers<[1], [0], [0], [1], [0, 0, 1, 1], [], []>} : vector<128x128xbf16>, vector<128x128xbf16>, vector<128x128xf32> -> vector<128x128xf32>
    %57 = arith.addf %50, %56 : vector<128x128xf32>
    %c0_75 = arith.constant 0 : index
    %c2_76 = arith.constant 2 : index
    %c1_77 = arith.constant 1 : index
    %c0_78 = arith.constant 0 : index
    %58 = vector.load %arg8[%c0_75, %c2_76, %c1_77, %c0_78] : memref<2x10x10x128xf32, #tpu.memory_space<vmem>>, vector<2x8x8x128xf32>
    %59 = vector.shape_cast %58 : vector<2x8x8x128xf32> to vector<128x128xf32>
    %60 = arith.truncf %59 : vector<128x128xf32> to vector<128x128xbf16>
    %c7 = arith.constant 7 : index
    %c0_79 = arith.constant 0 : index
    %c0_80 = arith.constant 0 : index
    %61 = vector.load %arg2[%c7, %c0_79, %c0_80] : memref<9x128x128xbf16, #tpu.memory_space<vmem>>, vector<1x128x128xbf16>
    %62 = vector.shape_cast %61 : vector<1x128x128xbf16> to vector<128x128xbf16>
    %cst_81 = arith.constant dense<0.000000e+00> : vector<128x128xf32>
    %63 = tpu.matmul %60, %62, %cst_81 {dimension_numbers = #tpu.dot_dimension_numbers<[1], [0], [0], [1], [0, 0, 1, 1], [], []>} : vector<128x128xbf16>, vector<128x128xbf16>, vector<128x128xf32> -> vector<128x128xf32>
    %64 = arith.addf %57, %63 : vector<128x128xf32>
    %c0_82 = arith.constant 0 : index
    %c2_83 = arith.constant 2 : index
    %c2_84 = arith.constant 2 : index
    %c0_85 = arith.constant 0 : index
    %65 = vector.load %arg8[%c0_82, %c2_83, %c2_84, %c0_85] : memref<2x10x10x128xf32, #tpu.memory_space<vmem>>, vector<2x8x8x128xf32>
    %66 = vector.shape_cast %65 : vector<2x8x8x128xf32> to vector<128x128xf32>
    %67 = arith.truncf %66 : vector<128x128xf32> to vector<128x128xbf16>
    %c8 = arith.constant 8 : index
    %c0_86 = arith.constant 0 : index
    %c0_87 = arith.constant 0 : index
    %68 = vector.load %arg2[%c8, %c0_86, %c0_87] : memref<9x128x128xbf16, #tpu.memory_space<vmem>>, vector<1x128x128xbf16>
    %69 = vector.shape_cast %68 : vector<1x128x128xbf16> to vector<128x128xbf16>
    %cst_88 = arith.constant dense<0.000000e+00> : vector<128x128xf32>
    %70 = tpu.matmul %67, %69, %cst_88 {dimension_numbers = #tpu.dot_dimension_numbers<[1], [0], [0], [1], [0, 0, 1, 1], [], []>} : vector<128x128xbf16>, vector<128x128xbf16>, vector<128x128xf32> -> vector<128x128xf32>
    %71 = arith.addf %64, %70 : vector<128x128xf32>
    %c0_89 = arith.constant 0 : index
    %c0_90 = arith.constant 0 : index
    %72 = vector.load %arg3[%c0_89, %c0_90] : memref<1x128xf32, #tpu.memory_space<vmem>>, vector<1x128xf32>
    %73 = vector.broadcast %72 : vector<1x128xf32> to vector<128x128xf32>
    %74 = arith.addf %71, %73 : vector<128x128xf32>
    %cst_91 = arith.constant 0.000000e+00 : f32
    %75 = vector.broadcast %cst_91 : f32 to vector<128x128xf32>
    %76 = arith.maximumf %74, %75 : vector<128x128xf32>
    %cst_92 = arith.constant 0.000000e+00 : f32
    %77 = vector.broadcast %cst_92 : f32 to vector<2x1x10x128xf32>
    %c0_93 = arith.constant 0 : index
    %c0_94 = arith.constant 0 : index
    %c0_95 = arith.constant 0 : index
    %c0_96 = arith.constant 0 : index
    %78 = vector.load %arg9[%c0_93, %c0_94, %c0_95, %c0_96] : memref<2x10x10x128xf32, #tpu.memory_space<vmem>>, vector<2x1x10x128xf32>
    tpu.vector_store %arg9[%c0_93, %c0_94, %c0_95, %c0_96], %77 {strides = array<i32>} : memref<2x10x10x128xf32, #tpu.memory_space<vmem>>, vector<2x1x10x128xf32>,
    %cst_97 = arith.constant 0.000000e+00 : f32
    %79 = vector.broadcast %cst_97 : f32 to vector<2x1x10x128xf32>
    %c0_98 = arith.constant 0 : index
    %c9_99 = arith.constant 9 : index
    %c0_100 = arith.constant 0 : index
    %c0_101 = arith.constant 0 : index
    %80 = vector.load %arg9[%c0_98, %c9_99, %c0_100, %c0_101] : memref<2x10x10x128xf32, #tpu.memory_space<vmem>>, vector<2x1x10x128xf32>
    tpu.vector_store %arg9[%c0_98, %c9_99, %c0_100, %c0_101], %79 {strides = array<i32>} : memref<2x10x10x128xf32, #tpu.memory_space<vmem>>, vector<2x1x10x128xf32>,
    %cst_102 = arith.constant 0.000000e+00 : f32
    %81 = vector.broadcast %cst_102 : f32 to vector<2x10x1x128xf32>
    %c0_103 = arith.constant 0 : index
    %c0_104 = arith.constant 0 : index
    %c0_105 = arith.constant 0 : index
    %c0_106 = arith.constant 0 : index
    %82 = vector.load %arg9[%c0_103, %c0_104, %c0_105, %c0_106] : memref<2x10x10x128xf32, #tpu.memory_space<vmem>>, vector<2x10x1x128xf32>
    tpu.vector_store %arg9[%c0_103, %c0_104, %c0_105, %c0_106], %81 {strides = array<i32>} : memref<2x10x10x128xf32, #tpu.memory_space<vmem>>, vector<2x10x1x128xf32>,
    %cst_107 = arith.constant 0.000000e+00 : f32
    %83 = vector.broadcast %cst_107 : f32 to vector<2x10x1x128xf32>
    %c0_108 = arith.constant 0 : index
    %c0_109 = arith.constant 0 : index
    %c9_110 = arith.constant 9 : index
    %c0_111 = arith.constant 0 : index
    %84 = vector.load %arg9[%c0_108, %c0_109, %c9_110, %c0_111] : memref<2x10x10x128xf32, #tpu.memory_space<vmem>>, vector<2x10x1x128xf32>
    tpu.vector_store %arg9[%c0_108, %c0_109, %c9_110, %c0_111], %83 {strides = array<i32>} : memref<2x10x10x128xf32, #tpu.memory_space<vmem>>, vector<2x10x1x128xf32>,
    %85 = vector.shape_cast %76 : vector<128x128xf32> to vector<2x8x8x128xf32>
    %c0_112 = arith.constant 0 : index
    %c1_113 = arith.constant 1 : index
    %c1_114 = arith.constant 1 : index
    %c0_115 = arith.constant 0 : index
    %86 = vector.load %arg9[%c0_112, %c1_113, %c1_114, %c0_115] : memref<2x10x10x128xf32, #tpu.memory_space<vmem>>, vector<2x8x8x128xf32>
    tpu.vector_store %arg9[%c0_112, %c1_113, %c1_114, %c0_115], %85 {strides = array<i32>} : memref<2x10x10x128xf32, #tpu.memory_space<vmem>>, vector<2x8x8x128xf32>,
    %c0_116 = arith.constant 0 : index
    %c0_117 = arith.constant 0 : index
    %c0_118 = arith.constant 0 : index
    %c0_119 = arith.constant 0 : index
    %87 = vector.load %arg9[%c0_116, %c0_117, %c0_118, %c0_119] : memref<2x10x10x128xf32, #tpu.memory_space<vmem>>, vector<2x8x8x128xf32>
    %88 = vector.shape_cast %87 : vector<2x8x8x128xf32> to vector<128x128xf32>
    %89 = arith.truncf %88 : vector<128x128xf32> to vector<128x128xbf16>
    %c0_120 = arith.constant 0 : index
    %c0_121 = arith.constant 0 : index
    %c0_122 = arith.constant 0 : index
    %90 = vector.load %arg4[%c0_120, %c0_121, %c0_122] : memref<9x128x128xbf16, #tpu.memory_space<vmem>>, vector<1x128x128xbf16>
    %91 = vector.shape_cast %90 : vector<1x128x128xbf16> to vector<128x128xbf16>
    %cst_123 = arith.constant dense<0.000000e+00> : vector<128x128xf32>
    %92 = tpu.matmul %89, %91, %cst_123 {dimension_numbers = #tpu.dot_dimension_numbers<[1], [0], [0], [1], [0, 0, 1, 1], [], []>} : vector<128x128xbf16>, vector<128x128xbf16>, vector<128x128xf32> -> vector<128x128xf32>
    %c0_124 = arith.constant 0 : index
    %c0_125 = arith.constant 0 : index
    %c1_126 = arith.constant 1 : index
    %c0_127 = arith.constant 0 : index
    %93 = vector.load %arg9[%c0_124, %c0_125, %c1_126, %c0_127] : memref<2x10x10x128xf32, #tpu.memory_space<vmem>>, vector<2x8x8x128xf32>
    %94 = vector.shape_cast %93 : vector<2x8x8x128xf32> to vector<128x128xf32>
    %95 = arith.truncf %94 : vector<128x128xf32> to vector<128x128xbf16>
    %c1_128 = arith.constant 1 : index
    %c0_129 = arith.constant 0 : index
    %c0_130 = arith.constant 0 : index
    %96 = vector.load %arg4[%c1_128, %c0_129, %c0_130] : memref<9x128x128xbf16, #tpu.memory_space<vmem>>, vector<1x128x128xbf16>
    %97 = vector.shape_cast %96 : vector<1x128x128xbf16> to vector<128x128xbf16>
    %cst_131 = arith.constant dense<0.000000e+00> : vector<128x128xf32>
    %98 = tpu.matmul %95, %97, %cst_131 {dimension_numbers = #tpu.dot_dimension_numbers<[1], [0], [0], [1], [0, 0, 1, 1], [], []>} : vector<128x128xbf16>, vector<128x128xbf16>, vector<128x128xf32> -> vector<128x128xf32>
    %99 = arith.addf %92, %98 : vector<128x128xf32>
    %c0_132 = arith.constant 0 : index
    %c0_133 = arith.constant 0 : index
    %c2_134 = arith.constant 2 : index
    %c0_135 = arith.constant 0 : index
    %100 = vector.load %arg9[%c0_132, %c0_133, %c2_134, %c0_135] : memref<2x10x10x128xf32, #tpu.memory_space<vmem>>, vector<2x8x8x128xf32>
    %101 = vector.shape_cast %100 : vector<2x8x8x128xf32> to vector<128x128xf32>
    %102 = arith.truncf %101 : vector<128x128xf32> to vector<128x128xbf16>
    %c2_136 = arith.constant 2 : index
    %c0_137 = arith.constant 0 : index
    %c0_138 = arith.constant 0 : index
    %103 = vector.load %arg4[%c2_136, %c0_137, %c0_138] : memref<9x128x128xbf16, #tpu.memory_space<vmem>>, vector<1x128x128xbf16>
    %104 = vector.shape_cast %103 : vector<1x128x128xbf16> to vector<128x128xbf16>
    %cst_139 = arith.constant dense<0.000000e+00> : vector<128x128xf32>
    %105 = tpu.matmul %102, %104, %cst_139 {dimension_numbers = #tpu.dot_dimension_numbers<[1], [0], [0], [1], [0, 0, 1, 1], [], []>} : vector<128x128xbf16>, vector<128x128xbf16>, vector<128x128xf32> -> vector<128x128xf32>
    %106 = arith.addf %99, %105 : vector<128x128xf32>
    %c0_140 = arith.constant 0 : index
    %c1_141 = arith.constant 1 : index
    %c0_142 = arith.constant 0 : index
    %c0_143 = arith.constant 0 : index
    %107 = vector.load %arg9[%c0_140, %c1_141, %c0_142, %c0_143] : memref<2x10x10x128xf32, #tpu.memory_space<vmem>>, vector<2x8x8x128xf32>
    %108 = vector.shape_cast %107 : vector<2x8x8x128xf32> to vector<128x128xf32>
    %109 = arith.truncf %108 : vector<128x128xf32> to vector<128x128xbf16>
    %c3_144 = arith.constant 3 : index
    %c0_145 = arith.constant 0 : index
    %c0_146 = arith.constant 0 : index
    %110 = vector.load %arg4[%c3_144, %c0_145, %c0_146] : memref<9x128x128xbf16, #tpu.memory_space<vmem>>, vector<1x128x128xbf16>
    %111 = vector.shape_cast %110 : vector<1x128x128xbf16> to vector<128x128xbf16>
    %cst_147 = arith.constant dense<0.000000e+00> : vector<128x128xf32>
    %112 = tpu.matmul %109, %111, %cst_147 {dimension_numbers = #tpu.dot_dimension_numbers<[1], [0], [0], [1], [0, 0, 1, 1], [], []>} : vector<128x128xbf16>, vector<128x128xbf16>, vector<128x128xf32> -> vector<128x128xf32>
    %113 = arith.addf %106, %112 : vector<128x128xf32>
    %c0_148 = arith.constant 0 : index
    %c1_149 = arith.constant 1 : index
    %c1_150 = arith.constant 1 : index
    %c0_151 = arith.constant 0 : index
    %114 = vector.load %arg9[%c0_148, %c1_149, %c1_150, %c0_151] : memref<2x10x10x128xf32, #tpu.memory_space<vmem>>, vector<2x8x8x128xf32>
    %115 = vector.shape_cast %114 : vector<2x8x8x128xf32> to vector<128x128xf32>
    %116 = arith.truncf %115 : vector<128x128xf32> to vector<128x128xbf16>
    %c4_152 = arith.constant 4 : index
    %c0_153 = arith.constant 0 : index
    %c0_154 = arith.constant 0 : index
    %117 = vector.load %arg4[%c4_152, %c0_153, %c0_154] : memref<9x128x128xbf16, #tpu.memory_space<vmem>>, vector<1x128x128xbf16>
    %118 = vector.shape_cast %117 : vector<1x128x128xbf16> to vector<128x128xbf16>
    %cst_155 = arith.constant dense<0.000000e+00> : vector<128x128xf32>
    %119 = tpu.matmul %116, %118, %cst_155 {dimension_numbers = #tpu.dot_dimension_numbers<[1], [0], [0], [1], [0, 0, 1, 1], [], []>} : vector<128x128xbf16>, vector<128x128xbf16>, vector<128x128xf32> -> vector<128x128xf32>
    %120 = arith.addf %113, %119 : vector<128x128xf32>
    %c0_156 = arith.constant 0 : index
    %c1_157 = arith.constant 1 : index
    %c2_158 = arith.constant 2 : index
    %c0_159 = arith.constant 0 : index
    %121 = vector.load %arg9[%c0_156, %c1_157, %c2_158, %c0_159] : memref<2x10x10x128xf32, #tpu.memory_space<vmem>>, vector<2x8x8x128xf32>
    %122 = vector.shape_cast %121 : vector<2x8x8x128xf32> to vector<128x128xf32>
    %123 = arith.truncf %122 : vector<128x128xf32> to vector<128x128xbf16>
    %c5_160 = arith.constant 5 : index
    %c0_161 = arith.constant 0 : index
    %c0_162 = arith.constant 0 : index
    %124 = vector.load %arg4[%c5_160, %c0_161, %c0_162] : memref<9x128x128xbf16, #tpu.memory_space<vmem>>, vector<1x128x128xbf16>
    %125 = vector.shape_cast %124 : vector<1x128x128xbf16> to vector<128x128xbf16>
    %cst_163 = arith.constant dense<0.000000e+00> : vector<128x128xf32>
    %126 = tpu.matmul %123, %125, %cst_163 {dimension_numbers = #tpu.dot_dimension_numbers<[1], [0], [0], [1], [0, 0, 1, 1], [], []>} : vector<128x128xbf16>, vector<128x128xbf16>, vector<128x128xf32> -> vector<128x128xf32>
    %127 = arith.addf %120, %126 : vector<128x128xf32>
    %c0_164 = arith.constant 0 : index
    %c2_165 = arith.constant 2 : index
    %c0_166 = arith.constant 0 : index
    %c0_167 = arith.constant 0 : index
    %128 = vector.load %arg9[%c0_164, %c2_165, %c0_166, %c0_167] : memref<2x10x10x128xf32, #tpu.memory_space<vmem>>, vector<2x8x8x128xf32>
    %129 = vector.shape_cast %128 : vector<2x8x8x128xf32> to vector<128x128xf32>
    %130 = arith.truncf %129 : vector<128x128xf32> to vector<128x128xbf16>
    %c6_168 = arith.constant 6 : index
    %c0_169 = arith.constant 0 : index
    %c0_170 = arith.constant 0 : index
    %131 = vector.load %arg4[%c6_168, %c0_169, %c0_170] : memref<9x128x128xbf16, #tpu.memory_space<vmem>>, vector<1x128x128xbf16>
    %132 = vector.shape_cast %131 : vector<1x128x128xbf16> to vector<128x128xbf16>
    %cst_171 = arith.constant dense<0.000000e+00> : vector<128x128xf32>
    %133 = tpu.matmul %130, %132, %cst_171 {dimension_numbers = #tpu.dot_dimension_numbers<[1], [0], [0], [1], [0, 0, 1, 1], [], []>} : vector<128x128xbf16>, vector<128x128xbf16>, vector<128x128xf32> -> vector<128x128xf32>
    %134 = arith.addf %127, %133 : vector<128x128xf32>
    %c0_172 = arith.constant 0 : index
    %c2_173 = arith.constant 2 : index
    %c1_174 = arith.constant 1 : index
    %c0_175 = arith.constant 0 : index
    %135 = vector.load %arg9[%c0_172, %c2_173, %c1_174, %c0_175] : memref<2x10x10x128xf32, #tpu.memory_space<vmem>>, vector<2x8x8x128xf32>
    %136 = vector.shape_cast %135 : vector<2x8x8x128xf32> to vector<128x128xf32>
    %137 = arith.truncf %136 : vector<128x128xf32> to vector<128x128xbf16>
    %c7_176 = arith.constant 7 : index
    %c0_177 = arith.constant 0 : index
    %c0_178 = arith.constant 0 : index
    %138 = vector.load %arg4[%c7_176, %c0_177, %c0_178] : memref<9x128x128xbf16, #tpu.memory_space<vmem>>, vector<1x128x128xbf16>
    %139 = vector.shape_cast %138 : vector<1x128x128xbf16> to vector<128x128xbf16>
    %cst_179 = arith.constant dense<0.000000e+00> : vector<128x128xf32>
    %140 = tpu.matmul %137, %139, %cst_179 {dimension_numbers = #tpu.dot_dimension_numbers<[1], [0], [0], [1], [0, 0, 1, 1], [], []>} : vector<128x128xbf16>, vector<128x128xbf16>, vector<128x128xf32> -> vector<128x128xf32>
    %141 = arith.addf %134, %140 : vector<128x128xf32>
    %c0_180 = arith.constant 0 : index
    %c2_181 = arith.constant 2 : index
    %c2_182 = arith.constant 2 : index
    %c0_183 = arith.constant 0 : index
    %142 = vector.load %arg9[%c0_180, %c2_181, %c2_182, %c0_183] : memref<2x10x10x128xf32, #tpu.memory_space<vmem>>, vector<2x8x8x128xf32>
    %143 = vector.shape_cast %142 : vector<2x8x8x128xf32> to vector<128x128xf32>
    %144 = arith.truncf %143 : vector<128x128xf32> to vector<128x128xbf16>
    %c8_184 = arith.constant 8 : index
    %c0_185 = arith.constant 0 : index
    %c0_186 = arith.constant 0 : index
    %145 = vector.load %arg4[%c8_184, %c0_185, %c0_186] : memref<9x128x128xbf16, #tpu.memory_space<vmem>>, vector<1x128x128xbf16>
    %146 = vector.shape_cast %145 : vector<1x128x128xbf16> to vector<128x128xbf16>
    %cst_187 = arith.constant dense<0.000000e+00> : vector<128x128xf32>
    %147 = tpu.matmul %144, %146, %cst_187 {dimension_numbers = #tpu.dot_dimension_numbers<[1], [0], [0], [1], [0, 0, 1, 1], [], []>} : vector<128x128xbf16>, vector<128x128xbf16>, vector<128x128xf32> -> vector<128x128xf32>
    %148 = arith.addf %141, %147 : vector<128x128xf32>
    %c0_188 = arith.constant 0 : index
    %c0_189 = arith.constant 0 : index
    %149 = vector.load %arg5[%c0_188, %c0_189] : memref<1x128xf32, #tpu.memory_space<vmem>>, vector<1x128xf32>
    %150 = vector.broadcast %149 : vector<1x128xf32> to vector<128x128xf32>
    %151 = arith.addf %148, %150 : vector<128x128xf32>
    %c0_190 = arith.constant 0 : index
    %c0_191 = arith.constant 0 : index
    %152 = vector.load %arg6[%c0_190, %c0_191] : memref<128x128xf32, #tpu.memory_space<vmem>>, vector<128x128xf32>
    %153 = arith.addf %151, %152 : vector<128x128xf32>
    %cst_192 = arith.constant 0.000000e+00 : f32
    %154 = vector.broadcast %cst_192 : f32 to vector<128x128xf32>
    %155 = arith.maximumf %153, %154 : vector<128x128xf32>
    %c0_193 = arith.constant 0 : index
    %c0_194 = arith.constant 0 : index
    %156 = vector.load %arg7[%c0_193, %c0_194] : memref<128x128xf32, #tpu.memory_space<vmem>>, vector<128x128xf32>
    tpu.vector_store %arg7[%c0_193, %c0_194], %155 {strides = array<i32>} : memref<128x128xf32, #tpu.memory_space<vmem>>, vector<128x128xf32>,
    return
  }
  func.func @transform_0(%arg0: i32) -> (i32, i32, i32, i32) {
    %c0_i32 = arith.constant 0 : i32
    %c0_i32_0 = arith.constant 0 : i32
    %c0_i32_1 = arith.constant 0 : i32
    %c0_i32_2 = arith.constant 0 : i32
    return %arg0, %c0_i32, %c0_i32_0, %c0_i32_1 : i32, i32, i32, i32
  }
  func.func @transform_1(%arg0: i32) -> (i32, i32, i32) {
    %c0_i32 = arith.constant 0 : i32
    %c0_i32_0 = arith.constant 0 : i32
    %c0_i32_1 = arith.constant 0 : i32
    %c0_i32_2 = arith.constant 0 : i32
    return %c0_i32, %c0_i32_0, %c0_i32_1 : i32, i32, i32
  }
  func.func @transform_2(%arg0: i32) -> (i32, i32) {
    %c0_i32 = arith.constant 0 : i32
    %c0_i32_0 = arith.constant 0 : i32
    %c0_i32_1 = arith.constant 0 : i32
    return %c0_i32, %c0_i32_0 : i32, i32
  }
  func.func @transform_3(%arg0: i32) -> (i32, i32, i32) {
    %c0_i32 = arith.constant 0 : i32
    %c0_i32_0 = arith.constant 0 : i32
    %c0_i32_1 = arith.constant 0 : i32
    %c0_i32_2 = arith.constant 0 : i32
    return %c0_i32, %c0_i32_0, %c0_i32_1 : i32, i32, i32
  }
  func.func @transform_4(%arg0: i32) -> (i32, i32) {
    %c0_i32 = arith.constant 0 : i32
    %c0_i32_0 = arith.constant 0 : i32
    %c0_i32_1 = arith.constant 0 : i32
    return %c0_i32, %c0_i32_0 : i32, i32
  }
  func.func @transform_5(%arg0: i32) -> (i32, i32) {
    %c0_i32 = arith.constant 0 : i32
    %c0_i32_0 = arith.constant 0 : i32
    return %arg0, %c0_i32 : i32, i32
  }
  func.func @transform_6(%arg0: i32) -> (i32, i32) {
    %c0_i32 = arith.constant 0 : i32
    %c0_i32_0 = arith.constant 0 : i32
    return %arg0, %c0_i32 : i32, i32
  }
}

</mosaic_0001>

<llo_original>
// kernel: basic_block_forward.1
$region0: #{basic_block_forward.1}
  #allocation0 [shape = 'u32[]', space=smem, size = 0x4, offset = 0x4, fixed_abs, tag = 'smem constant byte address 0x4 - core index']
  #allocation1 [shape = 'u32[144,128]{1,0:T(1,128)}', space=vmem, size = 0x12000, scoped, tag = 'internal scratch']
  #allocation2 [shape = 'f32[2,10,10,128]{3,2,1,0:T(8,128)}', space=vmem, size = 0x28000, scoped, tag = 'scratch operand']
  #allocation3 [shape = 'f32[2,10,10,128]{3,2,1,0:T(8,128)}', space=vmem, size = 0x28000, scoped, tag = 'scratch operand']
  %s0 = inlined_call_operand.vmem [shape: f32[8,8,8,128], index: 0, kind: input, shape index: {}]
  %s1 = inlined_call_operand.vmem [shape: bf16[9,128,128], index: 1, kind: input, shape index: {}]
  %s2 = inlined_call_operand.vmem [shape: f32[1,128], index: 2, kind: input, shape index: {}]
  %s3 = inlined_call_operand.vmem [shape: bf16[9,128,128], index: 3, kind: input, shape index: {}]
  %s4 = inlined_call_operand.vmem [shape: f32[1,128], index: 4, kind: input, shape index: {}]
  %s5 = inlined_call_operand.vmem [shape: f32[512,128], index: 5, kind: input, shape index: {}]
  %s6 = inlined_call_operand.vmem [shape: f32[512,128], index: 6, kind: output, shape index: {}]
  %s7 = sld [smem:[#allocation0]]
  $region57: #{basic_block_forward.1} parent=0
    _
  %s9 = ssub.s32 1, %s7
  %s10 = scalar_select 0, %s9, %s7
  loop: start=0, step=1, limit=6
  $region2: #{basic_block_forward.1} parent=0 // loop_pre_header
    _
  $region3: #{basic_block_forward.1} parent=0 // loop_header
    %s12 = sphi 0, %s16
    %p13 = scmp.ge.s32.totalorder %s12, 6
    %s22 = sphi 0, %s24
    %s25 = sphi 0, %s22
    %s26 = sphi 0, %s25
    %s42 = sphi 0, %s26
    %s46 = sphi 0, %s46
    %s48 = sphi 0, %s46
    %s49 = sphi 0, %s48
    %s63 = sphi 0, %s49
    %s67 = sphi 0, %s67
    %s69 = sphi 0, %s67
    %s70 = sphi 0, %s69
    %s84 = sphi 0, %s70
    %s88 = sphi 0, %s88
    %s90 = sphi 0, %s88
    %s91 = sphi 0, %s90
    %s105 = sphi 0, %s91
    %s109 = sphi 0, %s109
    %s111 = sphi 0, %s109
    %s112 = sphi 0, %s111
    %s126 = sphi 0, %s112
    %s132 = sphi 0, %s134
    %s135 = sphi 0, %s132
    %s136 = sphi 0, %s135
    %s152 = sphi 0, %s136
    %s158 = sphi 0, %s160
    %s161 = sphi 0, %s158
    %s162 = sphi 0, %s161
    %s178 = sphi 0, %s162
  $region4: #{basic_block_forward.1} parent=0 // loop_header_branch
    %15 = sbr.rel (%p13) target = $region8
  $region5: #{basic_block_forward.1} parent=0 // loop_body
    %s17 = ssub.s32 %s12, 1
    %s18 = ssub.s32 %s12, 2
    %s19 = sadd.s32 %s12, 1
    %s20 = ssub.s32 %s12, %s19
    %p21 = scmp.eq.s32.totalorder %s20, 0
    %s23 = sadd.s32 %s22, 1
    %s24 = scalar_select %p21, %s22, %s23
    %p27 = pneg %p21
    %p28 = scmp.eq.s32.totalorder %s12, 3
    %p29 = por %p27, %p28
    %p30 = scmp.ne.s32.totalorder %s22, %s25
    %p31 = scmp.eq.s32.totalorder %s12, 0
    %p32 = por %p30, %p31
    %p33 = scmp.ne.s32.totalorder %s22, %s25
    %p34 = scmp.eq.s32.totalorder %s17, 3
    %p35 = por %p33, %p34
    %p36 = scmp.ne.s32.totalorder %s25, %s26
    %p37 = scmp.eq.s32.totalorder %s17, 0
    %p38 = por %p36, %p37
    %p39 = scmp.ne.s32.totalorder %s25, %s26
    %p40 = scmp.eq.s32.totalorder %s18, 3
    %p41 = por %p39, %p40
    %p43 = scmp.ne.s32.totalorder %s26, %s42
    %p44 = scmp.eq.s32.totalorder %s18, 0
    %p45 = por %p43, %p44
    %s47 = sadd.s32 %s46, 1
    %p50 = scmp.eq.s32.totalorder %s12, 3
    %p51 = scmp.ne.s32.totalorder %s46, %s48
    %p52 = scmp.eq.s32.totalorder %s12, 0
    %p53 = por %p51, %p52
    %p54 = scmp.ne.s32.totalorder %s46, %s48
    %p55 = scmp.eq.s32.totalorder %s17, 3
    %p56 = por %p54, %p55
    %p57 = scmp.ne.s32.totalorder %s48, %s49
    %p58 = scmp.eq.s32.totalorder %s17, 0
    %p59 = por %p57, %p58
    %p60 = scmp.ne.s32.totalorder %s48, %s49
    %p61 = scmp.eq.s32.totalorder %s18, 3
    %p62 = por %p60, %p61
    %p64 = scmp.ne.s32.totalorder %s49, %s63
    %p65 = scmp.eq.s32.totalorder %s18, 0
    %p66 = por %p64, %p65
    %s68 = sadd.s32 %s67, 1
    %p71 = scmp.eq.s32.totalorder %s12, 3
    %p72 = scmp.ne.s32.totalorder %s67, %s69
    %p73 = scmp.eq.s32.totalorder %s12, 0
    %p74 = por %p72, %p73
    %p75 = scmp.ne.s32.totalorder %s67, %s69
    %p76 = scmp.eq.s32.totalorder %s17, 3
    %p77 = por %p75, %p76
    %p78 = scmp.ne.s32.totalorder %s69, %s70
    %p79 = scmp.eq.s32.totalorder %s17, 0
    %p80 = por %p78, %p79
    %p81 = scmp.ne.s32.totalorder %s69, %s70
    %p82 = scmp.eq.s32.totalorder %s18, 3
    %p83 = por %p81, %p82
    %p85 = scmp.ne.s32.totalorder %s70, %s84
    %p86 = scmp.eq.s32.totalorder %s18, 0
    %p87 = por %p85, %p86
    %s89 = sadd.s32 %s88, 1
    %p92 = scmp.eq.s32.totalorder %s12, 3
    %p93 = scmp.ne.s32.totalorder %s88, %s90
    %p94 = scmp.eq.s32.totalorder %s12, 0
    %p95 = por %p93, %p94
    %p96 = scmp.ne.s32.totalorder %s88, %s90
    %p97 = scmp.eq.s32.totalorder %s17, 3
    %p98 = por %p96, %p97
    %p99 = scmp.ne.s32.totalorder %s90, %s91
    %p100 = scmp.eq.s32.totalorder %s17, 0
    %p101 = por %p99, %p100
    %p102 = scmp.ne.s32.totalorder %s90, %s91
    %p103 = scmp.eq.s32.totalorder %s18, 3
    %p104 = por %p102, %p103
    %p106 = scmp.ne.s32.totalorder %s91, %s105
    %p107 = scmp.eq.s32.totalorder %s18, 0
    %p108 = por %p106, %p107
    %s110 = sadd.s32 %s109, 1
    %p113 = scmp.eq.s32.totalorder %s12, 3
    %p114 = scmp.ne.s32.totalorder %s109, %s111
    %p115 = scmp.eq.s32.totalorder %s12, 0
    %p116 = por %p114, %p115
    %p117 = scmp.ne.s32.totalorder %s109, %s111
    %p118 = scmp.eq.s32.totalorder %s17, 3
    %p119 = por %p117, %p118
    %p120 = scmp.ne.s32.totalorder %s111, %s112
    %p121 = scmp.eq.s32.totalorder %s17, 0
    %p122 = por %p120, %p121
    %p123 = scmp.ne.s32.totalorder %s111, %s112
    %p124 = scmp.eq.s32.totalorder %s18, 3
    %p125 = por %p123, %p124
    %p127 = scmp.ne.s32.totalorder %s112, %s126
    %p128 = scmp.eq.s32.totalorder %s18, 0
    %p129 = por %p127, %p128
    %s130 = ssub.s32 %s12, %s19
    %p131 = scmp.eq.s32.totalorder %s130, 0
    %s133 = sadd.s32 %s132, 1
    %s134 = scalar_select %p131, %s132, %s133
    %p137 = pneg %p131
    %p138 = scmp.eq.s32.totalorder %s12, 3
    %p139 = por %p137, %p138
    %p140 = scmp.ne.s32.totalorder %s132, %s135
    %p141 = scmp.eq.s32.totalorder %s12, 0
    %p142 = por %p140, %p141
    %p143 = scmp.ne.s32.totalorder %s132, %s135
    %p144 = scmp.eq.s32.totalorder %s17, 3
    %p145 = por %p143, %p144
    %p146 = scmp.ne.s32.totalorder %s135, %s136
    %p147 = scmp.eq.s32.totalorder %s17, 0
    %p148 = por %p146, %p147
    %p149 = scmp.ne.s32.totalorder %s135, %s136
    %p150 = scmp.eq.s32.totalorder %s18, 3
    %p151 = por %p149, %p150
    %p153 = scmp.ne.s32.totalorder %s136, %s152
    %p154 = scmp.eq.s32.totalorder %s18, 0
    %p155 = por %p153, %p154
    %s156 = ssub.s32 %s12, %s19
    %p157 = scmp.eq.s32.totalorder %s156, 0
    %s159 = sadd.s32 %s158, 1
    %s160 = scalar_select %p157, %s158, %s159
    %p163 = pneg %p157
    %p164 = scmp.eq.s32.totalorder %s12, 3
    %p165 = por %p163, %p164
    %p166 = scmp.ne.s32.totalorder %s158, %s161
    %p167 = scmp.eq.s32.totalorder %s12, 0
    %p168 = por %p166, %p167
    %p169 = scmp.ne.s32.totalorder %s158, %s161
    %p170 = scmp.eq.s32.totalorder %s17, 3
    %p171 = por %p169, %p170
    %p172 = scmp.ne.s32.totalorder %s161, %s162
    %p173 = scmp.eq.s32.totalorder %s17, 0
    %p174 = por %p172, %p173
    %p175 = scmp.ne.s32.totalorder %s161, %s162
    %p176 = scmp.eq.s32.totalorder %s18, 3
    %p177 = por %p175, %p176
    %p179 = scmp.ne.s32.totalorder %s162, %s178
    %p180 = scmp.eq.s32.totalorder %s18, 0
    %p181 = por %p179, %p180
    %p182 = scmp.le.s32.totalorder 1, %s12
    %p183 = scmp.lt.s32.totalorder %s12, 5
    %p184 = pnand %p182, %p183
    %p185 = pneg %p184
    // Predicated region
    $region9: #{basic_block_forward.1} parent=5 // pred_check
      _
    $region10: #{basic_block_forward.1} parent=5 // pred_check_branch
      %187 = sbr.rel (%p184) target = $region12
    $region11: #{basic_block_forward.1} parent=5 // pred_region
      %s188 = ssub.s32 %s12, 1
      // Predicated region
      $region13: #{basic_block_forward.1} parent=11 // pred_check
        %p189 = pneg %p59
      $region14: #{basic_block_forward.1} parent=11 // pred_check_branch
        %191 = sbr.rel (%p189) target = $region16
      $region15: #{basic_block_forward.1} parent=11 // pred_region
        _
      $region16: #{basic_block_forward.1} parent=11 // pred_fallthru
        _
      // Predicated region
      $region17: #{basic_block_forward.1} parent=11 // pred_check
        %p192 = pneg %p80
      $region18: #{basic_block_forward.1} parent=11 // pred_check_branch
        %194 = sbr.rel (%p192) target = $region20
      $region19: #{basic_block_forward.1} parent=11 // pred_region
        _
      $region20: #{basic_block_forward.1} parent=11 // pred_fallthru
        _
      // Predicated region
      $region21: #{basic_block_forward.1} parent=11 // pred_check
        %p195 = pneg %p101
      $region22: #{basic_block_forward.1} parent=11 // pred_check_branch
        %197 = sbr.rel (%p195) target = $region24
      $region23: #{basic_block_forward.1} parent=11 // pred_region
        _
      $region24: #{basic_block_forward.1} parent=11 // pred_fallthru
        _
      // Predicated region
      $region25: #{basic_block_forward.1} parent=11 // pred_check
        %p198 = pneg %p122
      $region26: #{basic_block_forward.1} parent=11 // pred_check_branch
        %200 = sbr.rel (%p198) target = $region28
      $region27: #{basic_block_forward.1} parent=11 // pred_region
        _
      $region28: #{basic_block_forward.1} parent=11 // pred_fallthru
        _
    $region12: #{basic_block_forward.1} parent=5 // pred_fallthru
      _
    %p201 = scmp.lt.s32.totalorder %s12, 4
    // Predicated region
    $region29: #{basic_block_forward.1} parent=5 // pred_check
      %p202 = pneg %p201
    $region30: #{basic_block_forward.1} parent=5 // pred_check_branch
      %204 = sbr.rel (%p202) target = $region32
    $region31: #{basic_block_forward.1} parent=5 // pred_region
      // Predicated region
      $region33: #{basic_block_forward.1} parent=31 // pred_check
        %p205 = pneg %p32
      $region34: #{basic_block_forward.1} parent=31 // pred_check_branch
        %207 = sbr.rel (%p205) target = $region36
      $region35: #{basic_block_forward.1} parent=31 // pred_region
        %s208 = smul.u32 2, %s12
        %p209 = scmp.lt.s32.totalorder %s208, 7
        %s210 = scalar_select %p209, %s208, 7
        %s211 = smul.addr %s210, 8
        %s212 = smul.addr %s211, 8
        %s213 = scalar_lea.vmem %s0, %s212
        %s214 = smul.u32 2, %s12
      $region36: #{basic_block_forward.1} parent=31 // pred_fallthru
        _
      // Predicated region
      $region37: #{basic_block_forward.1} parent=31 // pred_check
        %p215 = pneg %p142
      $region38: #{basic_block_forward.1} parent=31 // pred_check_branch
        %217 = sbr.rel (%p215) target = $region40
      $region39: #{basic_block_forward.1} parent=31 // pred_region
        %s218 = smul.u32 16, %s12
        %p219 = scmp.lt.s32.totalorder %s218, 63
        %s220 = scalar_select %p219, %s218, 63
        %s221 = smul.addr %s220, 8
        %s222 = scalar_lea.vmem %s5, %s221
        %s223 = smul.u32 16, %s12
      $region40: #{basic_block_forward.1} parent=31 // pred_fallthru
        _
    $region32: #{basic_block_forward.1} parent=5 // pred_fallthru
      _
    %p224 = scmp.le.s32.totalorder 1, %s12
    %p225 = scmp.lt.s32.totalorder %s12, 5
    %p226 = pnand %p224, %p225
    %p227 = pneg %p226
    // Predicated region
    $region41: #{basic_block_forward.1} parent=5 // pred_check
      _
    $region42: #{basic_block_forward.1} parent=5 // pred_check_branch
      %229 = sbr.rel (%p226) target = $region44
    $region43: #{basic_block_forward.1} parent=5 // pred_region
      %s230 = ssub.s32 %s12, 1
      %s231 = smul.u32 2, %s17
      %p232 = scmp.lt.s32.totalorder %s231, 7
      %s233 = scalar_select %p232, %s231, 7
      %s234 = smul.addr %s233, 8
      %s235 = smul.addr %s234, 8
      %s236 = scalar_lea.vmem %s0, %s235
      %p237 = pneg %p38
      %p238 = pneg %p35
      %p239 = pneg %p59
      %p240 = pneg %p56
      %p241 = pneg %p80
      %p242 = pneg %p77
      %p243 = pneg %p101
      %p244 = pneg %p98
      %p245 = pneg %p122
      %p246 = pneg %p119
      %s247 = smul.u32 16, %s17
      %p248 = scmp.lt.s32.totalorder %s247, 63
      %s249 = scalar_select %p248, %s247, 63
      %s250 = smul.addr %s249, 8
      %s251 = scalar_lea.vmem %s5, %s250
      %p252 = pneg %p148
      %p253 = pneg %p145
      %p254 = pneg %p174
      %p255 = pneg %p171
      %s256 = smul.u32 16, %s17
      %p257 = scmp.lt.s32.totalorder %s256, 63
      %s258 = scalar_select %p257, %s256, 63
      %s259 = smul.addr %s258, 8
      %s260 = scalar_lea.vmem %s6, %s259
      %s261 = smul.u32 2, %s17
      %p262 = scmp.lt.s32.totalorder %s261, 7
      %s263 = scalar_select %p262, %s261, 7
      %s264 = smul.addr %s263, 8
      %s265 = smul.addr %s264, 8
      %s266 = scalar_lea.vmem %s0, %s265
      %s267 = smul.u32 2, %s17
      %s268 = smul.u32 16, %s17
      %p269 = scmp.lt.s32.totalorder %s268, 63
      %s270 = scalar_select %p269, %s268, 63
      %s271 = smul.addr %s270, 8
      %s272 = scalar_lea.vmem %s5, %s271
      %s273 = smul.u32 16, %s17
      %s274 = smul.u32 16, %s17
      %p275 = scmp.lt.s32.totalorder %s274, 63
      %s276 = scalar_select %p275, %s274, 63
      %s277 = smul.addr %s276, 8
      %s278 = scalar_lea.vmem %s6, %s277
      %s279 = smul.u32 16, %s17
      %281 = vst [vmem:[#allocation2] sm:$0xff] 0.0
      %282 = vst [vmem:[#allocation2 + $0x8] sm:$0x3] 0.0
      %283 = vst [vmem:[#allocation2 + $0xa0] sm:$0xff] 0.0
      %284 = vst [vmem:[#allocation2 + $0xa8] sm:$0x3] 0.0
      %s285 = scalar_lea.vmem [#allocation2], 144
      %286 = vst [vmem:[%s285] sm:$0xff] 0.0
      %287 = vst [vmem:[%s285 + $0x8] sm:$0x3] 0.0
      %288 = vst [vmem:[%s285 + $0xa0] sm:$0xff] 0.0
      %289 = vst [vmem:[%s285 + $0xa8] sm:$0x3] 0.0
      %290 = vst [vmem:[#allocation2] sm:$0x1] 0.0
      %291 = vst [vmem:[#allocation2 + $0x10] sm:$0x1] 0.0
      %292 = vst [vmem:[#allocation2 + $0x20] sm:$0x1] 0.0
      %293 = vst [vmem:[#allocation2 + $0x30] sm:$0x1] 0.0
      %294 = vst [vmem:[#allocation2 + $0x40] sm:$0x1] 0.0
      %295 = vst [vmem:[#allocation2 + $0x50] sm:$0x1] 0.0
      %296 = vst [vmem:[#allocation2 + $0x60] sm:$0x1] 0.0
      %297 = vst [vmem:[#allocation2 + $0x70] sm:$0x1] 0.0
      %298 = vst [vmem:[#allocation2 + $0x80] sm:$0x1] 0.0
      %299 = vst [vmem:[#allocation2 + $0x90] sm:$0x1] 0.0
      %300 = vst [vmem:[#allocation2 + $0xa0] sm:$0x1] 0.0
      %301 = vst [vmem:[#allocation2 + $0xb0] sm:$0x1] 0.0
      %302 = vst [vmem:[#allocation2 + $0xc0] sm:$0x1] 0.0
      %303 = vst [vmem:[#allocation2 + $0xd0] sm:$0x1] 0.0
      %304 = vst [vmem:[#allocation2 + $0xe0] sm:$0x1] 0.0
      %305 = vst [vmem:[#allocation2 + $0xf0] sm:$0x1] 0.0
      %306 = vst [vmem:[#allocation2 + $0x100] sm:$0x1] 0.0
      %307 = vst [vmem:[#allocation2 + $0x110] sm:$0x1] 0.0
      %308 = vst [vmem:[#allocation2 + $0x120] sm:$0x1] 0.0
      %309 = vst [vmem:[#allocation2 + $0x130] sm:$0x1] 0.0
      %310 = vst [vmem:[#allocation2 + $0x9] sm:$0x1] 0.0
      %311 = vst [vmem:[#allocation2 + $0x19] sm:$0x1] 0.0
      %312 = vst [vmem:[#allocation2 + $0x29] sm:$0x1] 0.0
      %313 = vst [vmem:[#allocation2 + $0x39] sm:$0x1] 0.0
      %314 = vst [vmem:[#allocation2 + $0x49] sm:$0x1] 0.0
      %315 = vst [vmem:[#allocation2 + $0x59] sm:$0x1] 0.0
      %316 = vst [vmem:[#allocation2 + $0x69] sm:$0x1] 0.0
      %317 = vst [vmem:[#allocation2 + $0x79] sm:$0x1] 0.0
      %318 = vst [vmem:[#allocation2 + $0x89] sm:$0x1] 0.0
      %319 = vst [vmem:[#allocation2 + $0x99] sm:$0x1] 0.0
      %320 = vst [vmem:[#allocation2 + $0xa9] sm:$0x1] 0.0
      %321 = vst [vmem:[#allocation2 + $0xb9] sm:$0x1] 0.0
      %322 = vst [vmem:[#allocation2 + $0xc9] sm:$0x1] 0.0
      %323 = vst [vmem:[#allocation2 + $0xd9] sm:$0x1] 0.0
      %324 = vst [vmem:[#allocation2 + $0xe9] sm:$0x1] 0.0
      %325 = vst [vmem:[#allocation2 + $0xf9] sm:$0x1] 0.0
      %326 = vst [vmem:[#allocation2 + $0x109] sm:$0x1] 0.0
      %327 = vst [vmem:[#allocation2 + $0x119] sm:$0x1] 0.0
      %328 = vst [vmem:[#allocation2 + $0x129] sm:$0x1] 0.0
      %329 = vst [vmem:[#allocation2 + $0x139] sm:$0x1] 0.0
      %v330 = vld [vmem:[%s266] sm:$0xff]
      %v331 = vld [vmem:[%s266 + $0x8] sm:$0xff]
      %v332 = vld [vmem:[%s266 + $0x10] sm:$0xff]
      %v333 = vld [vmem:[%s266 + $0x18] sm:$0xff]
      %v334 = vld [vmem:[%s266 + $0x20] sm:$0xff]
      %v335 = vld [vmem:[%s266 + $0x28] sm:$0xff]
      %v336 = vld [vmem:[%s266 + $0x30] sm:$0xff]
      %v337 = vld [vmem:[%s266 + $0x38] sm:$0xff]
      %v338 = vld [vmem:[%s266 + $0x40] sm:$0xff]
      %v339 = vld [vmem:[%s266 + $0x48] sm:$0xff]
      %v340 = vld [vmem:[%s266 + $0x50] sm:$0xff]
      %v341 = vld [vmem:[%s266 + $0x58] sm:$0xff]
      %v342 = vld [vmem:[%s266 + $0x60] sm:$0xff]
      %v343 = vld [vmem:[%s266 + $0x68] sm:$0xff]
      %v344 = vld [vmem:[%s266 + $0x70] sm:$0xff]
      %v345 = vld [vmem:[%s266 + $0x78] sm:$0xff]
      %s346 = scalar_lea.vmem [#allocation2], 16
      %347 = vst [vmem:[%s346 + $0x1] sm:$0xff] %v330
      %348 = vst [vmem:[%s346 + $0x11] sm:$0xff] %v331
      %349 = vst [vmem:[%s346 + $0x21] sm:$0xff] %v332
      %350 = vst [vmem:[%s346 + $0x31] sm:$0xff] %v333
      %351 = vst [vmem:[%s346 + $0x41] sm:$0xff] %v334
      %352 = vst [vmem:[%s346 + $0x51] sm:$0xff] %v335
      %353 = vst [vmem:[%s346 + $0x61] sm:$0xff] %v336
      %354 = vst [vmem:[%s346 + $0x71] sm:$0xff] %v337
      %355 = vst [vmem:[%s346 + $0xa1] sm:$0xff] %v338
      %356 = vst [vmem:[%s346 + $0xb1] sm:$0xff] %v339
      %357 = vst [vmem:[%s346 + $0xc1] sm:$0xff] %v340
      %358 = vst [vmem:[%s346 + $0xd1] sm:$0xff] %v341
      %359 = vst [vmem:[%s346 + $0xe1] sm:$0xff] %v342
      %360 = vst [vmem:[%s346 + $0xf1] sm:$0xff] %v343
      %361 = vst [vmem:[%s346 + $0x101] sm:$0xff] %v344
      %362 = vst [vmem:[%s346 + $0x111] sm:$0xff] %v345
      %v363 = vld [vmem:[#allocation2] sm:$0xff]
      %v364 = vld [vmem:[#allocation2 + $0x10] sm:$0xff]
      %v365 = vld [vmem:[#allocation2 + $0x20] sm:$0xff]
      %v366 = vld [vmem:[#allocation2 + $0x30] sm:$0xff]
      %v367 = vld [vmem:[#allocation2 + $0x40] sm:$0xff]
      %v368 = vld [vmem:[#allocation2 + $0x50] sm:$0xff]
      %v369 = vld [vmem:[#allocation2 + $0x60] sm:$0xff]
      %v370 = vld [vmem:[#allocation2 + $0x70] sm:$0xff]
      %v371 = vld [vmem:[#allocation2 + $0xa0] sm:$0xff]
      %v372 = vld [vmem:[#allocation2 + $0xb0] sm:$0xff]
      %v373 = vld [vmem:[#allocation2 + $0xc0] sm:$0xff]
      %v374 = vld [vmem:[#allocation2 + $0xd0] sm:$0xff]
      %v375 = vld [vmem:[#allocation2 + $0xe0] sm:$0xff]
      %v376 = vld [vmem:[#allocation2 + $0xf0] sm:$0xff]
      %v377 = vld [vmem:[#allocation2 + $0x100] sm:$0xff]
      %v378 = vld [vmem:[#allocation2 + $0x110] sm:$0xff]
      %v379 = vpack.c.bf16 %v364, %v363
      %v380 = vpack.c.bf16 %v366, %v365
      %v381 = vpack.c.bf16 %v368, %v367
      %v382 = vpack.c.bf16 %v370, %v369
      %v383 = vpack.c.bf16 %v372, %v371
      %v384 = vpack.c.bf16 %v374, %v373
      %v385 = vpack.c.bf16 %v376, %v375
      %v386 = vpack.c.bf16 %v378, %v377
      %v387 = vld [vmem:[%s1] sm:$0xf]
      %v388 = vld [vmem:[%s1 + $0x4] sm:$0xf]
      %v389 = vld [vmem:[%s1 + $0x8] sm:$0xf]
      %v390 = vld [vmem:[%s1 + $0xc] sm:$0xf]
      %v391 = vld [vmem:[%s1 + $0x10] sm:$0xf]
      %v392 = vld [vmem:[%s1 + $0x14] sm:$0xf]
      %v393 = vld [vmem:[%s1 + $0x18] sm:$0xf]
      %v394 = vld [vmem:[%s1 + $0x1c] sm:$0xf]
      %v395 = vld [vmem:[%s1 + $0x20] sm:$0xf]
      %v396 = vld [vmem:[%s1 + $0x24] sm:$0xf]
      %v397 = vld [vmem:[%s1 + $0x28] sm:$0xf]
      %v398 = vld [vmem:[%s1 + $0x2c] sm:$0xf]
      %v399 = vld [vmem:[%s1 + $0x30] sm:$0xf]
      %v400 = vld [vmem:[%s1 + $0x34] sm:$0xf]
      %v401 = vld [vmem:[%s1 + $0x38] sm:$0xf]
      %v402 = vld [vmem:[%s1 + $0x3c] sm:$0xf]
      %v403 = vld [vmem:[#allocation2 + $0x1] sm:$0xff]
      %v404 = vld [vmem:[#allocation2 + $0x11] sm:$0xff]
      %v405 = vld [vmem:[#allocation2 + $0x21] sm:$0xff]
      %v406 = vld [vmem:[#allocation2 + $0x31] sm:$0xff]
      %v407 = vld [vmem:[#allocation2 + $0x41] sm:$0xff]
      %v408 = vld [vmem:[#allocation2 + $0x51] sm:$0xff]
      %v409 = vld [vmem:[#allocation2 + $0x61] sm:$0xff]
      %v410 = vld [vmem:[#allocation2 + $0x71] sm:$0xff]
      %v411 = vld [vmem:[#allocation2 + $0xa1] sm:$0xff]
      %v412 = vld [vmem:[#allocation2 + $0xb1] sm:$0xff]
      %v413 = vld [vmem:[#allocation2 + $0xc1] sm:$0xff]
      %v414 = vld [vmem:[#allocation2 + $0xd1] sm:$0xff]
      %v415 = vld [vmem:[#allocation2 + $0xe1] sm:$0xff]
      %v416 = vld [vmem:[#allocation2 + $0xf1] sm:$0xff]
      %v417 = vld [vmem:[#allocation2 + $0x101] sm:$0xff]
      %v418 = vld [vmem:[#allocation2 + $0x111] sm:$0xff]
      %v419 = vpack.c.bf16 %v404, %v403
      %v420 = vpack.c.bf16 %v406, %v405
      %v421 = vpack.c.bf16 %v408, %v407
      %v422 = vpack.c.bf16 %v410, %v409
      %v423 = vpack.c.bf16 %v412, %v411
      %v424 = vpack.c.bf16 %v414, %v413
      %v425 = vpack.c.bf16 %v416, %v415
      %v426 = vpack.c.bf16 %v418, %v417
      %s427 = scalar_lea.vmem %s1, 64
      %v428 = vld [vmem:[%s427] sm:$0xf]
      %v429 = vld [vmem:[%s427 + $0x4] sm:$0xf]
      %v430 = vld [vmem:[%s427 + $0x8] sm:$0xf]
      %v431 = vld [vmem:[%s427 + $0xc] sm:$0xf]
      %v432 = vld [vmem:[%s427 + $0x10] sm:$0xf]
      %v433 = vld [vmem:[%s427 + $0x14] sm:$0xf]
      %v434 = vld [vmem:[%s427 + $0x18] sm:$0xf]
      %v435 = vld [vmem:[%s427 + $0x1c] sm:$0xf]
      %v436 = vld [vmem:[%s427 + $0x20] sm:$0xf]
      %v437 = vld [vmem:[%s427 + $0x24] sm:$0xf]
      %v438 = vld [vmem:[%s427 + $0x28] sm:$0xf]
      %v439 = vld [vmem:[%s427 + $0x2c] sm:$0xf]
      %v440 = vld [vmem:[%s427 + $0x30] sm:$0xf]
      %v441 = vld [vmem:[%s427 + $0x34] sm:$0xf]
      %v442 = vld [vmem:[%s427 + $0x38] sm:$0xf]
      %v443 = vld [vmem:[%s427 + $0x3c] sm:$0xf]
      %v460 = vunpack.c.l.b16 %v428
      %v461 = vunpack.c.l.b16 %v429
      %v462 = vunpack.c.l.b16 %v430
      %v463 = vunpack.c.l.b16 %v431
      %v464 = vunpack.c.l.b16 %v432
      %v465 = vunpack.c.l.b16 %v433
      %v466 = vunpack.c.l.b16 %v434
      %v467 = vunpack.c.l.b16 %v435
      %v468 = vunpack.c.l.b16 %v436
      %v469 = vunpack.c.l.b16 %v437
      %v470 = vunpack.c.l.b16 %v438
      %v471 = vunpack.c.l.b16 %v439
      %v472 = vunpack.c.l.b16 %v440
      %v473 = vunpack.c.l.b16 %v441
      %v474 = vunpack.c.l.b16 %v442
      %v475 = vunpack.c.l.b16 %v443
      %v476 = vpack.c.b16 %v461, %v460
      %v477 = vpack.c.b16 %v463, %v462
      %v478 = vpack.c.b16 %v465, %v464
      %v479 = vpack.c.b16 %v467, %v466
      %v480 = vpack.c.b16 %v469, %v468
      %v481 = vpack.c.b16 %v471, %v470
      %v482 = vpack.c.b16 %v473, %v472
      %v483 = vpack.c.b16 %v475, %v474
      %492 = vmatprep.subr.bf16.mxu0 0
      %493 = vmatpush1.bf16.msra.mxu0 %v483
      %494 = vmatprep.subr.bf16.mxu0 0
      %495 = vmatpush1.bf16.msra.mxu0 %v482
      %496 = vmatprep.subr.bf16.mxu0 0
      %497 = vmatpush1.bf16.msra.mxu0 %v481
      %498 = vmatprep.subr.bf16.mxu0 0
      %499 = vmatpush1.bf16.msra.mxu0 %v480
      %500 = vmatprep.subr.bf16.mxu0 0
      %501 = vmatpush1.bf16.msra.mxu0 %v479
      %502 = vmatprep.subr.bf16.mxu0 0
      %503 = vmatpush1.bf16.msra.mxu0 %v478
      %504 = vmatprep.subr.bf16.mxu0 0
      %505 = vmatpush1.bf16.msra.mxu0 %v477
      %506 = vmatprep.subr.bf16.mxu0 0
      %507 = vmatpush1.bf16.msra.mxu0 %v476
      %508 = vmatprep.subr.bf16.mxu0 0
      %509 = vmatpush2.bf16.msra.mxu0 0
      %510 = vmatprep.subr.bf16.mxu0 0
      %511 = vmatpush2.bf16.msra.mxu0 0
      %512 = vmatprep.subr.bf16.mxu0 0
      %513 = vmatpush2.bf16.msra.mxu0 0
      %514 = vmatprep.subr.bf16.mxu0 0
      %515 = vmatpush2.bf16.msra.mxu0 0
      %516 = vmatprep.subr.bf16.mxu0 0
      %517 = vmatpush2.bf16.msra.mxu0 0
      %518 = vmatprep.subr.bf16.mxu0 0
      %519 = vmatpush2.bf16.msra.mxu0 0
      %520 = vmatprep.subr.bf16.mxu0 0
      %521 = vmatpush2.bf16.msra.mxu0 0
      %522 = vmatprep.subr.bf16.mxu0 0
      %523 = vmatpush2.bf16.msra.mxu0 0
      %524 = vmatprep.mubr.bf16.mxu0 0
      %525 = vmatmul.mubr.bf16.gmra.mxu0 %v419
      %v526 = vpop.f32.mrf.mxu0
      %v527 = vadd.f32 0.0, %v526
      %v528 = vpop.f32.mrf.mxu0
      %v529 = vpop.f32.mrf.mxu0
      %v530 = vadd.f32 0.0, %v529
      %v531 = vpop.f32.mrf.mxu0
      %532 = vmatprep.mubr.bf16.mxu0 0
      %533 = vmatmul.mubr.bf16.gmra.mxu0 %v420
      %v534 = vpop.f32.mrf.mxu0
      %v535 = vadd.f32 0.0, %v534
      %v536 = vpop.f32.mrf.mxu0
      %v537 = vpop.f32.mrf.mxu0
      %v538 = vadd.f32 0.0, %v537
      %v539 = vpop.f32.mrf.mxu0
      %540 = vmatprep.mubr.bf16.mxu0 0
      %541 = vmatmul.mubr.bf16.gmra.mxu0 %v421
      %v542 = vpop.f32.mrf.mxu0
      %v543 = vadd.f32 0.0, %v542
      %v544 = vpop.f32.mrf.mxu0
      %v545 = vpop.f32.mrf.mxu0
      %v546 = vadd.f32 0.0, %v545
      %v547 = vpop.f32.mrf.mxu0
      %548 = vmatprep.mubr.bf16.mxu0 0
      %549 = vmatmul.mubr.bf16.gmra.mxu0 %v422
      %v550 = vpop.f32.mrf.mxu0
      %v551 = vadd.f32 0.0, %v550
      %v552 = vpop.f32.mrf.mxu0
      %v553 = vpop.f32.mrf.mxu0
      %v554 = vadd.f32 0.0, %v553
      %v555 = vpop.f32.mrf.mxu0
      %556 = vmatprep.mubr.bf16.mxu0 0
      %557 = vmatmul.mubr.bf16.gmra.mxu0 %v423
      %v558 = vpop.f32.mrf.mxu0
      %v559 = vadd.f32 0.0, %v558
      %v560 = vpop.f32.mrf.mxu0
      %v561 = vpop.f32.mrf.mxu0
      %v562 = vadd.f32 0.0, %v561
      %v563 = vpop.f32.mrf.mxu0
      %564 = vmatprep.mubr.bf16.mxu0 0
      %565 = vmatmul.mubr.bf16.gmra.mxu0 %v424
      %v566 = vpop.f32.mrf.mxu0
      %v567 = vadd.f32 0.0, %v566
      %v568 = vpop.f32.mrf.mxu0
      %v569 = vpop.f32.mrf.mxu0
      %v570 = vadd.f32 0.0, %v569
      %v571 = vpop.f32.mrf.mxu0
      %572 = vmatprep.mubr.bf16.mxu0 0
      %573 = vmatmul.mubr.bf16.gmra.mxu0 %v425
      %v574 = vpop.f32.mrf.mxu0
      %v575 = vadd.f32 0.0, %v574
      %v576 = vpop.f32.mrf.mxu0
      %v577 = vpop.f32.mrf.mxu0
      %v578 = vadd.f32 0.0, %v577
      %v579 = vpop.f32.mrf.mxu0
      %580 = vmatprep.mubr.bf16.mxu0 0
      %581 = vmatmul.mubr.bf16.gmra.mxu0 %v426
      %v582 = vpop.f32.mrf.mxu0
      %v583 = vadd.f32 0.0, %v582
      %v584 = vpop.f32.mrf.mxu0
      %v585 = vpop.f32.mrf.mxu0
      %v586 = vadd.f32 0.0, %v585
      %v587 = vpop.f32.mrf.mxu0
      %588 = vdwg.mxu0
      %v605 = vunpack.c.l.b16 %v387
      %v606 = vunpack.c.l.b16 %v388
      %v607 = vunpack.c.l.b16 %v389
      %v608 = vunpack.c.l.b16 %v390
      %v609 = vunpack.c.l.b16 %v391
      %v610 = vunpack.c.l.b16 %v392
      %v611 = vunpack.c.l.b16 %v393
      %v612 = vunpack.c.l.b16 %v394
      %v613 = vunpack.c.l.b16 %v395
      %v614 = vunpack.c.l.b16 %v396
      %v615 = vunpack.c.l.b16 %v397
      %v616 = vunpack.c.l.b16 %v398
      %v617 = vunpack.c.l.b16 %v399
      %v618 = vunpack.c.l.b16 %v400
      %v619 = vunpack.c.l.b16 %v401
      %v620 = vunpack.c.l.b16 %v402
      %v621 = vpack.c.b16 %v606, %v605
      %v622 = vpack.c.b16 %v608, %v607
      %v623 = vpack.c.b16 %v610, %v609
      %v624 = vpack.c.b16 %v612, %v611
      %v625 = vpack.c.b16 %v614, %v613
      %v626 = vpack.c.b16 %v616, %v615
      %v627 = vpack.c.b16 %v618, %v617
      %v628 = vpack.c.b16 %v620, %v619
      %637 = vmatprep.subr.bf16.mxu0 0
      %638 = vmatpush1.bf16.msra.mxu0 %v628
      %639 = vmatprep.subr.bf16.mxu0 0
      %640 = vmatpush1.bf16.msra.mxu0 %v627
      %641 = vmatprep.subr.bf16.mxu0 0
      %642 = vmatpush1.bf16.msra.mxu0 %v626
      %643 = vmatprep.subr.bf16.mxu0 0
      %644 = vmatpush1.bf16.msra.mxu0 %v625
      %645 = vmatprep.subr.bf16.mxu0 0
      %646 = vmatpush1.bf16.msra.mxu0 %v624
      %647 = vmatprep.subr.bf16.mxu0 0
      %648 = vmatpush1.bf16.msra.mxu0 %v623
      %649 = vmatprep.subr.bf16.mxu0 0
      %650 = vmatpush1.bf16.msra.mxu0 %v622
      %651 = vmatprep.subr.bf16.mxu0 0
      %652 = vmatpush1.bf16.msra.mxu0 %v621
      %653 = vmatprep.subr.bf16.mxu0 0
      %654 = vmatpush2.bf16.msra.mxu0 0
      %655 = vmatprep.subr.bf16.mxu0 0
      %656 = vmatpush2.bf16.msra.mxu0 0
      %657 = vmatprep.subr.bf16.mxu0 0
      %658 = vmatpush2.bf16.msra.mxu0 0
      %659 = vmatprep.subr.bf16.mxu0 0
      %660 = vmatpush2.bf16.msra.mxu0 0
      %661 = vmatprep.subr.bf16.mxu0 0
      %662 = vmatpush2.bf16.msra.mxu0 0
      %663 = vmatprep.subr.bf16.mxu0 0
      %664 = vmatpush2.bf16.msra.mxu0 0
      %665 = vmatprep.subr.bf16.mxu0 0
      %666 = vmatpush2.bf16.msra.mxu0 0
      %667 = vmatprep.subr.bf16.mxu0 0
      %668 = vmatpush2.bf16.msra.mxu0 0
      %669 = vmatprep.mubr.bf16.mxu0 0
      %670 = vmatmul.mubr.bf16.gmra.mxu0 %v379
      %v671 = vpop.f32.mrf.mxu0
      %v672 = vadd.f32 %v527, %v671
      %v673 = vpop.f32.mrf.mxu0
      %v674 = vpop.f32.mrf.mxu0
      %v675 = vadd.f32 %v530, %v674
      %v676 = vpop.f32.mrf.mxu0
      %677 = vmatprep.mubr.bf16.mxu0 0
      %678 = vmatmul.mubr.bf16.gmra.mxu0 %v380
      %v679 = vpop.f32.mrf.mxu0
      %v680 = vadd.f32 %v535, %v679
      %v681 = vpop.f32.mrf.mxu0
      %v682 = vpop.f32.mrf.mxu0
      %v683 = vadd.f32 %v538, %v682
      %v684 = vpop.f32.mrf.mxu0
      %685 = vmatprep.mubr.bf16.mxu0 0
      %686 = vmatmul.mubr.bf16.gmra.mxu0 %v381
      %v687 = vpop.f32.mrf.mxu0
      %v688 = vadd.f32 %v543, %v687
      %v689 = vpop.f32.mrf.mxu0
      %v690 = vpop.f32.mrf.mxu0
      %v691 = vadd.f32 %v546, %v690
      %v692 = vpop.f32.mrf.mxu0
      %693 = vmatprep.mubr.bf16.mxu0 0
      %694 = vmatmul.mubr.bf16.gmra.mxu0 %v382
      %v695 = vpop.f32.mrf.mxu0
      %v696 = vadd.f32 %v551, %v695
      %v697 = vpop.f32.mrf.mxu0
      %v698 = vpop.f32.mrf.mxu0
      %v699 = vadd.f32 %v554, %v698
      %v700 = vpop.f32.mrf.mxu0
      %701 = vmatprep.mubr.bf16.mxu0 0
      %702 = vmatmul.mubr.bf16.gmra.mxu0 %v383
      %v703 = vpop.f32.mrf.mxu0
      %v704 = vadd.f32 %v559, %v703
      %v705 = vpop.f32.mrf.mxu0
      %v706 = vpop.f32.mrf.mxu0
      %v707 = vadd.f32 %v562, %v706
      %v708 = vpop.f32.mrf.mxu0
      %709 = vmatprep.mubr.bf16.mxu0 0
      %710 = vmatmul.mubr.bf16.gmra.mxu0 %v384
      %v711 = vpop.f32.mrf.mxu0
      %v712 = vadd.f32 %v567, %v711
      %v713 = vpop.f32.mrf.mxu0
      %v714 = vpop.f32.mrf.mxu0
      %v715 = vadd.f32 %v570, %v714
      %v716 = vpop.f32.mrf.mxu0
      %717 = vmatprep.mubr.bf16.mxu0 0
      %718 = vmatmul.mubr.bf16.gmra.mxu0 %v385
      %v719 = vpop.f32.mrf.mxu0
      %v720 = vadd.f32 %v575, %v719
      %v721 = vpop.f32.mrf.mxu0
      %v722 = vpop.f32.mrf.mxu0
      %v723 = vadd.f32 %v578, %v722
      %v724 = vpop.f32.mrf.mxu0
      %725 = vmatprep.mubr.bf16.mxu0 0
      %726 = vmatmul.mubr.bf16.gmra.mxu0 %v386
      %v727 = vpop.f32.mrf.mxu0
      %v728 = vadd.f32 %v583, %v727
      %v729 = vpop.f32.mrf.mxu0
      %v730 = vpop.f32.mrf.mxu0
      %v731 = vadd.f32 %v586, %v730
      %v732 = vpop.f32.mrf.mxu0
      %733 = vdwg.mxu0
      %v734 = vld [vmem:[#allocation2 + $0x2] sm:$0xff]
      %v735 = vld [vmem:[#allocation2 + $0x12] sm:$0xff]
      %v736 = vld [vmem:[#allocation2 + $0x22] sm:$0xff]
      %v737 = vld [vmem:[#allocation2 + $0x32] sm:$0xff]
      %v738 = vld [vmem:[#allocation2 + $0x42] sm:$0xff]
      %v739 = vld [vmem:[#allocation2 + $0x52] sm:$0xff]
      %v740 = vld [vmem:[#allocation2 + $0x62] sm:$0xff]
      %v741 = vld [vmem:[#allocation2 + $0x72] sm:$0xff]
      %v742 = vld [vmem:[#allocation2 + $0xa2] sm:$0xff]
      %v743 = vld [vmem:[#allocation2 + $0xb2] sm:$0xff]
      %v744 = vld [vmem:[#allocation2 + $0xc2] sm:$0xff]
      %v745 = vld [vmem:[#allocation2 + $0xd2] sm:$0xff]
      %v746 = vld [vmem:[#allocation2 + $0xe2] sm:$0xff]
      %v747 = vld [vmem:[#allocation2 + $0xf2] sm:$0xff]
      %v748 = vld [vmem:[#allocation2 + $0x102] sm:$0xff]
      %v749 = vld [vmem:[#allocation2 + $0x112] sm:$0xff]
      %v750 = vpack.c.bf16 %v735, %v734
      %v751 = vpack.c.bf16 %v737, %v736
      %v752 = vpack.c.bf16 %v739, %v738
      %v753 = vpack.c.bf16 %v741, %v740
      %v754 = vpack.c.bf16 %v743, %v742
      %v755 = vpack.c.bf16 %v745, %v744
      %v756 = vpack.c.bf16 %v747, %v746
      %v757 = vpack.c.bf16 %v749, %v748
      %s758 = scalar_lea.vmem %s1, 128
      %v759 = vld [vmem:[%s758] sm:$0xf]
      %v760 = vld [vmem:[%s758 + $0x4] sm:$0xf]
      %v761 = vld [vmem:[%s758 + $0x8] sm:$0xf]
      %v762 = vld [vmem:[%s758 + $0xc] sm:$0xf]
      %v763 = vld [vmem:[%s758 + $0x10] sm:$0xf]
      %v764 = vld [vmem:[%s758 + $0x14] sm:$0xf]
      %v765 = vld [vmem:[%s758 + $0x18] sm:$0xf]
      %v766 = vld [vmem:[%s758 + $0x1c] sm:$0xf]
      %v767 = vld [vmem:[%s758 + $0x20] sm:$0xf]
      %v768 = vld [vmem:[%s758 + $0x24] sm:$0xf]
      %v769 = vld [vmem:[%s758 + $0x28] sm:$0xf]
      %v770 = vld [vmem:[%s758 + $0x2c] sm:$0xf]
      %v771 = vld [vmem:[%s758 + $0x30] sm:$0xf]
      %v772 = vld [vmem:[%s758 + $0x34] sm:$0xf]
      %v773 = vld [vmem:[%s758 + $0x38] sm:$0xf]
      %v774 = vld [vmem:[%s758 + $0x3c] sm:$0xf]
      %v791 = vunpack.c.l.b16 %v759
      %v792 = vunpack.c.l.b16 %v760
      %v793 = vunpack.c.l.b16 %v761
      %v794 = vunpack.c.l.b16 %v762
      %v795 = vunpack.c.l.b16 %v763
      %v796 = vunpack.c.l.b16 %v764
      %v797 = vunpack.c.l.b16 %v765
      %v798 = vunpack.c.l.b16 %v766
      %v799 = vunpack.c.l.b16 %v767
      %v800 = vunpack.c.l.b16 %v768
      %v801 = vunpack.c.l.b16 %v769
      %v802 = vunpack.c.l.b16 %v770
      %v803 = vunpack.c.l.b16 %v771
      %v804 = vunpack.c.l.b16 %v772
      %v805 = vunpack.c.l.b16 %v773
      %v806 = vunpack.c.l.b16 %v774
      %v807 = vpack.c.b16 %v792, %v791
      %v808 = vpack.c.b16 %v794, %v793
      %v809 = vpack.c.b16 %v796, %v795
      %v810 = vpack.c.b16 %v798, %v797
      %v811 = vpack.c.b16 %v800, %v799
      %v812 = vpack.c.b16 %v802, %v801
      %v813 = vpack.c.b16 %v804, %v803
      %v814 = vpack.c.b16 %v806, %v805
      %823 = vmatprep.subr.bf16.mxu0 0
      %824 = vmatpush1.bf16.msra.mxu0 %v814
      %825 = vmatprep.subr.bf16.mxu0 0
      %826 = vmatpush1.bf16.msra.mxu0 %v813
      %827 = vmatprep.subr.bf16.mxu0 0
      %828 = vmatpush1.bf16.msra.mxu0 %v812
      %829 = vmatprep.subr.bf16.mxu0 0
      %830 = vmatpush1.bf16.msra.mxu0 %v811
      %831 = vmatprep.subr.bf16.mxu0 0
      %832 = vmatpush1.bf16.msra.mxu0 %v810
      %833 = vmatprep.subr.bf16.mxu0 0
      %834 = vmatpush1.bf16.msra.mxu0 %v809
      %835 = vmatprep.subr.bf16.mxu0 0
      %836 = vmatpush1.bf16.msra.mxu0 %v808
      %837 = vmatprep.subr.bf16.mxu0 0
      %838 = vmatpush1.bf16.msra.mxu0 %v807
      %839 = vmatprep.subr.bf16.mxu0 0
      %840 = vmatpush2.bf16.msra.mxu0 0
      %841 = vmatprep.subr.bf16.mxu0 0
      %842 = vmatpush2.bf16.msra.mxu0 0
      %843 = vmatprep.subr.bf16.mxu0 0
      %844 = vmatpush2.bf16.msra.mxu0 0
      %845 = vmatprep.subr.bf16.mxu0 0
      %846 = vmatpush2.bf16.msra.mxu0 0
      %847 = vmatprep.subr.bf16.mxu0 0
      %848 = vmatpush2.bf16.msra.mxu0 0
      %849 = vmatprep.subr.bf16.mxu0 0
      %850 = vmatpush2.bf16.msra.mxu0 0
      %851 = vmatprep.subr.bf16.mxu0 0
      %852 = vmatpush2.bf16.msra.mxu0 0
      %853 = vmatprep.subr.bf16.mxu0 0
      %854 = vmatpush2.bf16.msra.mxu0 0
      %855 = vmatprep.mubr.bf16.mxu0 0
      %856 = vmatmul.mubr.bf16.gmra.mxu0 %v750
      %v857 = vpop.f32.mrf.mxu0
      %v858 = vadd.f32 0.0, %v857
      %v859 = vpop.f32.mrf.mxu0
      %v860 = vpop.f32.mrf.mxu0
      %v861 = vadd.f32 0.0, %v860
      %v862 = vpop.f32.mrf.mxu0
      %863 = vmatprep.mubr.bf16.mxu0 0
      %864 = vmatmul.mubr.bf16.gmra.mxu0 %v751
      %v865 = vpop.f32.mrf.mxu0
      %v866 = vadd.f32 0.0, %v865
      %v867 = vpop.f32.mrf.mxu0
      %v868 = vpop.f32.mrf.mxu0
      %v869 = vadd.f32 0.0, %v868
      %v870 = vpop.f32.mrf.mxu0
      %871 = vmatprep.mubr.bf16.mxu0 0
      %872 = vmatmul.mubr.bf16.gmra.mxu0 %v752
      %v873 = vpop.f32.mrf.mxu0
      %v874 = vadd.f32 0.0, %v873
      %v875 = vpop.f32.mrf.mxu0
      %v876 = vpop.f32.mrf.mxu0
      %v877 = vadd.f32 0.0, %v876
      %v878 = vpop.f32.mrf.mxu0
      %879 = vmatprep.mubr.bf16.mxu0 0
      %880 = vmatmul.mubr.bf16.gmra.mxu0 %v753
      %v881 = vpop.f32.mrf.mxu0
      %v882 = vadd.f32 0.0, %v881
      %v883 = vpop.f32.mrf.mxu0
      %v884 = vpop.f32.mrf.mxu0
      %v885 = vadd.f32 0.0, %v884
      %v886 = vpop.f32.mrf.mxu0
      %887 = vmatprep.mubr.bf16.mxu0 0
      %888 = vmatmul.mubr.bf16.gmra.mxu0 %v754
      %v889 = vpop.f32.mrf.mxu0
      %v890 = vadd.f32 0.0, %v889
      %v891 = vpop.f32.mrf.mxu0
      %v892 = vpop.f32.mrf.mxu0
      %v893 = vadd.f32 0.0, %v892
      %v894 = vpop.f32.mrf.mxu0
      %895 = vmatprep.mubr.bf16.mxu0 0
      %896 = vmatmul.mubr.bf16.gmra.mxu0 %v755
      %v897 = vpop.f32.mrf.mxu0
      %v898 = vadd.f32 0.0, %v897
      %v899 = vpop.f32.mrf.mxu0
      %v900 = vpop.f32.mrf.mxu0
      %v901 = vadd.f32 0.0, %v900
      %v902 = vpop.f32.mrf.mxu0
      %903 = vmatprep.mubr.bf16.mxu0 0
      %904 = vmatmul.mubr.bf16.gmra.mxu0 %v756
      %v905 = vpop.f32.mrf.mxu0
      %v906 = vadd.f32 0.0, %v905
      %v907 = vpop.f32.mrf.mxu0
      %v908 = vpop.f32.mrf.mxu0
      %v909 = vadd.f32 0.0, %v908
      %v910 = vpop.f32.mrf.mxu0
      %911 = vmatprep.mubr.bf16.mxu0 0
      %912 = vmatmul.mubr.bf16.gmra.mxu0 %v757
      %v913 = vpop.f32.mrf.mxu0
      %v914 = vadd.f32 0.0, %v913
      %v915 = vpop.f32.mrf.mxu0
      %v916 = vpop.f32.mrf.mxu0
      %v917 = vadd.f32 0.0, %v916
      %v918 = vpop.f32.mrf.mxu0
      %919 = vdwg.mxu0
      %v920 = vadd.f32 %v672, %v858
      %v921 = vadd.f32 %v675, %v861
      %v922 = vadd.f32 %v680, %v866
      %v923 = vadd.f32 %v683, %v869
      %v924 = vadd.f32 %v688, %v874
      %v925 = vadd.f32 %v691, %v877
      %v926 = vadd.f32 %v696, %v882
      %v927 = vadd.f32 %v699, %v885
      %v928 = vadd.f32 %v704, %v890
      %v929 = vadd.f32 %v707, %v893
      %v930 = vadd.f32 %v712, %v898
      %v931 = vadd.f32 %v715, %v901
      %v932 = vadd.f32 %v720, %v906
      %v933 = vadd.f32 %v723, %v909
      %v934 = vadd.f32 %v728, %v914
      %v935 = vadd.f32 %v731, %v917
      %v936 = vld [vmem:[%s346] sm:$0xff]
      %v937 = vld [vmem:[%s346 + $0x10] sm:$0xff]
      %v938 = vld [vmem:[%s346 + $0x20] sm:$0xff]
      %v939 = vld [vmem:[%s346 + $0x30] sm:$0xff]
      %v940 = vld [vmem:[%s346 + $0x40] sm:$0xff]
      %v941 = vld [vmem:[%s346 + $0x50] sm:$0xff]
      %v942 = vld [vmem:[%s346 + $0x60] sm:$0xff]
      %v943 = vld [vmem:[%s346 + $0x70] sm:$0xff]
      %v944 = vld [vmem:[%s346 + $0xa0] sm:$0xff]
      %v945 = vld [vmem:[%s346 + $0xb0] sm:$0xff]
      %v946 = vld [vmem:[%s346 + $0xc0] sm:$0xff]
      %v947 = vld [vmem:[%s346 + $0xd0] sm:$0xff]
      %v948 = vld [vmem:[%s346 + $0xe0] sm:$0xff]
      %v949 = vld [vmem:[%s346 + $0xf0] sm:$0xff]
      %v950 = vld [vmem:[%s346 + $0x100] sm:$0xff]
      %v951 = vld [vmem:[%s346 + $0x110] sm:$0xff]
      %v952 = vpack.c.bf16 %v937, %v936
      %v953 = vpack.c.bf16 %v939, %v938
      %v954 = vpack.c.bf16 %v941, %v940
      %v955 = vpack.c.bf16 %v943, %v942
      %v956 = vpack.c.bf16 %v945, %v944
      %v957 = vpack.c.bf16 %v947, %v946
      %v958 = vpack.c.bf16 %v949, %v948
      %v959 = vpack.c.bf16 %v951, %v950
      %s960 = scalar_lea.vmem %s1, 192
      %v961 = vld [vmem:[%s960] sm:$0xf]
      %v962 = vld [vmem:[%s960 + $0x4] sm:$0xf]
      %v963 = vld [vmem:[%s960 + $0x8] sm:$0xf]
      %v964 = vld [vmem:[%s960 + $0xc] sm:$0xf]
      %v965 = vld [vmem:[%s960 + $0x10] sm:$0xf]
      %v966 = vld [vmem:[%s960 + $0x14] sm:$0xf]
      %v967 = vld [vmem:[%s960 + $0x18] sm:$0xf]
      %v968 = vld [vmem:[%s960 + $0x1c] sm:$0xf]
      %v969 = vld [vmem:[%s960 + $0x20] sm:$0xf]
      %v970 = vld [vmem:[%s960 + $0x24] sm:$0xf]
      %v971 = vld [vmem:[%s960 + $0x28] sm:$0xf]
      %v972 = vld [vmem:[%s960 + $0x2c] sm:$0xf]
      %v973 = vld [vmem:[%s960 + $0x30] sm:$0xf]
      %v974 = vld [vmem:[%s960 + $0x34] sm:$0xf]
      %v975 = vld [vmem:[%s960 + $0x38] sm:$0xf]
      %v976 = vld [vmem:[%s960 + $0x3c] sm:$0xf]
      %v993 = vunpack.c.l.b16 %v961
      %v994 = vunpack.c.l.b16 %v962
      %v995 = vunpack.c.l.b16 %v963
      %v996 = vunpack.c.l.b16 %v964
      %v997 = vunpack.c.l.b16 %v965
      %v998 = vunpack.c.l.b16 %v966
      %v999 = vunpack.c.l.b16 %v967
      %v1000 = vunpack.c.l.b16 %v968
      %v1001 = vunpack.c.l.b16 %v969
      %v1002 = vunpack.c.l.b16 %v970
      %v1003 = vunpack.c.l.b16 %v971
      %v1004 = vunpack.c.l.b16 %v972
      %v1005 = vunpack.c.l.b16 %v973
      %v1006 = vunpack.c.l.b16 %v974
      %v1007 = vunpack.c.l.b16 %v975
      %v1008 = vunpack.c.l.b16 %v976
      %v1009 = vpack.c.b16 %v994, %v993
      %v1010 = vpack.c.b16 %v996, %v995
      %v1011 = vpack.c.b16 %v998, %v997
      %v1012 = vpack.c.b16 %v1000, %v999
      %v1013 = vpack.c.b16 %v1002, %v1001
      %v1014 = vpack.c.b16 %v1004, %v1003
      %v1015 = vpack.c.b16 %v1006, %v1005
      %v1016 = vpack.c.b16 %v1008, %v1007
      %1025 = vmatprep.subr.bf16.mxu0 0
      %1026 = vmatpush1.bf16.msra.mxu0 %v1016
      %1027 = vmatprep.subr.bf16.mxu0 0
      %1028 = vmatpush1.bf16.msra.mxu0 %v1015
      %1029 = vmatprep.subr.bf16.mxu0 0
      %1030 = vmatpush1.bf16.msra.mxu0 %v1014
      %1031 = vmatprep.subr.bf16.mxu0 0
      %1032 = vmatpush1.bf16.msra.mxu0 %v1013
      %1033 = vmatprep.subr.bf16.mxu0 0
      %1034 = vmatpush1.bf16.msra.mxu0 %v1012
      %1035 = vmatprep.subr.bf16.mxu0 0
      %1036 = vmatpush1.bf16.msra.mxu0 %v1011
      %1037 = vmatprep.subr.bf16.mxu0 0
      %1038 = vmatpush1.bf16.msra.mxu0 %v1010
      %1039 = vmatprep.subr.bf16.mxu0 0
      %1040 = vmatpush1.bf16.msra.mxu0 %v1009
      %1041 = vmatprep.subr.bf16.mxu0 0
      %1042 = vmatpush2.bf16.msra.mxu0 0
      %1043 = vmatprep.subr.bf16.mxu0 0
      %1044 = vmatpush2.bf16.msra.mxu0 0
      %1045 = vmatprep.subr.bf16.mxu0 0
      %1046 = vmatpush2.bf16.msra.mxu0 0
      %1047 = vmatprep.subr.bf16.mxu0 0
      %1048 = vmatpush2.bf16.msra.mxu0 0
      %1049 = vmatprep.subr.bf16.mxu0 0
      %1050 = vmatpush2.bf16.msra.mxu0 0
      %1051 = vmatprep.subr.bf16.mxu0 0
      %1052 = vmatpush2.bf16.msra.mxu0 0
      %1053 = vmatprep.subr.bf16.mxu0 0
      %1054 = vmatpush2.bf16.msra.mxu0 0
      %1055 = vmatprep.subr.bf16.mxu0 0
      %1056 = vmatpush2.bf16.msra.mxu0 0
      %1057 = vmatprep.mubr.bf16.mxu0 0
      %1058 = vmatmul.mubr.bf16.gmra.mxu0 %v952
      %v1059 = vpop.f32.mrf.mxu0
      %v1060 = vadd.f32 0.0, %v1059
      %v1061 = vpop.f32.mrf.mxu0
      %v1062 = vpop.f32.mrf.mxu0
      %v1063 = vadd.f32 0.0, %v1062
      %v1064 = vpop.f32.mrf.mxu0
      %1065 = vmatprep.mubr.bf16.mxu0 0
      %1066 = vmatmul.mubr.bf16.gmra.mxu0 %v953
      %v1067 = vpop.f32.mrf.mxu0
      %v1068 = vadd.f32 0.0, %v1067
      %v1069 = vpop.f32.mrf.mxu0
      %v1070 = vpop.f32.mrf.mxu0
      %v1071 = vadd.f32 0.0, %v1070
      %v1072 = vpop.f32.mrf.mxu0
      %1073 = vmatprep.mubr.bf16.mxu0 0
      %1074 = vmatmul.mubr.bf16.gmra.mxu0 %v954
      %v1075 = vpop.f32.mrf.mxu0
      %v1076 = vadd.f32 0.0, %v1075
      %v1077 = vpop.f32.mrf.mxu0
      %v1078 = vpop.f32.mrf.mxu0
      %v1079 = vadd.f32 0.0, %v1078
      %v1080 = vpop.f32.mrf.mxu0
      %1081 = vmatprep.mubr.bf16.mxu0 0
      %1082 = vmatmul.mubr.bf16.gmra.mxu0 %v955
      %v1083 = vpop.f32.mrf.mxu0
      %v1084 = vadd.f32 0.0, %v1083
      %v1085 = vpop.f32.mrf.mxu0
      %v1086 = vpop.f32.mrf.mxu0
      %v1087 = vadd.f32 0.0, %v1086
      %v1088 = vpop.f32.mrf.mxu0
      %1089 = vmatprep.mubr.bf16.mxu0 0
      %1090 = vmatmul.mubr.bf16.gmra.mxu0 %v956
      %v1091 = vpop.f32.mrf.mxu0
      %v1092 = vadd.f32 0.0, %v1091
      %v1093 = vpop.f32.mrf.mxu0
      %v1094 = vpop.f32.mrf.mxu0
      %v1095 = vadd.f32 0.0, %v1094
      %v1096 = vpop.f32.mrf.mxu0
      %1097 = vmatprep.mubr.bf16.mxu0 0
      %1098 = vmatmul.mubr.bf16.gmra.mxu0 %v957
      %v1099 = vpop.f32.mrf.mxu0
      %v1100 = vadd.f32 0.0, %v1099
      %v1101 = vpop.f32.mrf.mxu0
      %v1102 = vpop.f32.mrf.mxu0
      %v1103 = vadd.f32 0.0, %v1102
      %v1104 = vpop.f32.mrf.mxu0
      %1105 = vmatprep.mubr.bf16.mxu0 0
      %1106 = vmatmul.mubr.bf16.gmra.mxu0 %v958
      %v1107 = vpop.f32.mrf.mxu0
      %v1108 = vadd.f32 0.0, %v1107
      %v1109 = vpop.f32.mrf.mxu0
      %v1110 = vpop.f32.mrf.mxu0
      %v1111 = vadd.f32 0.0, %v1110
      %v1112 = vpop.f32.mrf.mxu0
      %1113 = vmatprep.mubr.bf16.mxu0 0
      %1114 = vmatmul.mubr.bf16.gmra.mxu0 %v959
      %v1115 = vpop.f32.mrf.mxu0
      %v1116 = vadd.f32 0.0, %v1115
      %v1117 = vpop.f32.mrf.mxu0
      %v1118 = vpop.f32.mrf.mxu0
      %v1119 = vadd.f32 0.0, %v1118
      %v1120 = vpop.f32.mrf.mxu0
      %1121 = vdwg.mxu0
      %v1122 = vadd.f32 %v920, %v1060
      %v1123 = vadd.f32 %v921, %v1063
      %v1124 = vadd.f32 %v922, %v1068
      %v1125 = vadd.f32 %v923, %v1071
      %v1126 = vadd.f32 %v924, %v1076
      %v1127 = vadd.f32 %v925, %v1079
      %v1128 = vadd.f32 %v926, %v1084
      %v1129 = vadd.f32 %v927, %v1087
      %v1130 = vadd.f32 %v928, %v1092
      %v1131 = vadd.f32 %v929, %v1095
      %v1132 = vadd.f32 %v930, %v1100
      %v1133 = vadd.f32 %v931, %v1103
      %v1134 = vadd.f32 %v932, %v1108
      %v1135 = vadd.f32 %v933, %v1111
      %v1136 = vadd.f32 %v934, %v1116
      %v1137 = vadd.f32 %v935, %v1119
      %v1138 = vld [vmem:[%s346 + $0x1] sm:$0xff]
      %v1139 = vld [vmem:[%s346 + $0x11] sm:$0xff]
      %v1140 = vld [vmem:[%s346 + $0x21] sm:$0xff]
      %v1141 = vld [vmem:[%s346 + $0x31] sm:$0xff]
      %v1142 = vld [vmem:[%s346 + $0x41] sm:$0xff]
      %v1143 = vld [vmem:[%s346 + $0x51] sm:$0xff]
      %v1144 = vld [vmem:[%s346 + $0x61] sm:$0xff]
      %v1145 = vld [vmem:[%s346 + $0x71] sm:$0xff]
      %v1146 = vld [vmem:[%s346 + $0xa1] sm:$0xff]
      %v1147 = vld [vmem:[%s346 + $0xb1] sm:$0xff]
      %v1148 = vld [vmem:[%s346 + $0xc1] sm:$0xff]
      %v1149 = vld [vmem:[%s346 + $0xd1] sm:$0xff]
      %v1150 = vld [vmem:[%s346 + $0xe1] sm:$0xff]
      %v1151 = vld [vmem:[%s346 + $0xf1] sm:$0xff]
      %v1152 = vld [vmem:[%s346 + $0x101] sm:$0xff]
      %v1153 = vld [vmem:[%s346 + $0x111] sm:$0xff]
      %v1154 = vpack.c.bf16 %v1139, %v1138
      %v1155 = vpack.c.bf16 %v1141, %v1140
      %v1156 = vpack.c.bf16 %v1143, %v1142
      %v1157 = vpack.c.bf16 %v1145, %v1144
      %v1158 = vpack.c.bf16 %v1147, %v1146
      %v1159 = vpack.c.bf16 %v1149, %v1148
      %v1160 = vpack.c.bf16 %v1151, %v1150
      %v1161 = vpack.c.bf16 %v1153, %v1152
      %s1162 = scalar_lea.vmem %s1, 256
      %v1163 = vld [vmem:[%s1162] sm:$0xf]
      %v1164 = vld [vmem:[%s1162 + $0x4] sm:$0xf]
      %v1165 = vld [vmem:[%s1162 + $0x8] sm:$0xf]
      %v1166 = vld [vmem:[%s1162 + $0xc] sm:$0xf]
      %v1167 = vld [vmem:[%s1162 + $0x10] sm:$0xf]
      %v1168 = vld [vmem:[%s1162 + $0x14] sm:$0xf]
      %v1169 = vld [vmem:[%s1162 + $0x18] sm:$0xf]
      %v1170 = vld [vmem:[%s1162 + $0x1c] sm:$0xf]
      %v1171 = vld [vmem:[%s1162 + $0x20] sm:$0xf]
      %v1172 = vld [vmem:[%s1162 + $0x24] sm:$0xf]
      %v1173 = vld [vmem:[%s1162 + $0x28] sm:$0xf]
      %v1174 = vld [vmem:[%s1162 + $0x2c] sm:$0xf]
      %v1175 = vld [vmem:[%s1162 + $0x30] sm:$0xf]
      %v1176 = vld [vmem:[%s1162 + $0x34] sm:$0xf]
      %v1177 = vld [vmem:[%s1162 + $0x38] sm:$0xf]
      %v1178 = vld [vmem:[%s1162 + $0x3c] sm:$0xf]
      %v1195 = vunpack.c.l.b16 %v1163
      %v1196 = vunpack.c.l.b16 %v1164
      %v1197 = vunpack.c.l.b16 %v1165
      %v1198 = vunpack.c.l.b16 %v1166
      %v1199 = vunpack.c.l.b16 %v1167
      %v1200 = vunpack.c.l.b16 %v1168
      %v1201 = vunpack.c.l.b16 %v1169
      %v1202 = vunpack.c.l.b16 %v1170
      %v1203 = vunpack.c.l.b16 %v1171
      %v1204 = vunpack.c.l.b16 %v1172
      %v1205 = vunpack.c.l.b16 %v1173
      %v1206 = vunpack.c.l.b16 %v1174
      %v1207 = vunpack.c.l.b16 %v1175
      %v1208 = vunpack.c.l.b16 %v1176
      %v1209 = vunpack.c.l.b16 %v1177
      %v1210 = vunpack.c.l.b16 %v1178
      %v1211 = vpack.c.b16 %v1196, %v1195
      %v1212 = vpack.c.b16 %v1198, %v1197
      %v1213 = vpack.c.b16 %v1200, %v1199
      %v1214 = vpack.c.b16 %v1202, %v1201
      %v1215 = vpack.c.b16 %v1204, %v1203
      %v1216 = vpack.c.b16 %v1206, %v1205
      %v1217 = vpack.c.b16 %v1208, %v1207
      %v1218 = vpack.c.b16 %v1210, %v1209
      %1227 = vmatprep.subr.bf16.mxu0 0
      %1228 = vmatpush1.bf16.msra.mxu0 %v1218
      %1229 = vmatprep.subr.bf16.mxu0 0
      %1230 = vmatpush1.bf16.msra.mxu0 %v1217
      %1231 = vmatprep.subr.bf16.mxu0 0
      %1232 = vmatpush1.bf16.msra.mxu0 %v1216
      %1233 = vmatprep.subr.bf16.mxu0 0
      %1234 = vmatpush1.bf16.msra.mxu0 %v1215
      %1235 = vmatprep.subr.bf16.mxu0 0
      %1236 = vmatpush1.bf16.msra.mxu0 %v1214
      %1237 = vmatprep.subr.bf16.mxu0 0
      %1238 = vmatpush1.bf16.msra.mxu0 %v1213
      %1239 = vmatprep.subr.bf16.mxu0 0
      %1240 = vmatpush1.bf16.msra.mxu0 %v1212
      %1241 = vmatprep.subr.bf16.mxu0 0
      %1242 = vmatpush1.bf16.msra.mxu0 %v1211
      %1243 = vmatprep.subr.bf16.mxu0 0
      %1244 = vmatpush2.bf16.msra.mxu0 0
      %1245 = vmatprep.subr.bf16.mxu0 0
      %1246 = vmatpush2.bf16.msra.mxu0 0
      %1247 = vmatprep.subr.bf16.mxu0 0
      %1248 = vmatpush2.bf16.msra.mxu0 0
      %1249 = vmatprep.subr.bf16.mxu0 0
      %1250 = vmatpush2.bf16.msra.mxu0 0
      %1251 = vmatprep.subr.bf16.mxu0 0
      %1252 = vmatpush2.bf16.msra.mxu0 0
      %1253 = vmatprep.subr.bf16.mxu0 0
      %1254 = vmatpush2.bf16.msra.mxu0 0
      %1255 = vmatprep.subr.bf16.mxu0 0
      %1256 = vmatpush2.bf16.msra.mxu0 0
      %1257 = vmatprep.subr.bf16.mxu0 0
      %1258 = vmatpush2.bf16.msra.mxu0 0
      %1259 = vmatprep.mubr.bf16.mxu0 0
      %1260 = vmatmul.mubr.bf16.gmra.mxu0 %v1154
      %v1261 = vpop.f32.mrf.mxu0
      %v1262 = vadd.f32 0.0, %v1261
      %v1263 = vpop.f32.mrf.mxu0
      %v1264 = vpop.f32.mrf.mxu0
      %v1265 = vadd.f32 0.0, %v1264
      %v1266 = vpop.f32.mrf.mxu0
      %1267 = vmatprep.mubr.bf16.mxu0 0
      %1268 = vmatmul.mubr.bf16.gmra.mxu0 %v1155
      %v1269 = vpop.f32.mrf.mxu0
      %v1270 = vadd.f32 0.0, %v1269
      %v1271 = vpop.f32.mrf.mxu0
      %v1272 = vpop.f32.mrf.mxu0
      %v1273 = vadd.f32 0.0, %v1272
      %v1274 = vpop.f32.mrf.mxu0
      %1275 = vmatprep.mubr.bf16.mxu0 0
      %1276 = vmatmul.mubr.bf16.gmra.mxu0 %v1156
      %v1277 = vpop.f32.mrf.mxu0
      %v1278 = vadd.f32 0.0, %v1277
      %v1279 = vpop.f32.mrf.mxu0
      %v1280 = vpop.f32.mrf.mxu0
      %v1281 = vadd.f32 0.0, %v1280
      %v1282 = vpop.f32.mrf.mxu0
      %1283 = vmatprep.mubr.bf16.mxu0 0
      %1284 = vmatmul.mubr.bf16.gmra.mxu0 %v1157
      %v1285 = vpop.f32.mrf.mxu0
      %v1286 = vadd.f32 0.0, %v1285
      %v1287 = vpop.f32.mrf.mxu0
      %v1288 = vpop.f32.mrf.mxu0
      %v1289 = vadd.f32 0.0, %v1288
      %v1290 = vpop.f32.mrf.mxu0
      %1291 = vmatprep.mubr.bf16.mxu0 0
      %1292 = vmatmul.mubr.bf16.gmra.mxu0 %v1158
      %v1293 = vpop.f32.mrf.mxu0
      %v1294 = vadd.f32 0.0, %v1293
      %v1295 = vpop.f32.mrf.mxu0
      %v1296 = vpop.f32.mrf.mxu0
      %v1297 = vadd.f32 0.0, %v1296
      %v1298 = vpop.f32.mrf.mxu0
      %1299 = vmatprep.mubr.bf16.mxu0 0
      %1300 = vmatmul.mubr.bf16.gmra.mxu0 %v1159
      %v1301 = vpop.f32.mrf.mxu0
      %v1302 = vadd.f32 0.0, %v1301
      %v1303 = vpop.f32.mrf.mxu0
      %v1304 = vpop.f32.mrf.mxu0
      %v1305 = vadd.f32 0.0, %v1304
      %v1306 = vpop.f32.mrf.mxu0
      %1307 = vmatprep.mubr.bf16.mxu0 0
      %1308 = vmatmul.mubr.bf16.gmra.mxu0 %v1160
      %v1309 = vpop.f32.mrf.mxu0
      %v1310 = vadd.f32 0.0, %v1309
      %v1311 = vpop.f32.mrf.mxu0
      %v1312 = vpop.f32.mrf.mxu0
      %v1313 = vadd.f32 0.0, %v1312
      %v1314 = vpop.f32.mrf.mxu0
      %1315 = vmatprep.mubr.bf16.mxu0 0
      %1316 = vmatmul.mubr.bf16.gmra.mxu0 %v1161
      %v1317 = vpop.f32.mrf.mxu0
      %v1318 = vadd.f32 0.0, %v1317
      %v1319 = vpop.f32.mrf.mxu0
      %v1320 = vpop.f32.mrf.mxu0
      %v1321 = vadd.f32 0.0, %v1320
      %v1322 = vpop.f32.mrf.mxu0
      %1323 = vdwg.mxu0
      %v1324 = vadd.f32 %v1122, %v1262
      %v1325 = vadd.f32 %v1123, %v1265
      %v1326 = vadd.f32 %v1124, %v1270
      %v1327 = vadd.f32 %v1125, %v1273
      %v1328 = vadd.f32 %v1126, %v1278
      %v1329 = vadd.f32 %v1127, %v1281
      %v1330 = vadd.f32 %v1128, %v1286
      %v1331 = vadd.f32 %v1129, %v1289
      %v1332 = vadd.f32 %v1130, %v1294
      %v1333 = vadd.f32 %v1131, %v1297
      %v1334 = vadd.f32 %v1132, %v1302
      %v1335 = vadd.f32 %v1133, %v1305
      %v1336 = vadd.f32 %v1134, %v1310
      %v1337 = vadd.f32 %v1135, %v1313
      %v1338 = vadd.f32 %v1136, %v1318
      %v1339 = vadd.f32 %v1137, %v1321
      %v1340 = vld [vmem:[%s346 + $0x2] sm:$0xff]
      %v1341 = vld [vmem:[%s346 + $0x12] sm:$0xff]
      %v1342 = vld [vmem:[%s346 + $0x22] sm:$0xff]
      %v1343 = vld [vmem:[%s346 + $0x32] sm:$0xff]
      %v1344 = vld [vmem:[%s346 + $0x42] sm:$0xff]
      %v1345 = vld [vmem:[%s346 + $0x52] sm:$0xff]
      %v1346 = vld [vmem:[%s346 + $0x62] sm:$0xff]
      %v1347 = vld [vmem:[%s346 + $0x72] sm:$0xff]
      %v1348 = vld [vmem:[%s346 + $0xa2] sm:$0xff]
      %v1349 = vld [vmem:[%s346 + $0xb2] sm:$0xff]
      %v1350 = vld [vmem:[%s346 + $0xc2] sm:$0xff]
      %v1351 = vld [vmem:[%s346 + $0xd2] sm:$0xff]
      %v1352 = vld [vmem:[%s346 + $0xe2] sm:$0xff]
      %v1353 = vld [vmem:[%s346 + $0xf2] sm:$0xff]
      %v1354 = vld [vmem:[%s346 + $0x102] sm:$0xff]
      %v1355 = vld [vmem:[%s346 + $0x112] sm:$0xff]
      %v1356 = vpack.c.bf16 %v1341, %v1340
      %v1357 = vpack.c.bf16 %v1343, %v1342
      %v1358 = vpack.c.bf16 %v1345, %v1344
      %v1359 = vpack.c.bf16 %v1347, %v1346
      %v1360 = vpack.c.bf16 %v1349, %v1348
      %v1361 = vpack.c.bf16 %v1351, %v1350
      %v1362 = vpack.c.bf16 %v1353, %v1352
      %v1363 = vpack.c.bf16 %v1355, %v1354
      %s1364 = scalar_lea.vmem %s1, 320
      %v1365 = vld [vmem:[%s1364] sm:$0xf]
      %v1366 = vld [vmem:[%s1364 + $0x4] sm:$0xf]
      %v1367 = vld [vmem:[%s1364 + $0x8] sm:$0xf]
      %v1368 = vld [vmem:[%s1364 + $0xc] sm:$0xf]
      %v1369 = vld [vmem:[%s1364 + $0x10] sm:$0xf]
      %v1370 = vld [vmem:[%s1364 + $0x14] sm:$0xf]
      %v1371 = vld [vmem:[%s1364 + $0x18] sm:$0xf]
      %v1372 = vld [vmem:[%s1364 + $0x1c] sm:$0xf]
      %v1373 = vld [vmem:[%s1364 + $0x20] sm:$0xf]
      %v1374 = vld [vmem:[%s1364 + $0x24] sm:$0xf]
      %v1375 = vld [vmem:[%s1364 + $0x28] sm:$0xf]
      %v1376 = vld [vmem:[%s1364 + $0x2c] sm:$0xf]
      %v1377 = vld [vmem:[%s1364 + $0x30] sm:$0xf]
      %v1378 = vld [vmem:[%s1364 + $0x34] sm:$0xf]
      %v1379 = vld [vmem:[%s1364 + $0x38] sm:$0xf]
      %v1380 = vld [vmem:[%s1364 + $0x3c] sm:$0xf]
      %v1397 = vunpack.c.l.b16 %v1365
      %v1398 = vunpack.c.l.b16 %v1366
      %v1399 = vunpack.c.l.b16 %v1367
      %v1400 = vunpack.c.l.b16 %v1368
      %v1401 = vunpack.c.l.b16 %v1369
      %v1402 = vunpack.c.l.b16 %v1370
      %v1403 = vunpack.c.l.b16 %v1371
      %v1404 = vunpack.c.l.b16 %v1372
      %v1405 = vunpack.c.l.b16 %v1373
      %v1406 = vunpack.c.l.b16 %v1374
      %v1407 = vunpack.c.l.b16 %v1375
      %v1408 = vunpack.c.l.b16 %v1376
      %v1409 = vunpack.c.l.b16 %v1377
      %v1410 = vunpack.c.l.b16 %v1378
      %v1411 = vunpack.c.l.b16 %v1379
      %v1412 = vunpack.c.l.b16 %v1380
      %v1413 = vpack.c.b16 %v1398, %v1397
      %v1414 = vpack.c.b16 %v1400, %v1399
      %v1415 = vpack.c.b16 %v1402, %v1401
      %v1416 = vpack.c.b16 %v1404, %v1403
      %v1417 = vpack.c.b16 %v1406, %v1405
      %v1418 = vpack.c.b16 %v1408, %v1407
      %v1419 = vpack.c.b16 %v1410, %v1409
      %v1420 = vpack.c.b16 %v1412, %v1411
      %1429 = vmatprep.subr.bf16.mxu0 0
      %1430 = vmatpush1.bf16.msra.mxu0 %v1420
      %1431 = vmatprep.subr.bf16.mxu0 0
      %1432 = vmatpush1.bf16.msra.mxu0 %v1419
      %1433 = vmatprep.subr.bf16.mxu0 0
      %1434 = vmatpush1.bf16.msra.mxu0 %v1418
      %1435 = vmatprep.subr.bf16.mxu0 0
      %1436 = vmatpush1.bf16.msra.mxu0 %v1417
      %1437 = vmatprep.subr.bf16.mxu0 0
      %1438 = vmatpush1.bf16.msra.mxu0 %v1416
      %1439 = vmatprep.subr.bf16.mxu0 0
      %1440 = vmatpush1.bf16.msra.mxu0 %v1415
      %1441 = vmatprep.subr.bf16.mxu0 0
      %1442 = vmatpush1.bf16.msra.mxu0 %v1414
      %1443 = vmatprep.subr.bf16.mxu0 0
      %1444 = vmatpush1.bf16.msra.mxu0 %v1413
      %1445 = vmatprep.subr.bf16.mxu0 0
      %1446 = vmatpush2.bf16.msra.mxu0 0
      %1447 = vmatprep.subr.bf16.mxu0 0
      %1448 = vmatpush2.bf16.msra.mxu0 0
      %1449 = vmatprep.subr.bf16.mxu0 0
      %1450 = vmatpush2.bf16.msra.mxu0 0
      %1451 = vmatprep.subr.bf16.mxu0 0
      %1452 = vmatpush2.bf16.msra.mxu0 0
      %1453 = vmatprep.subr.bf16.mxu0 0
      %1454 = vmatpush2.bf16.msra.mxu0 0
      %1455 = vmatprep.subr.bf16.mxu0 0
      %1456 = vmatpush2.bf16.msra.mxu0 0
      %1457 = vmatprep.subr.bf16.mxu0 0
      %1458 = vmatpush2.bf16.msra.mxu0 0
      %1459 = vmatprep.subr.bf16.mxu0 0
      %1460 = vmatpush2.bf16.msra.mxu0 0
      %1461 = vmatprep.mubr.bf16.mxu0 0
      %1462 = vmatmul.mubr.bf16.gmra.mxu0 %v1356
      %v1463 = vpop.f32.mrf.mxu0
      %v1464 = vadd.f32 0.0, %v1463
      %v1465 = vpop.f32.mrf.mxu0
      %v1466 = vpop.f32.mrf.mxu0
      %v1467 = vadd.f32 0.0, %v1466
      %v1468 = vpop.f32.mrf.mxu0
      %1469 = vmatprep.mubr.bf16.mxu0 0
      %1470 = vmatmul.mubr.bf16.gmra.mxu0 %v1357
      %v1471 = vpop.f32.mrf.mxu0
      %v1472 = vadd.f32 0.0, %v1471
      %v1473 = vpop.f32.mrf.mxu0
      %v1474 = vpop.f32.mrf.mxu0
      %v1475 = vadd.f32 0.0, %v1474
      %v1476 = vpop.f32.mrf.mxu0
      %1477 = vmatprep.mubr.bf16.mxu0 0
      %1478 = vmatmul.mubr.bf16.gmra.mxu0 %v1358
      %v1479 = vpop.f32.mrf.mxu0
      %v1480 = vadd.f32 0.0, %v1479
      %v1481 = vpop.f32.mrf.mxu0
      %v1482 = vpop.f32.mrf.mxu0
      %v1483 = vadd.f32 0.0, %v1482
      %v1484 = vpop.f32.mrf.mxu0
      %1485 = vmatprep.mubr.bf16.mxu0 0
      %1486 = vmatmul.mubr.bf16.gmra.mxu0 %v1359
      %v1487 = vpop.f32.mrf.mxu0
      %v1488 = vadd.f32 0.0, %v1487
      %v1489 = vpop.f32.mrf.mxu0
      %v1490 = vpop.f32.mrf.mxu0
      %v1491 = vadd.f32 0.0, %v1490
      %v1492 = vpop.f32.mrf.mxu0
      %1493 = vmatprep.mubr.bf16.mxu0 0
      %1494 = vmatmul.mubr.bf16.gmra.mxu0 %v1360
      %v1495 = vpop.f32.mrf.mxu0
      %v1496 = vadd.f32 0.0, %v1495
      %v1497 = vpop.f32.mrf.mxu0
      %v1498 = vpop.f32.mrf.mxu0
      %v1499 = vadd.f32 0.0, %v1498
      %v1500 = vpop.f32.mrf.mxu0
      %1501 = vmatprep.mubr.bf16.mxu0 0
      %1502 = vmatmul.mubr.bf16.gmra.mxu0 %v1361
      %v1503 = vpop.f32.mrf.mxu0
      %v1504 = vadd.f32 0.0, %v1503
      %v1505 = vpop.f32.mrf.mxu0
      %v1506 = vpop.f32.mrf.mxu0
      %v1507 = vadd.f32 0.0, %v1506
      %v1508 = vpop.f32.mrf.mxu0
      %1509 = vmatprep.mubr.bf16.mxu0 0
      %1510 = vmatmul.mubr.bf16.gmra.mxu0 %v1362
      %v1511 = vpop.f32.mrf.mxu0
      %v1512 = vadd.f32 0.0, %v1511
      %v1513 = vpop.f32.mrf.mxu0
      %v1514 = vpop.f32.mrf.mxu0
      %v1515 = vadd.f32 0.0, %v1514
      %v1516 = vpop.f32.mrf.mxu0
      %1517 = vmatprep.mubr.bf16.mxu0 0
      %1518 = vmatmul.mubr.bf16.gmra.mxu0 %v1363
      %v1519 = vpop.f32.mrf.mxu0
      %v1520 = vadd.f32 0.0, %v1519
      %v1521 = vpop.f32.mrf.mxu0
      %v1522 = vpop.f32.mrf.mxu0
      %v1523 = vadd.f32 0.0, %v1522
      %v1524 = vpop.f32.mrf.mxu0
      %1525 = vdwg.mxu0
      %v1526 = vadd.f32 %v1324, %v1464
      %v1527 = vadd.f32 %v1325, %v1467
      %v1528 = vadd.f32 %v1326, %v1472
      %v1529 = vadd.f32 %v1327, %v1475
      %v1530 = vadd.f32 %v1328, %v1480
      %v1531 = vadd.f32 %v1329, %v1483
      %v1532 = vadd.f32 %v1330, %v1488
      %v1533 = vadd.f32 %v1331, %v1491
      %v1534 = vadd.f32 %v1332, %v1496
      %v1535 = vadd.f32 %v1333, %v1499
      %v1536 = vadd.f32 %v1334, %v1504
      %v1537 = vadd.f32 %v1335, %v1507
      %v1538 = vadd.f32 %v1336, %v1512
      %v1539 = vadd.f32 %v1337, %v1515
      %v1540 = vadd.f32 %v1338, %v1520
      %v1541 = vadd.f32 %v1339, %v1523
      %s1542 = scalar_lea.vmem [#allocation2], 32
      %v1543 = vld [vmem:[%s1542] sm:$0xff]
      %v1544 = vld [vmem:[%s1542 + $0x10] sm:$0xff]
      %v1545 = vld [vmem:[%s1542 + $0x20] sm:$0xff]
      %v1546 = vld [vmem:[%s1542 + $0x30] sm:$0xff]
      %v1547 = vld [vmem:[%s1542 + $0x40] sm:$0xff]
      %v1548 = vld [vmem:[%s1542 + $0x50] sm:$0xff]
      %v1549 = vld [vmem:[%s1542 + $0x60] sm:$0xff]
      %v1550 = vld [vmem:[%s1542 + $0x70] sm:$0xff]
      %v1551 = vld [vmem:[%s1542 + $0xa0] sm:$0xff]
      %v1552 = vld [vmem:[%s1542 + $0xb0] sm:$0xff]
      %v1553 = vld [vmem:[%s1542 + $0xc0] sm:$0xff]
      %v1554 = vld [vmem:[%s1542 + $0xd0] sm:$0xff]
      %v1555 = vld [vmem:[%s1542 + $0xe0] sm:$0xff]
      %v1556 = vld [vmem:[%s1542 + $0xf0] sm:$0xff]
      %v1557 = vld [vmem:[%s1542 + $0x100] sm:$0xff]
      %v1558 = vld [vmem:[%s1542 + $0x110] sm:$0xff]
      %v1559 = vpack.c.bf16 %v1544, %v1543
      %v1560 = vpack.c.bf16 %v1546, %v1545
      %v1561 = vpack.c.bf16 %v1548, %v1547
      %v1562 = vpack.c.bf16 %v1550, %v1549
      %v1563 = vpack.c.bf16 %v1552, %v1551
      %v1564 = vpack.c.bf16 %v1554, %v1553
      %v1565 = vpack.c.bf16 %v1556, %v1555
      %v1566 = vpack.c.bf16 %v1558, %v1557
      %s1567 = scalar_lea.vmem %s1, 384
      %v1568 = vld [vmem:[%s1567] sm:$0xf]
      %v1569 = vld [vmem:[%s1567 + $0x4] sm:$0xf]
      %v1570 = vld [vmem:[%s1567 + $0x8] sm:$0xf]
      %v1571 = vld [vmem:[%s1567 + $0xc] sm:$0xf]
      %v1572 = vld [vmem:[%s1567 + $0x10] sm:$0xf]
      %v1573 = vld [vmem:[%s1567 + $0x14] sm:$0xf]
      %v1574 = vld [vmem:[%s1567 + $0x18] sm:$0xf]
      %v1575 = vld [vmem:[%s1567 + $0x1c] sm:$0xf]
      %v1576 = vld [vmem:[%s1567 + $0x20] sm:$0xf]
      %v1577 = vld [vmem:[%s1567 + $0x24] sm:$0xf]
      %v1578 = vld [vmem:[%s1567 + $0x28] sm:$0xf]
      %v1579 = vld [vmem:[%s1567 + $0x2c] sm:$0xf]
      %v1580 = vld [vmem:[%s1567 + $0x30] sm:$0xf]
      %v1581 = vld [vmem:[%s1567 + $0x34] sm:$0xf]
      %v1582 = vld [vmem:[%s1567 + $0x38] sm:$0xf]
      %v1583 = vld [vmem:[%s1567 + $0x3c] sm:$0xf]
      %v1600 = vunpack.c.l.b16 %v1568
      %v1601 = vunpack.c.l.b16 %v1569
      %v1602 = vunpack.c.l.b16 %v1570
      %v1603 = vunpack.c.l.b16 %v1571
      %v1604 = vunpack.c.l.b16 %v1572
      %v1605 = vunpack.c.l.b16 %v1573
      %v1606 = vunpack.c.l.b16 %v1574
      %v1607 = vunpack.c.l.b16 %v1575
      %v1608 = vunpack.c.l.b16 %v1576
      %v1609 = vunpack.c.l.b16 %v1577
      %v1610 = vunpack.c.l.b16 %v1578
      %v1611 = vunpack.c.l.b16 %v1579
      %v1612 = vunpack.c.l.b16 %v1580
      %v1613 = vunpack.c.l.b16 %v1581
      %v1614 = vunpack.c.l.b16 %v1582
      %v1615 = vunpack.c.l.b16 %v1583
      %v1616 = vpack.c.b16 %v1601, %v1600
      %v1617 = vpack.c.b16 %v1603, %v1602
      %v1618 = vpack.c.b16 %v1605, %v1604
      %v1619 = vpack.c.b16 %v1607, %v1606
      %v1620 = vpack.c.b16 %v1609, %v1608
      %v1621 = vpack.c.b16 %v1611, %v1610
      %v1622 = vpack.c.b16 %v1613, %v1612
      %v1623 = vpack.c.b16 %v1615, %v1614
      %1632 = vmatprep.subr.bf16.mxu0 0
      %1633 = vmatpush1.bf16.msra.mxu0 %v1623
      %1634 = vmatprep.subr.bf16.mxu0 0
      %1635 = vmatpush1.bf16.msra.mxu0 %v1622
      %1636 = vmatprep.subr.bf16.mxu0 0
      %1637 = vmatpush1.bf16.msra.mxu0 %v1621
      %1638 = vmatprep.subr.bf16.mxu0 0
      %1639 = vmatpush1.bf16.msra.mxu0 %v1620
      %1640 = vmatprep.subr.bf16.mxu0 0
      %1641 = vmatpush1.bf16.msra.mxu0 %v1619
      %1642 = vmatprep.subr.bf16.mxu0 0
      %1643 = vmatpush1.bf16.msra.mxu0 %v1618
      %1644 = vmatprep.subr.bf16.mxu0 0
      %1645 = vmatpush1.bf16.msra.mxu0 %v1617
      %1646 = vmatprep.subr.bf16.mxu0 0
      %1647 = vmatpush1.bf16.msra.mxu0 %v1616
      %1648 = vmatprep.subr.bf16.mxu0 0
      %1649 = vmatpush2.bf16.msra.mxu0 0
      %1650 = vmatprep.subr.bf16.mxu0 0
      %1651 = vmatpush2.bf16.msra.mxu0 0
      %1652 = vmatprep.subr.bf16.mxu0 0
      %1653 = vmatpush2.bf16.msra.mxu0 0
      %1654 = vmatprep.subr.bf16.mxu0 0
      %1655 = vmatpush2.bf16.msra.mxu0 0
      %1656 = vmatprep.subr.bf16.mxu0 0
      %1657 = vmatpush2.bf16.msra.mxu0 0
      %1658 = vmatprep.subr.bf16.mxu0 0
      %1659 = vmatpush2.bf16.msra.mxu0 0
      %1660 = vmatprep.subr.bf16.mxu0 0
      %1661 = vmatpush2.bf16.msra.mxu0 0
      %1662 = vmatprep.subr.bf16.mxu0 0
      %1663 = vmatpush2.bf16.msra.mxu0 0
      %1664 = vmatprep.mubr.bf16.mxu0 0
      %1665 = vmatmul.mubr.bf16.gmra.mxu0 %v1559
      %v1666 = vpop.f32.mrf.mxu0
      %v1667 = vadd.f32 0.0, %v1666
      %v1668 = vpop.f32.mrf.mxu0
      %v1669 = vpop.f32.mrf.mxu0
      %v1670 = vadd.f32 0.0, %v1669
      %v1671 = vpop.f32.mrf.mxu0
      %1672 = vmatprep.mubr.bf16.mxu0 0
      %1673 = vmatmul.mubr.bf16.gmra.mxu0 %v1560
      %v1674 = vpop.f32.mrf.mxu0
      %v1675 = vadd.f32 0.0, %v1674
      %v1676 = vpop.f32.mrf.mxu0
      %v1677 = vpop.f32.mrf.mxu0
      %v1678 = vadd.f32 0.0, %v1677
      %v1679 = vpop.f32.mrf.mxu0
      %1680 = vmatprep.mubr.bf16.mxu0 0
      %1681 = vmatmul.mubr.bf16.gmra.mxu0 %v1561
      %v1682 = vpop.f32.mrf.mxu0
      %v1683 = vadd.f32 0.0, %v1682
      %v1684 = vpop.f32.mrf.mxu0
      %v1685 = vpop.f32.mrf.mxu0
      %v1686 = vadd.f32 0.0, %v1685
      %v1687 = vpop.f32.mrf.mxu0
      %1688 = vmatprep.mubr.bf16.mxu0 0
      %1689 = vmatmul.mubr.bf16.gmra.mxu0 %v1562
      %v1690 = vpop.f32.mrf.mxu0
      %v1691 = vadd.f32 0.0, %v1690
      %v1692 = vpop.f32.mrf.mxu0
      %v1693 = vpop.f32.mrf.mxu0
      %v1694 = vadd.f32 0.0, %v1693
      %v1695 = vpop.f32.mrf.mxu0
      %1696 = vmatprep.mubr.bf16.mxu0 0
      %1697 = vmatmul.mubr.bf16.gmra.mxu0 %v1563
      %v1698 = vpop.f32.mrf.mxu0
      %v1699 = vadd.f32 0.0, %v1698
      %v1700 = vpop.f32.mrf.mxu0
      %v1701 = vpop.f32.mrf.mxu0
      %v1702 = vadd.f32 0.0, %v1701
      %v1703 = vpop.f32.mrf.mxu0
      %1704 = vmatprep.mubr.bf16.mxu0 0
      %1705 = vmatmul.mubr.bf16.gmra.mxu0 %v1564
      %v1706 = vpop.f32.mrf.mxu0
      %v1707 = vadd.f32 0.0, %v1706
      %v1708 = vpop.f32.mrf.mxu0
      %v1709 = vpop.f32.mrf.mxu0
      %v1710 = vadd.f32 0.0, %v1709
      %v1711 = vpop.f32.mrf.mxu0
      %1712 = vmatprep.mubr.bf16.mxu0 0
      %1713 = vmatmul.mubr.bf16.gmra.mxu0 %v1565
      %v1714 = vpop.f32.mrf.mxu0
      %v1715 = vadd.f32 0.0, %v1714
      %v1716 = vpop.f32.mrf.mxu0
      %v1717 = vpop.f32.mrf.mxu0
      %v1718 = vadd.f32 0.0, %v1717
      %v1719 = vpop.f32.mrf.mxu0
      %1720 = vmatprep.mubr.bf16.mxu0 0
      %1721 = vmatmul.mubr.bf16.gmra.mxu0 %v1566
      %v1722 = vpop.f32.mrf.mxu0
      %v1723 = vadd.f32 0.0, %v1722
      %v1724 = vpop.f32.mrf.mxu0
      %v1725 = vpop.f32.mrf.mxu0
      %v1726 = vadd.f32 0.0, %v1725
      %v1727 = vpop.f32.mrf.mxu0
      %1728 = vdwg.mxu0
      %v1729 = vadd.f32 %v1526, %v1667
      %v1730 = vadd.f32 %v1527, %v1670
      %v1731 = vadd.f32 %v1528, %v1675
      %v1732 = vadd.f32 %v1529, %v1678
      %v1733 = vadd.f32 %v1530, %v1683
      %v1734 = vadd.f32 %v1531, %v1686
      %v1735 = vadd.f32 %v1532, %v1691
      %v1736 = vadd.f32 %v1533, %v1694
      %v1737 = vadd.f32 %v1534, %v1699
      %v1738 = vadd.f32 %v1535, %v1702
      %v1739 = vadd.f32 %v1536, %v1707
      %v1740 = vadd.f32 %v1537, %v1710
      %v1741 = vadd.f32 %v1538, %v1715
      %v1742 = vadd.f32 %v1539, %v1718
      %v1743 = vadd.f32 %v1540, %v1723
      %v1744 = vadd.f32 %v1541, %v1726
      %v1745 = vld [vmem:[%s1542 + $0x1] sm:$0xff]
      %v1746 = vld [vmem:[%s1542 + $0x11] sm:$0xff]
      %v1747 = vld [vmem:[%s1542 + $0x21] sm:$0xff]
      %v1748 = vld [vmem:[%s1542 + $0x31] sm:$0xff]
      %v1749 = vld [vmem:[%s1542 + $0x41] sm:$0xff]
      %v1750 = vld [vmem:[%s1542 + $0x51] sm:$0xff]
      %v1751 = vld [vmem:[%s1542 + $0x61] sm:$0xff]
      %v1752 = vld [vmem:[%s1542 + $0x71] sm:$0xff]
      %v1753 = vld [vmem:[%s1542 + $0xa1] sm:$0xff]
      %v1754 = vld [vmem:[%s1542 + $0xb1] sm:$0xff]
      %v1755 = vld [vmem:[%s1542 + $0xc1] sm:$0xff]
      %v1756 = vld [vmem:[%s1542 + $0xd1] sm:$0xff]
      %v1757 = vld [vmem:[%s1542 + $0xe1] sm:$0xff]
      %v1758 = vld [vmem:[%s1542 + $0xf1] sm:$0xff]
      %v1759 = vld [vmem:[%s1542 + $0x101] sm:$0xff]
      %v1760 = vld [vmem:[%s1542 + $0x111] sm:$0xff]
      %v1761 = vpack.c.bf16 %v1746, %v1745
      %v1762 = vpack.c.bf16 %v1748, %v1747
      %v1763 = vpack.c.bf16 %v1750, %v1749
      %v1764 = vpack.c.bf16 %v1752, %v1751
      %v1765 = vpack.c.bf16 %v1754, %v1753
      %v1766 = vpack.c.bf16 %v1756, %v1755
      %v1767 = vpack.c.bf16 %v1758, %v1757
      %v1768 = vpack.c.bf16 %v1760, %v1759
      %s1769 = scalar_lea.vmem %s1, 448
      %v1770 = vld [vmem:[%s1769] sm:$0xf]
      %v1771 = vld [vmem:[%s1769 + $0x4] sm:$0xf]
      %v1772 = vld [vmem:[%s1769 + $0x8] sm:$0xf]
      %v1773 = vld [vmem:[%s1769 + $0xc] sm:$0xf]
      %v1774 = vld [vmem:[%s1769 + $0x10] sm:$0xf]
      %v1775 = vld [vmem:[%s1769 + $0x14] sm:$0xf]
      %v1776 = vld [vmem:[%s1769 + $0x18] sm:$0xf]
      %v1777 = vld [vmem:[%s1769 + $0x1c] sm:$0xf]
      %v1778 = vld [vmem:[%s1769 + $0x20] sm:$0xf]
      %v1779 = vld [vmem:[%s1769 + $0x24] sm:$0xf]
      %v1780 = vld [vmem:[%s1769 + $0x28] sm:$0xf]
      %v1781 = vld [vmem:[%s1769 + $0x2c] sm:$0xf]
      %v1782 = vld [vmem:[%s1769 + $0x30] sm:$0xf]
      %v1783 = vld [vmem:[%s1769 + $0x34] sm:$0xf]
      %v1784 = vld [vmem:[%s1769 + $0x38] sm:$0xf]
      %v1785 = vld [vmem:[%s1769 + $0x3c] sm:$0xf]
      %v1802 = vunpack.c.l.b16 %v1770
      %v1803 = vunpack.c.l.b16 %v1771
      %v1804 = vunpack.c.l.b16 %v1772
      %v1805 = vunpack.c.l.b16 %v1773
      %v1806 = vunpack.c.l.b16 %v1774
      %v1807 = vunpack.c.l.b16 %v1775
      %v1808 = vunpack.c.l.b16 %v1776
      %v1809 = vunpack.c.l.b16 %v1777
      %v1810 = vunpack.c.l.b16 %v1778
      %v1811 = vunpack.c.l.b16 %v1779
      %v1812 = vunpack.c.l.b16 %v1780
      %v1813 = vunpack.c.l.b16 %v1781
      %v1814 = vunpack.c.l.b16 %v1782
      %v1815 = vunpack.c.l.b16 %v1783
      %v1816 = vunpack.c.l.b16 %v1784
      %v1817 = vunpack.c.l.b16 %v1785
      %v1818 = vpack.c.b16 %v1803, %v1802
      %v1819 = vpack.c.b16 %v1805, %v1804
      %v1820 = vpack.c.b16 %v1807, %v1806
      %v1821 = vpack.c.b16 %v1809, %v1808
      %v1822 = vpack.c.b16 %v1811, %v1810
      %v1823 = vpack.c.b16 %v1813, %v1812
      %v1824 = vpack.c.b16 %v1815, %v1814
      %v1825 = vpack.c.b16 %v1817, %v1816
      %1834 = vmatprep.subr.bf16.mxu0 0
      %1835 = vmatpush1.bf16.msra.mxu0 %v1825
      %1836 = vmatprep.subr.bf16.mxu0 0
      %1837 = vmatpush1.bf16.msra.mxu0 %v1824
      %1838 = vmatprep.subr.bf16.mxu0 0
      %1839 = vmatpush1.bf16.msra.mxu0 %v1823
      %1840 = vmatprep.subr.bf16.mxu0 0
      %1841 = vmatpush1.bf16.msra.mxu0 %v1822
      %1842 = vmatprep.subr.bf16.mxu0 0
      %1843 = vmatpush1.bf16.msra.mxu0 %v1821
      %1844 = vmatprep.subr.bf16.mxu0 0
      %1845 = vmatpush1.bf16.msra.mxu0 %v1820
      %1846 = vmatprep.subr.bf16.mxu0 0
      %1847 = vmatpush1.bf16.msra.mxu0 %v1819
      %1848 = vmatprep.subr.bf16.mxu0 0
      %1849 = vmatpush1.bf16.msra.mxu0 %v1818
      %1850 = vmatprep.subr.bf16.mxu0 0
      %1851 = vmatpush2.bf16.msra.mxu0 0
      %1852 = vmatprep.subr.bf16.mxu0 0
      %1853 = vmatpush2.bf16.msra.mxu0 0
      %1854 = vmatprep.subr.bf16.mxu0 0
      %1855 = vmatpush2.bf16.msra.mxu0 0
      %1856 = vmatprep.subr.bf16.mxu0 0
      %1857 = vmatpush2.bf16.msra.mxu0 0
      %1858 = vmatprep.subr.bf16.mxu0 0
      %1859 = vmatpush2.bf16.msra.mxu0 0
      %1860 = vmatprep.subr.bf16.mxu0 0
      %1861 = vmatpush2.bf16.msra.mxu0 0
      %1862 = vmatprep.subr.bf16.mxu0 0
      %1863 = vmatpush2.bf16.msra.mxu0 0
      %1864 = vmatprep.subr.bf16.mxu0 0
      %1865 = vmatpush2.bf16.msra.mxu0 0
      %1866 = vmatprep.mubr.bf16.mxu0 0
      %1867 = vmatmul.mubr.bf16.gmra.mxu0 %v1761
      %v1868 = vpop.f32.mrf.mxu0
      %v1869 = vadd.f32 0.0, %v1868
      %v1870 = vpop.f32.mrf.mxu0
      %v1871 = vpop.f32.mrf.mxu0
      %v1872 = vadd.f32 0.0, %v1871
      %v1873 = vpop.f32.mrf.mxu0
      %1874 = vmatprep.mubr.bf16.mxu0 0
      %1875 = vmatmul.mubr.bf16.gmra.mxu0 %v1762
      %v1876 = vpop.f32.mrf.mxu0
      %v1877 = vadd.f32 0.0, %v1876
      %v1878 = vpop.f32.mrf.mxu0
      %v1879 = vpop.f32.mrf.mxu0
      %v1880 = vadd.f32 0.0, %v1879
      %v1881 = vpop.f32.mrf.mxu0
      %1882 = vmatprep.mubr.bf16.mxu0 0
      %1883 = vmatmul.mubr.bf16.gmra.mxu0 %v1763
      %v1884 = vpop.f32.mrf.mxu0
      %v1885 = vadd.f32 0.0, %v1884
      %v1886 = vpop.f32.mrf.mxu0
      %v1887 = vpop.f32.mrf.mxu0
      %v1888 = vadd.f32 0.0, %v1887
      %v1889 = vpop.f32.mrf.mxu0
      %1890 = vmatprep.mubr.bf16.mxu0 0
      %1891 = vmatmul.mubr.bf16.gmra.mxu0 %v1764
      %v1892 = vpop.f32.mrf.mxu0
      %v1893 = vadd.f32 0.0, %v1892
      %v1894 = vpop.f32.mrf.mxu0
      %v1895 = vpop.f32.mrf.mxu0
      %v1896 = vadd.f32 0.0, %v1895
      %v1897 = vpop.f32.mrf.mxu0
      %1898 = vmatprep.mubr.bf16.mxu0 0
      %1899 = vmatmul.mubr.bf16.gmra.mxu0 %v1765
      %v1900 = vpop.f32.mrf.mxu0
      %v1901 = vadd.f32 0.0, %v1900
      %v1902 = vpop.f32.mrf.mxu0
      %v1903 = vpop.f32.mrf.mxu0
      %v1904 = vadd.f32 0.0, %v1903
      %v1905 = vpop.f32.mrf.mxu0
      %1906 = vmatprep.mubr.bf16.mxu0 0
      %1907 = vmatmul.mubr.bf16.gmra.mxu0 %v1766
      %v1908 = vpop.f32.mrf.mxu0
      %v1909 = vadd.f32 0.0, %v1908
      %v1910 = vpop.f32.mrf.mxu0
      %v1911 = vpop.f32.mrf.mxu0
      %v1912 = vadd.f32 0.0, %v1911
      %v1913 = vpop.f32.mrf.mxu0
      %1914 = vmatprep.mubr.bf16.mxu0 0
      %1915 = vmatmul.mubr.bf16.gmra.mxu0 %v1767
      %v1916 = vpop.f32.mrf.mxu0
      %v1917 = vadd.f32 0.0, %v1916
      %v1918 = vpop.f32.mrf.mxu0
      %v1919 = vpop.f32.mrf.mxu0
      %v1920 = vadd.f32 0.0, %v1919
      %v1921 = vpop.f32.mrf.mxu0
      %1922 = vmatprep.mubr.bf16.mxu0 0
      %1923 = vmatmul.mubr.bf16.gmra.mxu0 %v1768
      %v1924 = vpop.f32.mrf.mxu0
      %v1925 = vadd.f32 0.0, %v1924
      %v1926 = vpop.f32.mrf.mxu0
      %v1927 = vpop.f32.mrf.mxu0
      %v1928 = vadd.f32 0.0, %v1927
      %v1929 = vpop.f32.mrf.mxu0
      %1930 = vdwg.mxu0
      %v1931 = vadd.f32 %v1729, %v1869
      %v1932 = vadd.f32 %v1730, %v1872
      %v1933 = vadd.f32 %v1731, %v1877
      %v1934 = vadd.f32 %v1732, %v1880
      %v1935 = vadd.f32 %v1733, %v1885
      %v1936 = vadd.f32 %v1734, %v1888
      %v1937 = vadd.f32 %v1735, %v1893
      %v1938 = vadd.f32 %v1736, %v1896
      %v1939 = vadd.f32 %v1737, %v1901
      %v1940 = vadd.f32 %v1738, %v1904
      %v1941 = vadd.f32 %v1739, %v1909
      %v1942 = vadd.f32 %v1740, %v1912
      %v1943 = vadd.f32 %v1741, %v1917
      %v1944 = vadd.f32 %v1742, %v1920
      %v1945 = vadd.f32 %v1743, %v1925
      %v1946 = vadd.f32 %v1744, %v1928
      %v1947 = vld [vmem:[%s1542 + $0x2] sm:$0xff]
      %v1948 = vld [vmem:[%s1542 + $0x12] sm:$0xff]
      %v1949 = vld [vmem:[%s1542 + $0x22] sm:$0xff]
      %v1950 = vld [vmem:[%s1542 + $0x32] sm:$0xff]
      %v1951 = vld [vmem:[%s1542 + $0x42] sm:$0xff]
      %v1952 = vld [vmem:[%s1542 + $0x52] sm:$0xff]
      %v1953 = vld [vmem:[%s1542 + $0x62] sm:$0xff]
      %v1954 = vld [vmem:[%s1542 + $0x72] sm:$0xff]
      %v1955 = vld [vmem:[%s1542 + $0xa2] sm:$0xff]
      %v1956 = vld [vmem:[%s1542 + $0xb2] sm:$0xff]
      %v1957 = vld [vmem:[%s1542 + $0xc2] sm:$0xff]
      %v1958 = vld [vmem:[%s1542 + $0xd2] sm:$0xff]
      %v1959 = vld [vmem:[%s1542 + $0xe2] sm:$0xff]
      %v1960 = vld [vmem:[%s1542 + $0xf2] sm:$0xff]
      %v1961 = vld [vmem:[%s1542 + $0x102] sm:$0xff]
      %v1962 = vld [vmem:[%s1542 + $0x112] sm:$0xff]
      %v1963 = vpack.c.bf16 %v1948, %v1947
      %v1964 = vpack.c.bf16 %v1950, %v1949
      %v1965 = vpack.c.bf16 %v1952, %v1951
      %v1966 = vpack.c.bf16 %v1954, %v1953
      %v1967 = vpack.c.bf16 %v1956, %v1955
      %v1968 = vpack.c.bf16 %v1958, %v1957
      %v1969 = vpack.c.bf16 %v1960, %v1959
      %v1970 = vpack.c.bf16 %v1962, %v1961
      %s1971 = scalar_lea.vmem %s1, 512
      %v1972 = vld [vmem:[%s1971] sm:$0xf]
      %v1973 = vld [vmem:[%s1971 + $0x4] sm:$0xf]
      %v1974 = vld [vmem:[%s1971 + $0x8] sm:$0xf]
      %v1975 = vld [vmem:[%s1971 + $0xc] sm:$0xf]
      %v1976 = vld [vmem:[%s1971 + $0x10] sm:$0xf]
      %v1977 = vld [vmem:[%s1971 + $0x14] sm:$0xf]
      %v1978 = vld [vmem:[%s1971 + $0x18] sm:$0xf]
      %v1979 = vld [vmem:[%s1971 + $0x1c] sm:$0xf]
      %v1980 = vld [vmem:[%s1971 + $0x20] sm:$0xf]
      %v1981 = vld [vmem:[%s1971 + $0x24] sm:$0xf]
      %v1982 = vld [vmem:[%s1971 + $0x28] sm:$0xf]
      %v1983 = vld [vmem:[%s1971 + $0x2c] sm:$0xf]
      %v1984 = vld [vmem:[%s1971 + $0x30] sm:$0xf]
      %v1985 = vld [vmem:[%s1971 + $0x34] sm:$0xf]
      %v1986 = vld [vmem:[%s1971 + $0x38] sm:$0xf]
      %v1987 = vld [vmem:[%s1971 + $0x3c] sm:$0xf]
      %v2004 = vunpack.c.l.b16 %v1972
      %v2005 = vunpack.c.l.b16 %v1973
      %v2006 = vunpack.c.l.b16 %v1974
      %v2007 = vunpack.c.l.b16 %v1975
      %v2008 = vunpack.c.l.b16 %v1976
      %v2009 = vunpack.c.l.b16 %v1977
      %v2010 = vunpack.c.l.b16 %v1978
      %v2011 = vunpack.c.l.b16 %v1979
      %v2012 = vunpack.c.l.b16 %v1980
      %v2013 = vunpack.c.l.b16 %v1981
      %v2014 = vunpack.c.l.b16 %v1982
      %v2015 = vunpack.c.l.b16 %v1983
      %v2016 = vunpack.c.l.b16 %v1984
      %v2017 = vunpack.c.l.b16 %v1985
      %v2018 = vunpack.c.l.b16 %v1986
      %v2019 = vunpack.c.l.b16 %v1987
      %v2020 = vpack.c.b16 %v2005, %v2004
      %v2021 = vpack.c.b16 %v2007, %v2006
      %v2022 = vpack.c.b16 %v2009, %v2008
      %v2023 = vpack.c.b16 %v2011, %v2010
      %v2024 = vpack.c.b16 %v2013, %v2012
      %v2025 = vpack.c.b16 %v2015, %v2014
      %v2026 = vpack.c.b16 %v2017, %v2016
      %v2027 = vpack.c.b16 %v2019, %v2018
      %2036 = vmatprep.subr.bf16.mxu0 0
      %2037 = vmatpush1.bf16.msra.mxu0 %v2027
      %2038 = vmatprep.subr.bf16.mxu0 0
      %2039 = vmatpush1.bf16.msra.mxu0 %v2026
      %2040 = vmatprep.subr.bf16.mxu0 0
      %2041 = vmatpush1.bf16.msra.mxu0 %v2025
      %2042 = vmatprep.subr.bf16.mxu0 0
      %2043 = vmatpush1.bf16.msra.mxu0 %v2024
      %2044 = vmatprep.subr.bf16.mxu0 0
      %2045 = vmatpush1.bf16.msra.mxu0 %v2023
      %2046 = vmatprep.subr.bf16.mxu0 0
      %2047 = vmatpush1.bf16.msra.mxu0 %v2022
      %2048 = vmatprep.subr.bf16.mxu0 0
      %2049 = vmatpush1.bf16.msra.mxu0 %v2021
      %2050 = vmatprep.subr.bf16.mxu0 0
      %2051 = vmatpush1.bf16.msra.mxu0 %v2020
      %2052 = vmatprep.subr.bf16.mxu0 0
      %2053 = vmatpush2.bf16.msra.mxu0 0
      %2054 = vmatprep.subr.bf16.mxu0 0
      %2055 = vmatpush2.bf16.msra.mxu0 0
      %2056 = vmatprep.subr.bf16.mxu0 0
      %2057 = vmatpush2.bf16.msra.mxu0 0
      %2058 = vmatprep.subr.bf16.mxu0 0
      %2059 = vmatpush2.bf16.msra.mxu0 0
      %2060 = vmatprep.subr.bf16.mxu0 0
      %2061 = vmatpush2.bf16.msra.mxu0 0
      %2062 = vmatprep.subr.bf16.mxu0 0
      %2063 = vmatpush2.bf16.msra.mxu0 0
      %2064 = vmatprep.subr.bf16.mxu0 0
      %2065 = vmatpush2.bf16.msra.mxu0 0
      %2066 = vmatprep.subr.bf16.mxu0 0
      %2067 = vmatpush2.bf16.msra.mxu0 0
      %2068 = vmatprep.mubr.bf16.mxu0 0
      %2069 = vmatmul.mubr.bf16.gmra.mxu0 %v1963
      %v2070 = vpop.f32.mrf.mxu0
      %v2071 = vadd.f32 0.0, %v2070
      %v2072 = vpop.f32.mrf.mxu0
      %v2073 = vpop.f32.mrf.mxu0
      %v2074 = vadd.f32 0.0, %v2073
      %v2075 = vpop.f32.mrf.mxu0
      %2076 = vmatprep.mubr.bf16.mxu0 0
      %2077 = vmatmul.mubr.bf16.gmra.mxu0 %v1964
      %v2078 = vpop.f32.mrf.mxu0
      %v2079 = vadd.f32 0.0, %v2078
      %v2080 = vpop.f32.mrf.mxu0
      %v2081 = vpop.f32.mrf.mxu0
      %v2082 = vadd.f32 0.0, %v2081
      %v2083 = vpop.f32.mrf.mxu0
      %2084 = vmatprep.mubr.bf16.mxu0 0
      %2085 = vmatmul.mubr.bf16.gmra.mxu0 %v1965
      %v2086 = vpop.f32.mrf.mxu0
      %v2087 = vadd.f32 0.0, %v2086
      %v2088 = vpop.f32.mrf.mxu0
      %v2089 = vpop.f32.mrf.mxu0
      %v2090 = vadd.f32 0.0, %v2089
      %v2091 = vpop.f32.mrf.mxu0
      %2092 = vmatprep.mubr.bf16.mxu0 0
      %2093 = vmatmul.mubr.bf16.gmra.mxu0 %v1966
      %v2094 = vpop.f32.mrf.mxu0
      %v2095 = vadd.f32 0.0, %v2094
      %v2096 = vpop.f32.mrf.mxu0
      %v2097 = vpop.f32.mrf.mxu0
      %v2098 = vadd.f32 0.0, %v2097
      %v2099 = vpop.f32.mrf.mxu0
      %2100 = vmatprep.mubr.bf16.mxu0 0
      %2101 = vmatmul.mubr.bf16.gmra.mxu0 %v1967
      %v2102 = vpop.f32.mrf.mxu0
      %v2103 = vadd.f32 0.0, %v2102
      %v2104 = vpop.f32.mrf.mxu0
      %v2105 = vpop.f32.mrf.mxu0
      %v2106 = vadd.f32 0.0, %v2105
      %v2107 = vpop.f32.mrf.mxu0
      %2108 = vmatprep.mubr.bf16.mxu0 0
      %2109 = vmatmul.mubr.bf16.gmra.mxu0 %v1968
      %v2110 = vpop.f32.mrf.mxu0
      %v2111 = vadd.f32 0.0, %v2110
      %v2112 = vpop.f32.mrf.mxu0
      %v2113 = vpop.f32.mrf.mxu0
      %v2114 = vadd.f32 0.0, %v2113
      %v2115 = vpop.f32.mrf.mxu0
      %2116 = vmatprep.mubr.bf16.mxu0 0
      %2117 = vmatmul.mubr.bf16.gmra.mxu0 %v1969
      %v2118 = vpop.f32.mrf.mxu0
      %v2119 = vadd.f32 0.0, %v2118
      %v2120 = vpop.f32.mrf.mxu0
      %v2121 = vpop.f32.mrf.mxu0
      %v2122 = vadd.f32 0.0, %v2121
      %v2123 = vpop.f32.mrf.mxu0
      %2124 = vmatprep.mubr.bf16.mxu0 0
      %2125 = vmatmul.mubr.bf16.gmra.mxu0 %v1970
      %v2126 = vpop.f32.mrf.mxu0
      %v2127 = vadd.f32 0.0, %v2126
      %v2128 = vpop.f32.mrf.mxu0
      %v2129 = vpop.f32.mrf.mxu0
      %v2130 = vadd.f32 0.0, %v2129
      %v2131 = vpop.f32.mrf.mxu0
      %2132 = vdwg.mxu0
      %v2133 = vadd.f32 %v1931, %v2071
      %v2134 = vadd.f32 %v1932, %v2074
      %v2135 = vadd.f32 %v1933, %v2079
      %v2136 = vadd.f32 %v1934, %v2082
      %v2137 = vadd.f32 %v1935, %v2087
      %v2138 = vadd.f32 %v1936, %v2090
      %v2139 = vadd.f32 %v1937, %v2095
      %v2140 = vadd.f32 %v1938, %v2098
      %v2141 = vadd.f32 %v1939, %v2103
      %v2142 = vadd.f32 %v1940, %v2106
      %v2143 = vadd.f32 %v1941, %v2111
      %v2144 = vadd.f32 %v1942, %v2114
      %v2145 = vadd.f32 %v1943, %v2119
      %v2146 = vadd.f32 %v1944, %v2122
      %v2147 = vadd.f32 %v1945, %v2127
      %v2148 = vadd.f32 %v1946, %v2130
      %v2149 = vld [vmem:[%s2] sm:$0x1]
      %v2151 = vlaneseq
      %v2152 = vshrl.u32 %v2151, 7
      %v2153 = vsub.s32 0, %v2152
      %v2154 = vrot.slane %v2149, %v2153
      %v2156 = vadd.f32 %v2133, %v2154
      %v2157 = vadd.f32 %v2134, %v2154
      %v2158 = vadd.f32 %v2135, %v2154
      %v2159 = vadd.f32 %v2136, %v2154
      %v2160 = vadd.f32 %v2137, %v2154
      %v2161 = vadd.f32 %v2138, %v2154
      %v2162 = vadd.f32 %v2139, %v2154
      %v2163 = vadd.f32 %v2140, %v2154
      %v2164 = vadd.f32 %v2141, %v2154
      %v2165 = vadd.f32 %v2142, %v2154
      %v2166 = vadd.f32 %v2143, %v2154
      %v2167 = vadd.f32 %v2144, %v2154
      %v2168 = vadd.f32 %v2145, %v2154
      %v2169 = vadd.f32 %v2146, %v2154
      %v2170 = vadd.f32 %v2147, %v2154
      %v2171 = vadd.f32 %v2148, %v2154
      %v2172 = vmax.f32 %v2156, 0.0
      %v2173 = vmax.f32 %v2157, 0.0
      %v2174 = vmax.f32 %v2158, 0.0
      %v2175 = vmax.f32 %v2159, 0.0
      %v2176 = vmax.f32 %v2160, 0.0
      %v2177 = vmax.f32 %v2161, 0.0
      %v2178 = vmax.f32 %v2162, 0.0
      %v2179 = vmax.f32 %v2163, 0.0
      %v2180 = vmax.f32 %v2164, 0.0
      %v2181 = vmax.f32 %v2165, 0.0
      %v2182 = vmax.f32 %v2166, 0.0
      %v2183 = vmax.f32 %v2167, 0.0
      %v2184 = vmax.f32 %v2168, 0.0
      %v2185 = vmax.f32 %v2169, 0.0
      %v2186 = vmax.f32 %v2170, 0.0
      %v2187 = vmax.f32 %v2171, 0.0
      %2188 = vst [vmem:[#allocation3] sm:$0xff] 0.0
      %2189 = vst [vmem:[#allocation3 + $0x8] sm:$0x3] 0.0
      %2190 = vst [vmem:[#allocation3 + $0xa0] sm:$0xff] 0.0
      %2191 = vst [vmem:[#allocation3 + $0xa8] sm:$0x3] 0.0
      %s2192 = scalar_lea.vmem [#allocation3], 144
      %2193 = vst [vmem:[%s2192] sm:$0xff] 0.0
      %2194 = vst [vmem:[%s2192 + $0x8] sm:$0x3] 0.0
      %2195 = vst [vmem:[%s2192 + $0xa0] sm:$0xff] 0.0
      %2196 = vst [vmem:[%s2192 + $0xa8] sm:$0x3] 0.0
      %2197 = vst [vmem:[#allocation3] sm:$0x1] 0.0
      %2198 = vst [vmem:[#allocation3 + $0x10] sm:$0x1] 0.0
      %2199 = vst [vmem:[#allocation3 + $0x20] sm:$0x1] 0.0
      %2200 = vst [vmem:[#allocation3 + $0x30] sm:$0x1] 0.0
      %2201 = vst [vmem:[#allocation3 + $0x40] sm:$0x1] 0.0
      %2202 = vst [vmem:[#allocation3 + $0x50] sm:$0x1] 0.0
      %2203 = vst [vmem:[#allocation3 + $0x60] sm:$0x1] 0.0
      %2204 = vst [vmem:[#allocation3 + $0x70] sm:$0x1] 0.0
      %2205 = vst [vmem:[#allocation3 + $0x80] sm:$0x1] 0.0
      %2206 = vst [vmem:[#allocation3 + $0x90] sm:$0x1] 0.0
      %2207 = vst [vmem:[#allocation3 + $0xa0] sm:$0x1] 0.0
      %2208 = vst [vmem:[#allocation3 + $0xb0] sm:$0x1] 0.0
      %2209 = vst [vmem:[#allocation3 + $0xc0] sm:$0x1] 0.0
      %2210 = vst [vmem:[#allocation3 + $0xd0] sm:$0x1] 0.0
      %2211 = vst [vmem:[#allocation3 + $0xe0] sm:$0x1] 0.0
      %2212 = vst [vmem:[#allocation3 + $0xf0] sm:$0x1] 0.0
      %2213 = vst [vmem:[#allocation3 + $0x100] sm:$0x1] 0.0
      %2214 = vst [vmem:[#allocation3 + $0x110] sm:$0x1] 0.0
      %2215 = vst [vmem:[#allocation3 + $0x120] sm:$0x1] 0.0
      %2216 = vst [vmem:[#allocation3 + $0x130] sm:$0x1] 0.0
      %2217 = vst [vmem:[#allocation3 + $0x9] sm:$0x1] 0.0
      %2218 = vst [vmem:[#allocation3 + $0x19] sm:$0x1] 0.0
      %2219 = vst [vmem:[#allocation3 + $0x29] sm:$0x1] 0.0
      %2220 = vst [vmem:[#allocation3 + $0x39] sm:$0x1] 0.0
      %2221 = vst [vmem:[#allocation3 + $0x49] sm:$0x1] 0.0
      %2222 = vst [vmem:[#allocation3 + $0x59] sm:$0x1] 0.0
      %2223 = vst [vmem:[#allocation3 + $0x69] sm:$0x1] 0.0
      %2224 = vst [vmem:[#allocation3 + $0x79] sm:$0x1] 0.0
      %2225 = vst [vmem:[#allocation3 + $0x89] sm:$0x1] 0.0
      %2226 = vst [vmem:[#allocation3 + $0x99] sm:$0x1] 0.0
      %2227 = vst [vmem:[#allocation3 + $0xa9] sm:$0x1] 0.0
      %2228 = vst [vmem:[#allocation3 + $0xb9] sm:$0x1] 0.0
      %2229 = vst [vmem:[#allocation3 + $0xc9] sm:$0x1] 0.0
      %2230 = vst [vmem:[#allocation3 + $0xd9] sm:$0x1] 0.0
      %2231 = vst [vmem:[#allocation3 + $0xe9] sm:$0x1] 0.0
      %2232 = vst [vmem:[#allocation3 + $0xf9] sm:$0x1] 0.0
      %2233 = vst [vmem:[#allocation3 + $0x109] sm:$0x1] 0.0
      %2234 = vst [vmem:[#allocation3 + $0x119] sm:$0x1] 0.0
      %2235 = vst [vmem:[#allocation3 + $0x129] sm:$0x1] 0.0
      %2236 = vst [vmem:[#allocation3 + $0x139] sm:$0x1] 0.0
      %s2237 = scalar_lea.vmem [#allocation3], 16
      %2238 = vst [vmem:[%s2237 + $0x1] sm:$0xff] %v2172
      %2239 = vst [vmem:[%s2237 + $0x11] sm:$0xff] %v2173
      %2240 = vst [vmem:[%s2237 + $0x21] sm:$0xff] %v2174
      %2241 = vst [vmem:[%s2237 + $0x31] sm:$0xff] %v2175
      %2242 = vst [vmem:[%s2237 + $0x41] sm:$0xff] %v2176
      %2243 = vst [vmem:[%s2237 + $0x51] sm:$0xff] %v2177
      %2244 = vst [vmem:[%s2237 + $0x61] sm:$0xff] %v2178
      %2245 = vst [vmem:[%s2237 + $0x71] sm:$0xff] %v2179
      %2246 = vst [vmem:[%s2237 + $0xa1] sm:$0xff] %v2180
      %2247 = vst [vmem:[%s2237 + $0xb1] sm:$0xff] %v2181
      %2248 = vst [vmem:[%s2237 + $0xc1] sm:$0xff] %v2182
      %2249 = vst [vmem:[%s2237 + $0xd1] sm:$0xff] %v2183
      %2250 = vst [vmem:[%s2237 + $0xe1] sm:$0xff] %v2184
      %2251 = vst [vmem:[%s2237 + $0xf1] sm:$0xff] %v2185
      %2252 = vst [vmem:[%s2237 + $0x101] sm:$0xff] %v2186
      %2253 = vst [vmem:[%s2237 + $0x111] sm:$0xff] %v2187
      %v2254 = vld [vmem:[#allocation3] sm:$0xff]
      %v2255 = vld [vmem:[#allocation3 + $0x10] sm:$0xff]
      %v2256 = vld [vmem:[#allocation3 + $0x20] sm:$0xff]
      %v2257 = vld [vmem:[#allocation3 + $0x30] sm:$0xff]
      %v2258 = vld [vmem:[#allocation3 + $0x40] sm:$0xff]
      %v2259 = vld [vmem:[#allocation3 + $0x50] sm:$0xff]
      %v2260 = vld [vmem:[#allocation3 + $0x60] sm:$0xff]
      %v2261 = vld [vmem:[#allocation3 + $0x70] sm:$0xff]
      %v2262 = vld [vmem:[#allocation3 + $0xa0] sm:$0xff]
      %v2263 = vld [vmem:[#allocation3 + $0xb0] sm:$0xff]
      %v2264 = vld [vmem:[#allocation3 + $0xc0] sm:$0xff]
      %v2265 = vld [vmem:[#allocation3 + $0xd0] sm:$0xff]
      %v2266 = vld [vmem:[#allocation3 + $0xe0] sm:$0xff]
      %v2267 = vld [vmem:[#allocation3 + $0xf0] sm:$0xff]
      %v2268 = vld [vmem:[#allocation3 + $0x100] sm:$0xff]
      %v2269 = vld [vmem:[#allocation3 + $0x110] sm:$0xff]
      %v2270 = vpack.c.bf16 %v2255, %v2254
      %v2271 = vpack.c.bf16 %v2257, %v2256
      %v2272 = vpack.c.bf16 %v2259, %v2258
      %v2273 = vpack.c.bf16 %v2261, %v2260
      %v2274 = vpack.c.bf16 %v2263, %v2262
      %v2275 = vpack.c.bf16 %v2265, %v2264
      %v2276 = vpack.c.bf16 %v2267, %v2266
      %v2277 = vpack.c.bf16 %v2269, %v2268
      %v2278 = vld [vmem:[%s3] sm:$0xf]
      %v2279 = vld [vmem:[%s3 + $0x4] sm:$0xf]
      %v2280 = vld [vmem:[%s3 + $0x8] sm:$0xf]
      %v2281 = vld [vmem:[%s3 + $0xc] sm:$0xf]
      %v2282 = vld [vmem:[%s3 + $0x10] sm:$0xf]
      %v2283 = vld [vmem:[%s3 + $0x14] sm:$0xf]
      %v2284 = vld [vmem:[%s3 + $0x18] sm:$0xf]
      %v2285 = vld [vmem:[%s3 + $0x1c] sm:$0xf]
      %v2286 = vld [vmem:[%s3 + $0x20] sm:$0xf]
      %v2287 = vld [vmem:[%s3 + $0x24] sm:$0xf]
      %v2288 = vld [vmem:[%s3 + $0x28] sm:$0xf]
      %v2289 = vld [vmem:[%s3 + $0x2c] sm:$0xf]
      %v2290 = vld [vmem:[%s3 + $0x30] sm:$0xf]
      %v2291 = vld [vmem:[%s3 + $0x34] sm:$0xf]
      %v2292 = vld [vmem:[%s3 + $0x38] sm:$0xf]
      %v2293 = vld [vmem:[%s3 + $0x3c] sm:$0xf]
      %v2294 = vld [vmem:[#allocation3 + $0x1] sm:$0xff]
      %v2295 = vld [vmem:[#allocation3 + $0x11] sm:$0xff]
      %v2296 = vld [vmem:[#allocation3 + $0x21] sm:$0xff]
      %v2297 = vld [vmem:[#allocation3 + $0x31] sm:$0xff]
      %v2298 = vld [vmem:[#allocation3 + $0x41] sm:$0xff]
      %v2299 = vld [vmem:[#allocation3 + $0x51] sm:$0xff]
      %v2300 = vld [vmem:[#allocation3 + $0x61] sm:$0xff]
      %v2301 = vld [vmem:[#allocation3 + $0x71] sm:$0xff]
      %v2302 = vld [vmem:[#allocation3 + $0xa1] sm:$0xff]
      %v2303 = vld [vmem:[#allocation3 + $0xb1] sm:$0xff]
      %v2304 = vld [vmem:[#allocation3 + $0xc1] sm:$0xff]
      %v2305 = vld [vmem:[#allocation3 + $0xd1] sm:$0xff]
      %v2306 = vld [vmem:[#allocation3 + $0xe1] sm:$0xff]
      %v2307 = vld [vmem:[#allocation3 + $0xf1] sm:$0xff]
      %v2308 = vld [vmem:[#allocation3 + $0x101] sm:$0xff]
      %v2309 = vld [vmem:[#allocation3 + $0x111] sm:$0xff]
      %v2310 = vpack.c.bf16 %v2295, %v2294
      %v2311 = vpack.c.bf16 %v2297, %v2296
      %v2312 = vpack.c.bf16 %v2299, %v2298
      %v2313 = vpack.c.bf16 %v2301, %v2300
      %v2314 = vpack.c.bf16 %v2303, %v2302
      %v2315 = vpack.c.bf16 %v2305, %v2304
      %v2316 = vpack.c.bf16 %v2307, %v2306
      %v2317 = vpack.c.bf16 %v2309, %v2308
      %s2318 = scalar_lea.vmem %s3, 64
      %v2319 = vld [vmem:[%s2318] sm:$0xf]
      %v2320 = vld [vmem:[%s2318 + $0x4] sm:$0xf]
      %v2321 = vld [vmem:[%s2318 + $0x8] sm:$0xf]
      %v2322 = vld [vmem:[%s2318 + $0xc] sm:$0xf]
      %v2323 = vld [vmem:[%s2318 + $0x10] sm:$0xf]
      %v2324 = vld [vmem:[%s2318 + $0x14] sm:$0xf]
      %v2325 = vld [vmem:[%s2318 + $0x18] sm:$0xf]
      %v2326 = vld [vmem:[%s2318 + $0x1c] sm:$0xf]
      %v2327 = vld [vmem:[%s2318 + $0x20] sm:$0xf]
      %v2328 = vld [vmem:[%s2318 + $0x24] sm:$0xf]
      %v2329 = vld [vmem:[%s2318 + $0x28] sm:$0xf]
      %v2330 = vld [vmem:[%s2318 + $0x2c] sm:$0xf]
      %v2331 = vld [vmem:[%s2318 + $0x30] sm:$0xf]
      %v2332 = vld [vmem:[%s2318 + $0x34] sm:$0xf]
      %v2333 = vld [vmem:[%s2318 + $0x38] sm:$0xf]
      %v2334 = vld [vmem:[%s2318 + $0x3c] sm:$0xf]
      %v2351 = vunpack.c.l.b16 %v2319
      %v2352 = vunpack.c.l.b16 %v2320
      %v2353 = vunpack.c.l.b16 %v2321
      %v2354 = vunpack.c.l.b16 %v2322
      %v2355 = vunpack.c.l.b16 %v2323
      %v2356 = vunpack.c.l.b16 %v2324
      %v2357 = vunpack.c.l.b16 %v2325
      %v2358 = vunpack.c.l.b16 %v2326
      %v2359 = vunpack.c.l.b16 %v2327
      %v2360 = vunpack.c.l.b16 %v2328
      %v2361 = vunpack.c.l.b16 %v2329
      %v2362 = vunpack.c.l.b16 %v2330
      %v2363 = vunpack.c.l.b16 %v2331
      %v2364 = vunpack.c.l.b16 %v2332
      %v2365 = vunpack.c.l.b16 %v2333
      %v2366 = vunpack.c.l.b16 %v2334
      %v2367 = vpack.c.b16 %v2352, %v2351
      %v2368 = vpack.c.b16 %v2354, %v2353
      %v2369 = vpack.c.b16 %v2356, %v2355
      %v2370 = vpack.c.b16 %v2358, %v2357
      %v2371 = vpack.c.b16 %v2360, %v2359
      %v2372 = vpack.c.b16 %v2362, %v2361
      %v2373 = vpack.c.b16 %v2364, %v2363
      %v2374 = vpack.c.b16 %v2366, %v2365
      %2383 = vmatprep.subr.bf16.mxu0 0
      %2384 = vmatpush1.bf16.msra.mxu0 %v2374
      %2385 = vmatprep.subr.bf16.mxu0 0
      %2386 = vmatpush1.bf16.msra.mxu0 %v2373
      %2387 = vmatprep.subr.bf16.mxu0 0
      %2388 = vmatpush1.bf16.msra.mxu0 %v2372
      %2389 = vmatprep.subr.bf16.mxu0 0
      %2390 = vmatpush1.bf16.msra.mxu0 %v2371
      %2391 = vmatprep.subr.bf16.mxu0 0
      %2392 = vmatpush1.bf16.msra.mxu0 %v2370
      %2393 = vmatprep.subr.bf16.mxu0 0
      %2394 = vmatpush1.bf16.msra.mxu0 %v2369
      %2395 = vmatprep.subr.bf16.mxu0 0
      %2396 = vmatpush1.bf16.msra.mxu0 %v2368
      %2397 = vmatprep.subr.bf16.mxu0 0
      %2398 = vmatpush1.bf16.msra.mxu0 %v2367
      %2399 = vmatprep.subr.bf16.mxu0 0
      %2400 = vmatpush2.bf16.msra.mxu0 0
      %2401 = vmatprep.subr.bf16.mxu0 0
      %2402 = vmatpush2.bf16.msra.mxu0 0
      %2403 = vmatprep.subr.bf16.mxu0 0
      %2404 = vmatpush2.bf16.msra.mxu0 0
      %2405 = vmatprep.subr.bf16.mxu0 0
      %2406 = vmatpush2.bf16.msra.mxu0 0
      %2407 = vmatprep.subr.bf16.mxu0 0
      %2408 = vmatpush2.bf16.msra.mxu0 0
      %2409 = vmatprep.subr.bf16.mxu0 0
      %2410 = vmatpush2.bf16.msra.mxu0 0
      %2411 = vmatprep.subr.bf16.mxu0 0
      %2412 = vmatpush2.bf16.msra.mxu0 0
      %2413 = vmatprep.subr.bf16.mxu0 0
      %2414 = vmatpush2.bf16.msra.mxu0 0
      %2415 = vmatprep.mubr.bf16.mxu0 0
      %2416 = vmatmul.mubr.bf16.gmra.mxu0 %v2310
      %v2417 = vpop.f32.mrf.mxu0
      %v2418 = vadd.f32 0.0, %v2417
      %v2419 = vpop.f32.mrf.mxu0
      %v2420 = vpop.f32.mrf.mxu0
      %v2421 = vadd.f32 0.0, %v2420
      %v2422 = vpop.f32.mrf.mxu0
      %2423 = vmatprep.mubr.bf16.mxu0 0
      %2424 = vmatmul.mubr.bf16.gmra.mxu0 %v2311
      %v2425 = vpop.f32.mrf.mxu0
      %v2426 = vadd.f32 0.0, %v2425
      %v2427 = vpop.f32.mrf.mxu0
      %v2428 = vpop.f32.mrf.mxu0
      %v2429 = vadd.f32 0.0, %v2428
      %v2430 = vpop.f32.mrf.mxu0
      %2431 = vmatprep.mubr.bf16.mxu0 0
      %2432 = vmatmul.mubr.bf16.gmra.mxu0 %v2312
      %v2433 = vpop.f32.mrf.mxu0
      %v2434 = vadd.f32 0.0, %v2433
      %v2435 = vpop.f32.mrf.mxu0
      %v2436 = vpop.f32.mrf.mxu0
      %v2437 = vadd.f32 0.0, %v2436
      %v2438 = vpop.f32.mrf.mxu0
      %2439 = vmatprep.mubr.bf16.mxu0 0
      %2440 = vmatmul.mubr.bf16.gmra.mxu0 %v2313
      %v2441 = vpop.f32.mrf.mxu0
      %v2442 = vadd.f32 0.0, %v2441
      %v2443 = vpop.f32.mrf.mxu0
      %v2444 = vpop.f32.mrf.mxu0
      %v2445 = vadd.f32 0.0, %v2444
      %v2446 = vpop.f32.mrf.mxu0
      %2447 = vmatprep.mubr.bf16.mxu0 0
      %2448 = vmatmul.mubr.bf16.gmra.mxu0 %v2314
      %v2449 = vpop.f32.mrf.mxu0
      %v2450 = vadd.f32 0.0, %v2449
      %v2451 = vpop.f32.mrf.mxu0
      %v2452 = vpop.f32.mrf.mxu0
      %v2453 = vadd.f32 0.0, %v2452
      %v2454 = vpop.f32.mrf.mxu0
      %2455 = vmatprep.mubr.bf16.mxu0 0
      %2456 = vmatmul.mubr.bf16.gmra.mxu0 %v2315
      %v2457 = vpop.f32.mrf.mxu0
      %v2458 = vadd.f32 0.0, %v2457
      %v2459 = vpop.f32.mrf.mxu0
      %v2460 = vpop.f32.mrf.mxu0
      %v2461 = vadd.f32 0.0, %v2460
      %v2462 = vpop.f32.mrf.mxu0
      %2463 = vmatprep.mubr.bf16.mxu0 0
      %2464 = vmatmul.mubr.bf16.gmra.mxu0 %v2316
      %v2465 = vpop.f32.mrf.mxu0
      %v2466 = vadd.f32 0.0, %v2465
      %v2467 = vpop.f32.mrf.mxu0
      %v2468 = vpop.f32.mrf.mxu0
      %v2469 = vadd.f32 0.0, %v2468
      %v2470 = vpop.f32.mrf.mxu0
      %2471 = vmatprep.mubr.bf16.mxu0 0
      %2472 = vmatmul.mubr.bf16.gmra.mxu0 %v2317
      %v2473 = vpop.f32.mrf.mxu0
      %v2474 = vadd.f32 0.0, %v2473
      %v2475 = vpop.f32.mrf.mxu0
      %v2476 = vpop.f32.mrf.mxu0
      %v2477 = vadd.f32 0.0, %v2476
      %v2478 = vpop.f32.mrf.mxu0
      %2479 = vdwg.mxu0
      %v2496 = vunpack.c.l.b16 %v2278
      %v2497 = vunpack.c.l.b16 %v2279
      %v2498 = vunpack.c.l.b16 %v2280
      %v2499 = vunpack.c.l.b16 %v2281
      %v2500 = vunpack.c.l.b16 %v2282
      %v2501 = vunpack.c.l.b16 %v2283
      %v2502 = vunpack.c.l.b16 %v2284
      %v2503 = vunpack.c.l.b16 %v2285
      %v2504 = vunpack.c.l.b16 %v2286
      %v2505 = vunpack.c.l.b16 %v2287
      %v2506 = vunpack.c.l.b16 %v2288
      %v2507 = vunpack.c.l.b16 %v2289
      %v2508 = vunpack.c.l.b16 %v2290
      %v2509 = vunpack.c.l.b16 %v2291
      %v2510 = vunpack.c.l.b16 %v2292
      %v2511 = vunpack.c.l.b16 %v2293
      %v2512 = vpack.c.b16 %v2497, %v2496
      %v2513 = vpack.c.b16 %v2499, %v2498
      %v2514 = vpack.c.b16 %v2501, %v2500
      %v2515 = vpack.c.b16 %v2503, %v2502
      %v2516 = vpack.c.b16 %v2505, %v2504
      %v2517 = vpack.c.b16 %v2507, %v2506
      %v2518 = vpack.c.b16 %v2509, %v2508
      %v2519 = vpack.c.b16 %v2511, %v2510
      %2528 = vmatprep.subr.bf16.mxu0 0
      %2529 = vmatpush1.bf16.msra.mxu0 %v2519
      %2530 = vmatprep.subr.bf16.mxu0 0
      %2531 = vmatpush1.bf16.msra.mxu0 %v2518
      %2532 = vmatprep.subr.bf16.mxu0 0
      %2533 = vmatpush1.bf16.msra.mxu0 %v2517
      %2534 = vmatprep.subr.bf16.mxu0 0
      %2535 = vmatpush1.bf16.msra.mxu0 %v2516
      %2536 = vmatprep.subr.bf16.mxu0 0
      %2537 = vmatpush1.bf16.msra.mxu0 %v2515
      %2538 = vmatprep.subr.bf16.mxu0 0
      %2539 = vmatpush1.bf16.msra.mxu0 %v2514
      %2540 = vmatprep.subr.bf16.mxu0 0
      %2541 = vmatpush1.bf16.msra.mxu0 %v2513
      %2542 = vmatprep.subr.bf16.mxu0 0
      %2543 = vmatpush1.bf16.msra.mxu0 %v2512
      %2544 = vmatprep.subr.bf16.mxu0 0
      %2545 = vmatpush2.bf16.msra.mxu0 0
      %2546 = vmatprep.subr.bf16.mxu0 0
      %2547 = vmatpush2.bf16.msra.mxu0 0
      %2548 = vmatprep.subr.bf16.mxu0 0
      %2549 = vmatpush2.bf16.msra.mxu0 0
      %2550 = vmatprep.subr.bf16.mxu0 0
      %2551 = vmatpush2.bf16.msra.mxu0 0
      %2552 = vmatprep.subr.bf16.mxu0 0
      %2553 = vmatpush2.bf16.msra.mxu0 0
      %2554 = vmatprep.subr.bf16.mxu0 0
      %2555 = vmatpush2.bf16.msra.mxu0 0
      %2556 = vmatprep.subr.bf16.mxu0 0
      %2557 = vmatpush2.bf16.msra.mxu0 0
      %2558 = vmatprep.subr.bf16.mxu0 0
      %2559 = vmatpush2.bf16.msra.mxu0 0
      %2560 = vmatprep.mubr.bf16.mxu0 0
      %2561 = vmatmul.mubr.bf16.gmra.mxu0 %v2270
      %v2562 = vpop.f32.mrf.mxu0
      %v2563 = vadd.f32 %v2418, %v2562
      %v2564 = vpop.f32.mrf.mxu0
      %v2565 = vpop.f32.mrf.mxu0
      %v2566 = vadd.f32 %v2421, %v2565
      %v2567 = vpop.f32.mrf.mxu0
      %2568 = vmatprep.mubr.bf16.mxu0 0
      %2569 = vmatmul.mubr.bf16.gmra.mxu0 %v2271
      %v2570 = vpop.f32.mrf.mxu0
      %v2571 = vadd.f32 %v2426, %v2570
      %v2572 = vpop.f32.mrf.mxu0
      %v2573 = vpop.f32.mrf.mxu0
      %v2574 = vadd.f32 %v2429, %v2573
      %v2575 = vpop.f32.mrf.mxu0
      %2576 = vmatprep.mubr.bf16.mxu0 0
      %2577 = vmatmul.mubr.bf16.gmra.mxu0 %v2272
      %v2578 = vpop.f32.mrf.mxu0
      %v2579 = vadd.f32 %v2434, %v2578
      %v2580 = vpop.f32.mrf.mxu0
      %v2581 = vpop.f32.mrf.mxu0
      %v2582 = vadd.f32 %v2437, %v2581
      %v2583 = vpop.f32.mrf.mxu0
      %2584 = vmatprep.mubr.bf16.mxu0 0
      %2585 = vmatmul.mubr.bf16.gmra.mxu0 %v2273
      %v2586 = vpop.f32.mrf.mxu0
      %v2587 = vadd.f32 %v2442, %v2586
      %v2588 = vpop.f32.mrf.mxu0
      %v2589 = vpop.f32.mrf.mxu0
      %v2590 = vadd.f32 %v2445, %v2589
      %v2591 = vpop.f32.mrf.mxu0
      %2592 = vmatprep.mubr.bf16.mxu0 0
      %2593 = vmatmul.mubr.bf16.gmra.mxu0 %v2274
      %v2594 = vpop.f32.mrf.mxu0
      %v2595 = vadd.f32 %v2450, %v2594
      %v2596 = vpop.f32.mrf.mxu0
      %v2597 = vpop.f32.mrf.mxu0
      %v2598 = vadd.f32 %v2453, %v2597
      %v2599 = vpop.f32.mrf.mxu0
      %2600 = vmatprep.mubr.bf16.mxu0 0
      %2601 = vmatmul.mubr.bf16.gmra.mxu0 %v2275
      %v2602 = vpop.f32.mrf.mxu0
      %v2603 = vadd.f32 %v2458, %v2602
      %v2604 = vpop.f32.mrf.mxu0
      %v2605 = vpop.f32.mrf.mxu0
      %v2606 = vadd.f32 %v2461, %v2605
      %v2607 = vpop.f32.mrf.mxu0
      %2608 = vmatprep.mubr.bf16.mxu0 0
      %2609 = vmatmul.mubr.bf16.gmra.mxu0 %v2276
      %v2610 = vpop.f32.mrf.mxu0
      %v2611 = vadd.f32 %v2466, %v2610
      %v2612 = vpop.f32.mrf.mxu0
      %v2613 = vpop.f32.mrf.mxu0
      %v2614 = vadd.f32 %v2469, %v2613
      %v2615 = vpop.f32.mrf.mxu0
      %2616 = vmatprep.mubr.bf16.mxu0 0
      %2617 = vmatmul.mubr.bf16.gmra.mxu0 %v2277
      %v2618 = vpop.f32.mrf.mxu0
      %v2619 = vadd.f32 %v2474, %v2618
      %v2620 = vpop.f32.mrf.mxu0
      %v2621 = vpop.f32.mrf.mxu0
      %v2622 = vadd.f32 %v2477, %v2621
      %v2623 = vpop.f32.mrf.mxu0
      %2624 = vdwg.mxu0
      %v2625 = vld [vmem:[#allocation3 + $0x2] sm:$0xff]
      %v2626 = vld [vmem:[#allocation3 + $0x12] sm:$0xff]
      %v2627 = vld [vmem:[#allocation3 + $0x22] sm:$0xff]
      %v2628 = vld [vmem:[#allocation3 + $0x32] sm:$0xff]
      %v2629 = vld [vmem:[#allocation3 + $0x42] sm:$0xff]
      %v2630 = vld [vmem:[#allocation3 + $0x52] sm:$0xff]
      %v2631 = vld [vmem:[#allocation3 + $0x62] sm:$0xff]
      %v2632 = vld [vmem:[#allocation3 + $0x72] sm:$0xff]
      %v2633 = vld [vmem:[#allocation3 + $0xa2] sm:$0xff]
      %v2634 = vld [vmem:[#allocation3 + $0xb2] sm:$0xff]
      %v2635 = vld [vmem:[#allocation3 + $0xc2] sm:$0xff]
      %v2636 = vld [vmem:[#allocation3 + $0xd2] sm:$0xff]
      %v2637 = vld [vmem:[#allocation3 + $0xe2] sm:$0xff]
      %v2638 = vld [vmem:[#allocation3 + $0xf2] sm:$0xff]
      %v2639 = vld [vmem:[#allocation3 + $0x102] sm:$0xff]
      %v2640 = vld [vmem:[#allocation3 + $0x112] sm:$0xff]
      %v2641 = vpack.c.bf16 %v2626, %v2625
      %v2642 = vpack.c.bf16 %v2628, %v2627
      %v2643 = vpack.c.bf16 %v2630, %v2629
      %v2644 = vpack.c.bf16 %v2632, %v2631
      %v2645 = vpack.c.bf16 %v2634, %v2633
      %v2646 = vpack.c.bf16 %v2636, %v2635
      %v2647 = vpack.c.bf16 %v2638, %v2637
      %v2648 = vpack.c.bf16 %v2640, %v2639
      %s2649 = scalar_lea.vmem %s3, 128
      %v2650 = vld [vmem:[%s2649] sm:$0xf]
      %v2651 = vld [vmem:[%s2649 + $0x4] sm:$0xf]
      %v2652 = vld [vmem:[%s2649 + $0x8] sm:$0xf]
      %v2653 = vld [vmem:[%s2649 + $0xc] sm:$0xf]
      %v2654 = vld [vmem:[%s2649 + $0x10] sm:$0xf]
      %v2655 = vld [vmem:[%s2649 + $0x14] sm:$0xf]
      %v2656 = vld [vmem:[%s2649 + $0x18] sm:$0xf]
      %v2657 = vld [vmem:[%s2649 + $0x1c] sm:$0xf]
      %v2658 = vld [vmem:[%s2649 + $0x20] sm:$0xf]
      %v2659 = vld [vmem:[%s2649 + $0x24] sm:$0xf]
      %v2660 = vld [vmem:[%s2649 + $0x28] sm:$0xf]
      %v2661 = vld [vmem:[%s2649 + $0x2c] sm:$0xf]
      %v2662 = vld [vmem:[%s2649 + $0x30] sm:$0xf]
      %v2663 = vld [vmem:[%s2649 + $0x34] sm:$0xf]
      %v2664 = vld [vmem:[%s2649 + $0x38] sm:$0xf]
      %v2665 = vld [vmem:[%s2649 + $0x3c] sm:$0xf]
      %v2682 = vunpack.c.l.b16 %v2650
      %v2683 = vunpack.c.l.b16 %v2651
      %v2684 = vunpack.c.l.b16 %v2652
      %v2685 = vunpack.c.l.b16 %v2653
      %v2686 = vunpack.c.l.b16 %v2654
      %v2687 = vunpack.c.l.b16 %v2655
      %v2688 = vunpack.c.l.b16 %v2656
      %v2689 = vunpack.c.l.b16 %v2657
      %v2690 = vunpack.c.l.b16 %v2658
      %v2691 = vunpack.c.l.b16 %v2659
      %v2692 = vunpack.c.l.b16 %v2660
      %v2693 = vunpack.c.l.b16 %v2661
      %v2694 = vunpack.c.l.b16 %v2662
      %v2695 = vunpack.c.l.b16 %v2663
      %v2696 = vunpack.c.l.b16 %v2664
      %v2697 = vunpack.c.l.b16 %v2665
      %v2698 = vpack.c.b16 %v2683, %v2682
      %v2699 = vpack.c.b16 %v2685, %v2684
      %v2700 = vpack.c.b16 %v2687, %v2686
      %v2701 = vpack.c.b16 %v2689, %v2688
      %v2702 = vpack.c.b16 %v2691, %v2690
      %v2703 = vpack.c.b16 %v2693, %v2692
      %v2704 = vpack.c.b16 %v2695, %v2694
      %v2705 = vpack.c.b16 %v2697, %v2696
      %2714 = vmatprep.subr.bf16.mxu0 0
      %2715 = vmatpush1.bf16.msra.mxu0 %v2705
      %2716 = vmatprep.subr.bf16.mxu0 0
      %2717 = vmatpush1.bf16.msra.mxu0 %v2704
      %2718 = vmatprep.subr.bf16.mxu0 0
      %2719 = vmatpush1.bf16.msra.mxu0 %v2703
      %2720 = vmatprep.subr.bf16.mxu0 0
      %2721 = vmatpush1.bf16.msra.mxu0 %v2702
      %2722 = vmatprep.subr.bf16.mxu0 0
      %2723 = vmatpush1.bf16.msra.mxu0 %v2701
      %2724 = vmatprep.subr.bf16.mxu0 0
      %2725 = vmatpush1.bf16.msra.mxu0 %v2700
      %2726 = vmatprep.subr.bf16.mxu0 0
      %2727 = vmatpush1.bf16.msra.mxu0 %v2699
      %2728 = vmatprep.subr.bf16.mxu0 0
      %2729 = vmatpush1.bf16.msra.mxu0 %v2698
      %2730 = vmatprep.subr.bf16.mxu0 0
      %2731 = vmatpush2.bf16.msra.mxu0 0
      %2732 = vmatprep.subr.bf16.mxu0 0
      %2733 = vmatpush2.bf16.msra.mxu0 0
      %2734 = vmatprep.subr.bf16.mxu0 0
      %2735 = vmatpush2.bf16.msra.mxu0 0
      %2736 = vmatprep.subr.bf16.mxu0 0
      %2737 = vmatpush2.bf16.msra.mxu0 0
      %2738 = vmatprep.subr.bf16.mxu0 0
      %2739 = vmatpush2.bf16.msra.mxu0 0
      %2740 = vmatprep.subr.bf16.mxu0 0
      %2741 = vmatpush2.bf16.msra.mxu0 0
      %2742 = vmatprep.subr.bf16.mxu0 0
      %2743 = vmatpush2.bf16.msra.mxu0 0
      %2744 = vmatprep.subr.bf16.mxu0 0
      %2745 = vmatpush2.bf16.msra.mxu0 0
      %2746 = vmatprep.mubr.bf16.mxu0 0
      %2747 = vmatmul.mubr.bf16.gmra.mxu0 %v2641
      %v2748 = vpop.f32.mrf.mxu0
      %v2749 = vadd.f32 0.0, %v2748
      %v2750 = vpop.f32.mrf.mxu0
      %v2751 = vpop.f32.mrf.mxu0
      %v2752 = vadd.f32 0.0, %v2751
      %v2753 = vpop.f32.mrf.mxu0
      %2754 = vmatprep.mubr.bf16.mxu0 0
      %2755 = vmatmul.mubr.bf16.gmra.mxu0 %v2642
      %v2756 = vpop.f32.mrf.mxu0
      %v2757 = vadd.f32 0.0, %v2756
      %v2758 = vpop.f32.mrf.mxu0
      %v2759 = vpop.f32.mrf.mxu0
      %v2760 = vadd.f32 0.0, %v2759
      %v2761 = vpop.f32.mrf.mxu0
      %2762 = vmatprep.mubr.bf16.mxu0 0
      %2763 = vmatmul.mubr.bf16.gmra.mxu0 %v2643
      %v2764 = vpop.f32.mrf.mxu0
      %v2765 = vadd.f32 0.0, %v2764
      %v2766 = vpop.f32.mrf.mxu0
      %v2767 = vpop.f32.mrf.mxu0
      %v2768 = vadd.f32 0.0, %v2767
      %v2769 = vpop.f32.mrf.mxu0
      %2770 = vmatprep.mubr.bf16.mxu0 0
      %2771 = vmatmul.mubr.bf16.gmra.mxu0 %v2644
      %v2772 = vpop.f32.mrf.mxu0
      %v2773 = vadd.f32 0.0, %v2772
      %v2774 = vpop.f32.mrf.mxu0
      %v2775 = vpop.f32.mrf.mxu0
      %v2776 = vadd.f32 0.0, %v2775
      %v2777 = vpop.f32.mrf.mxu0
      %2778 = vmatprep.mubr.bf16.mxu0 0
      %2779 = vmatmul.mubr.bf16.gmra.mxu0 %v2645
      %v2780 = vpop.f32.mrf.mxu0
      %v2781 = vadd.f32 0.0, %v2780
      %v2782 = vpop.f32.mrf.mxu0
      %v2783 = vpop.f32.mrf.mxu0
      %v2784 = vadd.f32 0.0, %v2783
      %v2785 = vpop.f32.mrf.mxu0
      %2786 = vmatprep.mubr.bf16.mxu0 0
      %2787 = vmatmul.mubr.bf16.gmra.mxu0 %v2646
      %v2788 = vpop.f32.mrf.mxu0
      %v2789 = vadd.f32 0.0, %v2788
      %v2790 = vpop.f32.mrf.mxu0
      %v2791 = vpop.f32.mrf.mxu0
      %v2792 = vadd.f32 0.0, %v2791
      %v2793 = vpop.f32.mrf.mxu0
      %2794 = vmatprep.mubr.bf16.mxu0 0
      %2795 = vmatmul.mubr.bf16.gmra.mxu0 %v2647
      %v2796 = vpop.f32.mrf.mxu0
      %v2797 = vadd.f32 0.0, %v2796
      %v2798 = vpop.f32.mrf.mxu0
      %v2799 = vpop.f32.mrf.mxu0
      %v2800 = vadd.f32 0.0, %v2799
      %v2801 = vpop.f32.mrf.mxu0
      %2802 = vmatprep.mubr.bf16.mxu0 0
      %2803 = vmatmul.mubr.bf16.gmra.mxu0 %v2648
      %v2804 = vpop.f32.mrf.mxu0
      %v2805 = vadd.f32 0.0, %v2804
      %v2806 = vpop.f32.mrf.mxu0
      %v2807 = vpop.f32.mrf.mxu0
      %v2808 = vadd.f32 0.0, %v2807
      %v2809 = vpop.f32.mrf.mxu0
      %2810 = vdwg.mxu0
      %v2811 = vadd.f32 %v2563, %v2749
      %v2812 = vadd.f32 %v2566, %v2752
      %v2813 = vadd.f32 %v2571, %v2757
      %v2814 = vadd.f32 %v2574, %v2760
      %v2815 = vadd.f32 %v2579, %v2765
      %v2816 = vadd.f32 %v2582, %v2768
      %v2817 = vadd.f32 %v2587, %v2773
      %v2818 = vadd.f32 %v2590, %v2776
      %v2819 = vadd.f32 %v2595, %v2781
      %v2820 = vadd.f32 %v2598, %v2784
      %v2821 = vadd.f32 %v2603, %v2789
      %v2822 = vadd.f32 %v2606, %v2792
      %v2823 = vadd.f32 %v2611, %v2797
      %v2824 = vadd.f32 %v2614, %v2800
      %v2825 = vadd.f32 %v2619, %v2805
      %v2826 = vadd.f32 %v2622, %v2808
      %v2827 = vld [vmem:[%s2237] sm:$0xff]
      %v2828 = vld [vmem:[%s2237 + $0x10] sm:$0xff]
      %v2829 = vld [vmem:[%s2237 + $0x20] sm:$0xff]
      %v2830 = vld [vmem:[%s2237 + $0x30] sm:$0xff]
      %v2831 = vld [vmem:[%s2237 + $0x40] sm:$0xff]
      %v2832 = vld [vmem:[%s2237 + $0x50] sm:$0xff]
      %v2833 = vld [vmem:[%s2237 + $0x60] sm:$0xff]
      %v2834 = vld [vmem:[%s2237 + $0x70] sm:$0xff]
      %v2835 = vld [vmem:[%s2237 + $0xa0] sm:$0xff]
      %v2836 = vld [vmem:[%s2237 + $0xb0] sm:$0xff]
      %v2837 = vld [vmem:[%s2237 + $0xc0] sm:$0xff]
      %v2838 = vld [vmem:[%s2237 + $0xd0] sm:$0xff]
      %v2839 = vld [vmem:[%s2237 + $0xe0] sm:$0xff]
      %v2840 = vld [vmem:[%s2237 + $0xf0] sm:$0xff]
      %v2841 = vld [vmem:[%s2237 + $0x100] sm:$0xff]
      %v2842 = vld [vmem:[%s2237 + $0x110] sm:$0xff]
      %v2843 = vpack.c.bf16 %v2828, %v2827
      %v2844 = vpack.c.bf16 %v2830, %v2829
      %v2845 = vpack.c.bf16 %v2832, %v2831
      %v2846 = vpack.c.bf16 %v2834, %v2833
      %v2847 = vpack.c.bf16 %v2836, %v2835
      %v2848 = vpack.c.bf16 %v2838, %v2837
      %v2849 = vpack.c.bf16 %v2840, %v2839
      %v2850 = vpack.c.bf16 %v2842, %v2841
      %s2851 = scalar_lea.vmem %s3, 192
      %v2852 = vld [vmem:[%s2851] sm:$0xf]
      %v2853 = vld [vmem:[%s2851 + $0x4] sm:$0xf]
      %v2854 = vld [vmem:[%s2851 + $0x8] sm:$0xf]
      %v2855 = vld [vmem:[%s2851 + $0xc] sm:$0xf]
      %v2856 = vld [vmem:[%s2851 + $0x10] sm:$0xf]
      %v2857 = vld [vmem:[%s2851 + $0x14] sm:$0xf]
      %v2858 = vld [vmem:[%s2851 + $0x18] sm:$0xf]
      %v2859 = vld [vmem:[%s2851 + $0x1c] sm:$0xf]
      %v2860 = vld [vmem:[%s2851 + $0x20] sm:$0xf]
      %v2861 = vld [vmem:[%s2851 + $0x24] sm:$0xf]
      %v2862 = vld [vmem:[%s2851 + $0x28] sm:$0xf]
      %v2863 = vld [vmem:[%s2851 + $0x2c] sm:$0xf]
      %v2864 = vld [vmem:[%s2851 + $0x30] sm:$0xf]
      %v2865 = vld [vmem:[%s2851 + $0x34] sm:$0xf]
      %v2866 = vld [vmem:[%s2851 + $0x38] sm:$0xf]
      %v2867 = vld [vmem:[%s2851 + $0x3c] sm:$0xf]
      %v2884 = vunpack.c.l.b16 %v2852
      %v2885 = vunpack.c.l.b16 %v2853
      %v2886 = vunpack.c.l.b16 %v2854
      %v2887 = vunpack.c.l.b16 %v2855
      %v2888 = vunpack.c.l.b16 %v2856
      %v2889 = vunpack.c.l.b16 %v2857
      %v2890 = vunpack.c.l.b16 %v2858
      %v2891 = vunpack.c.l.b16 %v2859
      %v2892 = vunpack.c.l.b16 %v2860
      %v2893 = vunpack.c.l.b16 %v2861
      %v2894 = vunpack.c.l.b16 %v2862
      %v2895 = vunpack.c.l.b16 %v2863
      %v2896 = vunpack.c.l.b16 %v2864
      %v2897 = vunpack.c.l.b16 %v2865
      %v2898 = vunpack.c.l.b16 %v2866
      %v2899 = vunpack.c.l.b16 %v2867
      %v2900 = vpack.c.b16 %v2885, %v2884
      %v2901 = vpack.c.b16 %v2887, %v2886
      %v2902 = vpack.c.b16 %v2889, %v2888
      %v2903 = vpack.c.b16 %v2891, %v2890
      %v2904 = vpack.c.b16 %v2893, %v2892
      %v2905 = vpack.c.b16 %v2895, %v2894
      %v2906 = vpack.c.b16 %v2897, %v2896
      %v2907 = vpack.c.b16 %v2899, %v2898
      %2916 = vmatprep.subr.bf16.mxu0 0
      %2917 = vmatpush1.bf16.msra.mxu0 %v2907
      %2918 = vmatprep.subr.bf16.mxu0 0
      %2919 = vmatpush1.bf16.msra.mxu0 %v2906
      %2920 = vmatprep.subr.bf16.mxu0 0
      %2921 = vmatpush1.bf16.msra.mxu0 %v2905
      %2922 = vmatprep.subr.bf16.mxu0 0
      %2923 = vmatpush1.bf16.msra.mxu0 %v2904
      %2924 = vmatprep.subr.bf16.mxu0 0
      %2925 = vmatpush1.bf16.msra.mxu0 %v2903
      %2926 = vmatprep.subr.bf16.mxu0 0
      %2927 = vmatpush1.bf16.msra.mxu0 %v2902
      %2928 = vmatprep.subr.bf16.mxu0 0
      %2929 = vmatpush1.bf16.msra.mxu0 %v2901
      %2930 = vmatprep.subr.bf16.mxu0 0
      %2931 = vmatpush1.bf16.msra.mxu0 %v2900
      %2932 = vmatprep.subr.bf16.mxu0 0
      %2933 = vmatpush2.bf16.msra.mxu0 0
      %2934 = vmatprep.subr.bf16.mxu0 0
      %2935 = vmatpush2.bf16.msra.mxu0 0
      %2936 = vmatprep.subr.bf16.mxu0 0
      %2937 = vmatpush2.bf16.msra.mxu0 0
      %2938 = vmatprep.subr.bf16.mxu0 0
      %2939 = vmatpush2.bf16.msra.mxu0 0
      %2940 = vmatprep.subr.bf16.mxu0 0
      %2941 = vmatpush2.bf16.msra.mxu0 0
      %2942 = vmatprep.subr.bf16.mxu0 0
      %2943 = vmatpush2.bf16.msra.mxu0 0
      %2944 = vmatprep.subr.bf16.mxu0 0
      %2945 = vmatpush2.bf16.msra.mxu0 0
      %2946 = vmatprep.subr.bf16.mxu0 0
      %2947 = vmatpush2.bf16.msra.mxu0 0
      %2948 = vmatprep.mubr.bf16.mxu0 0
      %2949 = vmatmul.mubr.bf16.gmra.mxu0 %v2843
      %v2950 = vpop.f32.mrf.mxu0
      %v2951 = vadd.f32 0.0, %v2950
      %v2952 = vpop.f32.mrf.mxu0
      %v2953 = vpop.f32.mrf.mxu0
      %v2954 = vadd.f32 0.0, %v2953
      %v2955 = vpop.f32.mrf.mxu0
      %2956 = vmatprep.mubr.bf16.mxu0 0
      %2957 = vmatmul.mubr.bf16.gmra.mxu0 %v2844
      %v2958 = vpop.f32.mrf.mxu0
      %v2959 = vadd.f32 0.0, %v2958
      %v2960 = vpop.f32.mrf.mxu0
      %v2961 = vpop.f32.mrf.mxu0
      %v2962 = vadd.f32 0.0, %v2961
      %v2963 = vpop.f32.mrf.mxu0
      %2964 = vmatprep.mubr.bf16.mxu0 0
      %2965 = vmatmul.mubr.bf16.gmra.mxu0 %v2845
      %v2966 = vpop.f32.mrf.mxu0
      %v2967 = vadd.f32 0.0, %v2966
      %v2968 = vpop.f32.mrf.mxu0
      %v2969 = vpop.f32.mrf.mxu0
      %v2970 = vadd.f32 0.0, %v2969
      %v2971 = vpop.f32.mrf.mxu0
      %2972 = vmatprep.mubr.bf16.mxu0 0
      %2973 = vmatmul.mubr.bf16.gmra.mxu0 %v2846
      %v2974 = vpop.f32.mrf.mxu0
      %v2975 = vadd.f32 0.0, %v2974
      %v2976 = vpop.f32.mrf.mxu0
      %v2977 = vpop.f32.mrf.mxu0
      %v2978 = vadd.f32 0.0, %v2977
      %v2979 = vpop.f32.mrf.mxu0
      %2980 = vmatprep.mubr.bf16.mxu0 0
      %2981 = vmatmul.mubr.bf16.gmra.mxu0 %v2847
      %v2982 = vpop.f32.mrf.mxu0
      %v2983 = vadd.f32 0.0, %v2982
      %v2984 = vpop.f32.mrf.mxu0
      %v2985 = vpop.f32.mrf.mxu0
      %v2986 = vadd.f32 0.0, %v2985
      %v2987 = vpop.f32.mrf.mxu0
      %2988 = vmatprep.mubr.bf16.mxu0 0
      %2989 = vmatmul.mubr.bf16.gmra.mxu0 %v2848
      %v2990 = vpop.f32.mrf.mxu0
      %v2991 = vadd.f32 0.0, %v2990
      %v2992 = vpop.f32.mrf.mxu0
      %v2993 = vpop.f32.mrf.mxu0
      %v2994 = vadd.f32 0.0, %v2993
      %v2995 = vpop.f32.mrf.mxu0
      %2996 = vmatprep.mubr.bf16.mxu0 0
      %2997 = vmatmul.mubr.bf16.gmra.mxu0 %v2849
      %v2998 = vpop.f32.mrf.mxu0
      %v2999 = vadd.f32 0.0, %v2998
      %v3000 = vpop.f32.mrf.mxu0
      %v3001 = vpop.f32.mrf.mxu0
      %v3002 = vadd.f32 0.0, %v3001
      %v3003 = vpop.f32.mrf.mxu0
      %3004 = vmatprep.mubr.bf16.mxu0 0
      %3005 = vmatmul.mubr.bf16.gmra.mxu0 %v2850
      %v3006 = vpop.f32.mrf.mxu0
      %v3007 = vadd.f32 0.0, %v3006
      %v3008 = vpop.f32.mrf.mxu0
      %v3009 = vpop.f32.mrf.mxu0
      %v3010 = vadd.f32 0.0, %v3009
      %v3011 = vpop.f32.mrf.mxu0
      %3012 = vdwg.mxu0
      %v3013 = vadd.f32 %v2811, %v2951
      %v3014 = vadd.f32 %v2812, %v2954
      %v3015 = vadd.f32 %v2813, %v2959
      %v3016 = vadd.f32 %v2814, %v2962
      %v3017 = vadd.f32 %v2815, %v2967
      %v3018 = vadd.f32 %v2816, %v2970
      %v3019 = vadd.f32 %v2817, %v2975
      %v3020 = vadd.f32 %v2818, %v2978
      %v3021 = vadd.f32 %v2819, %v2983
      %v3022 = vadd.f32 %v2820, %v2986
      %v3023 = vadd.f32 %v2821, %v2991
      %v3024 = vadd.f32 %v2822, %v2994
      %v3025 = vadd.f32 %v2823, %v2999
      %v3026 = vadd.f32 %v2824, %v3002
      %v3027 = vadd.f32 %v2825, %v3007
      %v3028 = vadd.f32 %v2826, %v3010
      %v3029 = vld [vmem:[%s2237 + $0x1] sm:$0xff]
      %v3030 = vld [vmem:[%s2237 + $0x11] sm:$0xff]
      %v3031 = vld [vmem:[%s2237 + $0x21] sm:$0xff]
      %v3032 = vld [vmem:[%s2237 + $0x31] sm:$0xff]
      %v3033 = vld [vmem:[%s2237 + $0x41] sm:$0xff]
      %v3034 = vld [vmem:[%s2237 + $0x51] sm:$0xff]
      %v3035 = vld [vmem:[%s2237 + $0x61] sm:$0xff]
      %v3036 = vld [vmem:[%s2237 + $0x71] sm:$0xff]
      %v3037 = vld [vmem:[%s2237 + $0xa1] sm:$0xff]
      %v3038 = vld [vmem:[%s2237 + $0xb1] sm:$0xff]
      %v3039 = vld [vmem:[%s2237 + $0xc1] sm:$0xff]
      %v3040 = vld [vmem:[%s2237 + $0xd1] sm:$0xff]
      %v3041 = vld [vmem:[%s2237 + $0xe1] sm:$0xff]
      %v3042 = vld [vmem:[%s2237 + $0xf1] sm:$0xff]
      %v3043 = vld [vmem:[%s2237 + $0x101] sm:$0xff]
      %v3044 = vld [vmem:[%s2237 + $0x111] sm:$0xff]
      %v3045 = vpack.c.bf16 %v3030, %v3029
      %v3046 = vpack.c.bf16 %v3032, %v3031
      %v3047 = vpack.c.bf16 %v3034, %v3033
      %v3048 = vpack.c.bf16 %v3036, %v3035
      %v3049 = vpack.c.bf16 %v3038, %v3037
      %v3050 = vpack.c.bf16 %v3040, %v3039
      %v3051 = vpack.c.bf16 %v3042, %v3041
      %v3052 = vpack.c.bf16 %v3044, %v3043
      %s3053 = scalar_lea.vmem %s3, 256
      %v3054 = vld [vmem:[%s3053] sm:$0xf]
      %v3055 = vld [vmem:[%s3053 + $0x4] sm:$0xf]
      %v3056 = vld [vmem:[%s3053 + $0x8] sm:$0xf]
      %v3057 = vld [vmem:[%s3053 + $0xc] sm:$0xf]
      %v3058 = vld [vmem:[%s3053 + $0x10] sm:$0xf]
      %v3059 = vld [vmem:[%s3053 + $0x14] sm:$0xf]
      %v3060 = vld [vmem:[%s3053 + $0x18] sm:$0xf]
      %v3061 = vld [vmem:[%s3053 + $0x1c] sm:$0xf]
      %v3062 = vld [vmem:[%s3053 + $0x20] sm:$0xf]
      %v3063 = vld [vmem:[%s3053 + $0x24] sm:$0xf]
      %v3064 = vld [vmem:[%s3053 + $0x28] sm:$0xf]
      %v3065 = vld [vmem:[%s3053 + $0x2c] sm:$0xf]
      %v3066 = vld [vmem:[%s3053 + $0x30] sm:$0xf]
      %v3067 = vld [vmem:[%s3053 + $0x34] sm:$0xf]
      %v3068 = vld [vmem:[%s3053 + $0x38] sm:$0xf]
      %v3069 = vld [vmem:[%s3053 + $0x3c] sm:$0xf]
      %v3086 = vunpack.c.l.b16 %v3054
      %v3087 = vunpack.c.l.b16 %v3055
      %v3088 = vunpack.c.l.b16 %v3056
      %v3089 = vunpack.c.l.b16 %v3057
      %v3090 = vunpack.c.l.b16 %v3058
      %v3091 = vunpack.c.l.b16 %v3059
      %v3092 = vunpack.c.l.b16 %v3060
      %v3093 = vunpack.c.l.b16 %v3061
      %v3094 = vunpack.c.l.b16 %v3062
      %v3095 = vunpack.c.l.b16 %v3063
      %v3096 = vunpack.c.l.b16 %v3064
      %v3097 = vunpack.c.l.b16 %v3065
      %v3098 = vunpack.c.l.b16 %v3066
      %v3099 = vunpack.c.l.b16 %v3067
      %v3100 = vunpack.c.l.b16 %v3068
      %v3101 = vunpack.c.l.b16 %v3069
      %v3102 = vpack.c.b16 %v3087, %v3086
      %v3103 = vpack.c.b16 %v3089, %v3088
      %v3104 = vpack.c.b16 %v3091, %v3090
      %v3105 = vpack.c.b16 %v3093, %v3092
      %v3106 = vpack.c.b16 %v3095, %v3094
      %v3107 = vpack.c.b16 %v3097, %v3096
      %v3108 = vpack.c.b16 %v3099, %v3098
      %v3109 = vpack.c.b16 %v3101, %v3100
      %3118 = vmatprep.subr.bf16.mxu0 0
      %3119 = vmatpush1.bf16.msra.mxu0 %v3109
      %3120 = vmatprep.subr.bf16.mxu0 0
      %3121 = vmatpush1.bf16.msra.mxu0 %v3108
      %3122 = vmatprep.subr.bf16.mxu0 0
      %3123 = vmatpush1.bf16.msra.mxu0 %v3107
      %3124 = vmatprep.subr.bf16.mxu0 0
      %3125 = vmatpush1.bf16.msra.mxu0 %v3106
      %3126 = vmatprep.subr.bf16.mxu0 0
      %3127 = vmatpush1.bf16.msra.mxu0 %v3105
      %3128 = vmatprep.subr.bf16.mxu0 0
      %3129 = vmatpush1.bf16.msra.mxu0 %v3104
      %3130 = vmatprep.subr.bf16.mxu0 0
      %3131 = vmatpush1.bf16.msra.mxu0 %v3103
      %3132 = vmatprep.subr.bf16.mxu0 0
      %3133 = vmatpush1.bf16.msra.mxu0 %v3102
      %3134 = vmatprep.subr.bf16.mxu0 0
      %3135 = vmatpush2.bf16.msra.mxu0 0
      %3136 = vmatprep.subr.bf16.mxu0 0
      %3137 = vmatpush2.bf16.msra.mxu0 0
      %3138 = vmatprep.subr.bf16.mxu0 0
      %3139 = vmatpush2.bf16.msra.mxu0 0
      %3140 = vmatprep.subr.bf16.mxu0 0
      %3141 = vmatpush2.bf16.msra.mxu0 0
      %3142 = vmatprep.subr.bf16.mxu0 0
      %3143 = vmatpush2.bf16.msra.mxu0 0
      %3144 = vmatprep.subr.bf16.mxu0 0
      %3145 = vmatpush2.bf16.msra.mxu0 0
      %3146 = vmatprep.subr.bf16.mxu0 0
      %3147 = vmatpush2.bf16.msra.mxu0 0
      %3148 = vmatprep.subr.bf16.mxu0 0
      %3149 = vmatpush2.bf16.msra.mxu0 0
      %3150 = vmatprep.mubr.bf16.mxu0 0
      %3151 = vmatmul.mubr.bf16.gmra.mxu0 %v3045
      %v3152 = vpop.f32.mrf.mxu0
      %v3153 = vadd.f32 0.0, %v3152
      %v3154 = vpop.f32.mrf.mxu0
      %v3155 = vpop.f32.mrf.mxu0
      %v3156 = vadd.f32 0.0, %v3155
      %v3157 = vpop.f32.mrf.mxu0
      %3158 = vmatprep.mubr.bf16.mxu0 0
      %3159 = vmatmul.mubr.bf16.gmra.mxu0 %v3046
      %v3160 = vpop.f32.mrf.mxu0
      %v3161 = vadd.f32 0.0, %v3160
      %v3162 = vpop.f32.mrf.mxu0
      %v3163 = vpop.f32.mrf.mxu0
      %v3164 = vadd.f32 0.0, %v3163
      %v3165 = vpop.f32.mrf.mxu0
      %3166 = vmatprep.mubr.bf16.mxu0 0
      %3167 = vmatmul.mubr.bf16.gmra.mxu0 %v3047
      %v3168 = vpop.f32.mrf.mxu0
      %v3169 = vadd.f32 0.0, %v3168
      %v3170 = vpop.f32.mrf.mxu0
      %v3171 = vpop.f32.mrf.mxu0
      %v3172 = vadd.f32 0.0, %v3171
      %v3173 = vpop.f32.mrf.mxu0
      %3174 = vmatprep.mubr.bf16.mxu0 0
      %3175 = vmatmul.mubr.bf16.gmra.mxu0 %v3048
      %v3176 = vpop.f32.mrf.mxu0
      %v3177 = vadd.f32 0.0, %v3176
      %v3178 = vpop.f32.mrf.mxu0
      %v3179 = vpop.f32.mrf.mxu0
      %v3180 = vadd.f32 0.0, %v3179
      %v3181 = vpop.f32.mrf.mxu0
      %3182 = vmatprep.mubr.bf16.mxu0 0
      %3183 = vmatmul.mubr.bf16.gmra.mxu0 %v3049
      %v3184 = vpop.f32.mrf.mxu0
      %v3185 = vadd.f32 0.0, %v3184
      %v3186 = vpop.f32.mrf.mxu0
      %v3187 = vpop.f32.mrf.mxu0
      %v3188 = vadd.f32 0.0, %v3187
      %v3189 = vpop.f32.mrf.mxu0
      %3190 = vmatprep.mubr.bf16.mxu0 0
      %3191 = vmatmul.mubr.bf16.gmra.mxu0 %v3050
      %v3192 = vpop.f32.mrf.mxu0
      %v3193 = vadd.f32 0.0, %v3192
      %v3194 = vpop.f32.mrf.mxu0
      %v3195 = vpop.f32.mrf.mxu0
      %v3196 = vadd.f32 0.0, %v3195
      %v3197 = vpop.f32.mrf.mxu0
      %3198 = vmatprep.mubr.bf16.mxu0 0
      %3199 = vmatmul.mubr.bf16.gmra.mxu0 %v3051
      %v3200 = vpop.f32.mrf.mxu0
      %v3201 = vadd.f32 0.0, %v3200
      %v3202 = vpop.f32.mrf.mxu0
      %v3203 = vpop.f32.mrf.mxu0
      %v3204 = vadd.f32 0.0, %v3203
      %v3205 = vpop.f32.mrf.mxu0
      %3206 = vmatprep.mubr.bf16.mxu0 0
      %3207 = vmatmul.mubr.bf16.gmra.mxu0 %v3052
      %v3208 = vpop.f32.mrf.mxu0
      %v3209 = vadd.f32 0.0, %v3208
      %v3210 = vpop.f32.mrf.mxu0
      %v3211 = vpop.f32.mrf.mxu0
      %v3212 = vadd.f32 0.0, %v3211
      %v3213 = vpop.f32.mrf.mxu0
      %3214 = vdwg.mxu0
      %v3215 = vadd.f32 %v3013, %v3153
      %v3216 = vadd.f32 %v3014, %v3156
      %v3217 = vadd.f32 %v3015, %v3161
      %v3218 = vadd.f32 %v3016, %v3164
      %v3219 = vadd.f32 %v3017, %v3169
      %v3220 = vadd.f32 %v3018, %v3172
      %v3221 = vadd.f32 %v3019, %v3177
      %v3222 = vadd.f32 %v3020, %v3180
      %v3223 = vadd.f32 %v3021, %v3185
      %v3224 = vadd.f32 %v3022, %v3188
      %v3225 = vadd.f32 %v3023, %v3193
      %v3226 = vadd.f32 %v3024, %v3196
      %v3227 = vadd.f32 %v3025, %v3201
      %v3228 = vadd.f32 %v3026, %v3204
      %v3229 = vadd.f32 %v3027, %v3209
      %v3230 = vadd.f32 %v3028, %v3212
      %v3231 = vld [vmem:[%s2237 + $0x2] sm:$0xff]
      %v3232 = vld [vmem:[%s2237 + $0x12] sm:$0xff]
      %v3233 = vld [vmem:[%s2237 + $0x22] sm:$0xff]
      %v3234 = vld [vmem:[%s2237 + $0x32] sm:$0xff]
      %v3235 = vld [vmem:[%s2237 + $0x42] sm:$0xff]
      %v3236 = vld [vmem:[%s2237 + $0x52] sm:$0xff]
      %v3237 = vld [vmem:[%s2237 + $0x62] sm:$0xff]
      %v3238 = vld [vmem:[%s2237 + $0x72] sm:$0xff]
      %v3239 = vld [vmem:[%s2237 + $0xa2] sm:$0xff]
      %v3240 = vld [vmem:[%s2237 + $0xb2] sm:$0xff]
      %v3241 = vld [vmem:[%s2237 + $0xc2] sm:$0xff]
      %v3242 = vld [vmem:[%s2237 + $0xd2] sm:$0xff]
      %v3243 = vld [vmem:[%s2237 + $0xe2] sm:$0xff]
      %v3244 = vld [vmem:[%s2237 + $0xf2] sm:$0xff]
      %v3245 = vld [vmem:[%s2237 + $0x102] sm:$0xff]
      %v3246 = vld [vmem:[%s2237 + $0x112] sm:$0xff]
      %v3247 = vpack.c.bf16 %v3232, %v3231
      %v3248 = vpack.c.bf16 %v3234, %v3233
      %v3249 = vpack.c.bf16 %v3236, %v3235
      %v3250 = vpack.c.bf16 %v3238, %v3237
      %v3251 = vpack.c.bf16 %v3240, %v3239
      %v3252 = vpack.c.bf16 %v3242, %v3241
      %v3253 = vpack.c.bf16 %v3244, %v3243
      %v3254 = vpack.c.bf16 %v3246, %v3245
      %s3255 = scalar_lea.vmem %s3, 320
      %v3256 = vld [vmem:[%s3255] sm:$0xf]
      %v3257 = vld [vmem:[%s3255 + $0x4] sm:$0xf]
      %v3258 = vld [vmem:[%s3255 + $0x8] sm:$0xf]
      %v3259 = vld [vmem:[%s3255 + $0xc] sm:$0xf]
      %v3260 = vld [vmem:[%s3255 + $0x10] sm:$0xf]
      %v3261 = vld [vmem:[%s3255 + $0x14] sm:$0xf]
      %v3262 = vld [vmem:[%s3255 + $0x18] sm:$0xf]
      %v3263 = vld [vmem:[%s3255 + $0x1c] sm:$0xf]
      %v3264 = vld [vmem:[%s3255 + $0x20] sm:$0xf]
      %v3265 = vld [vmem:[%s3255 + $0x24] sm:$0xf]
      %v3266 = vld [vmem:[%s3255 + $0x28] sm:$0xf]
      %v3267 = vld [vmem:[%s3255 + $0x2c] sm:$0xf]
      %v3268 = vld [vmem:[%s3255 + $0x30] sm:$0xf]
      %v3269 = vld [vmem:[%s3255 + $0x34] sm:$0xf]
      %v3270 = vld [vmem:[%s3255 + $0x38] sm:$0xf]
      %v3271 = vld [vmem:[%s3255 + $0x3c] sm:$0xf]
      %v3288 = vunpack.c.l.b16 %v3256
      %v3289 = vunpack.c.l.b16 %v3257
      %v3290 = vunpack.c.l.b16 %v3258
      %v3291 = vunpack.c.l.b16 %v3259
      %v3292 = vunpack.c.l.b16 %v3260
      %v3293 = vunpack.c.l.b16 %v3261
      %v3294 = vunpack.c.l.b16 %v3262
      %v3295 = vunpack.c.l.b16 %v3263
      %v3296 = vunpack.c.l.b16 %v3264
      %v3297 = vunpack.c.l.b16 %v3265
      %v3298 = vunpack.c.l.b16 %v3266
      %v3299 = vunpack.c.l.b16 %v3267
      %v3300 = vunpack.c.l.b16 %v3268
      %v3301 = vunpack.c.l.b16 %v3269
      %v3302 = vunpack.c.l.b16 %v3270
      %v3303 = vunpack.c.l.b16 %v3271
      %v3304 = vpack.c.b16 %v3289, %v3288
      %v3305 = vpack.c.b16 %v3291, %v3290
      %v3306 = vpack.c.b16 %v3293, %v3292
      %v3307 = vpack.c.b16 %v3295, %v3294
      %v3308 = vpack.c.b16 %v3297, %v3296
      %v3309 = vpack.c.b16 %v3299, %v3298
      %v3310 = vpack.c.b16 %v3301, %v3300
      %v3311 = vpack.c.b16 %v3303, %v3302
      %3320 = vmatprep.subr.bf16.mxu0 0
      %3321 = vmatpush1.bf16.msra.mxu0 %v3311
      %3322 = vmatprep.subr.bf16.mxu0 0
      %3323 = vmatpush1.bf16.msra.mxu0 %v3310
      %3324 = vmatprep.subr.bf16.mxu0 0
      %3325 = vmatpush1.bf16.msra.mxu0 %v3309
      %3326 = vmatprep.subr.bf16.mxu0 0
      %3327 = vmatpush1.bf16.msra.mxu0 %v3308
      %3328 = vmatprep.subr.bf16.mxu0 0
      %3329 = vmatpush1.bf16.msra.mxu0 %v3307
      %3330 = vmatprep.subr.bf16.mxu0 0
      %3331 = vmatpush1.bf16.msra.mxu0 %v3306
      %3332 = vmatprep.subr.bf16.mxu0 0
      %3333 = vmatpush1.bf16.msra.mxu0 %v3305
      %3334 = vmatprep.subr.bf16.mxu0 0
      %3335 = vmatpush1.bf16.msra.mxu0 %v3304
      %3336 = vmatprep.subr.bf16.mxu0 0
      %3337 = vmatpush2.bf16.msra.mxu0 0
      %3338 = vmatprep.subr.bf16.mxu0 0
      %3339 = vmatpush2.bf16.msra.mxu0 0
      %3340 = vmatprep.subr.bf16.mxu0 0
      %3341 = vmatpush2.bf16.msra.mxu0 0
      %3342 = vmatprep.subr.bf16.mxu0 0
      %3343 = vmatpush2.bf16.msra.mxu0 0
      %3344 = vmatprep.subr.bf16.mxu0 0
      %3345 = vmatpush2.bf16.msra.mxu0 0
      %3346 = vmatprep.subr.bf16.mxu0 0
      %3347 = vmatpush2.bf16.msra.mxu0 0
      %3348 = vmatprep.subr.bf16.mxu0 0
      %3349 = vmatpush2.bf16.msra.mxu0 0
      %3350 = vmatprep.subr.bf16.mxu0 0
      %3351 = vmatpush2.bf16.msra.mxu0 0
      %3352 = vmatprep.mubr.bf16.mxu0 0
      %3353 = vmatmul.mubr.bf16.gmra.mxu0 %v3247
      %v3354 = vpop.f32.mrf.mxu0
      %v3355 = vadd.f32 0.0, %v3354
      %v3356 = vpop.f32.mrf.mxu0
      %v3357 = vpop.f32.mrf.mxu0
      %v3358 = vadd.f32 0.0, %v3357
      %v3359 = vpop.f32.mrf.mxu0
      %3360 = vmatprep.mubr.bf16.mxu0 0
      %3361 = vmatmul.mubr.bf16.gmra.mxu0 %v3248
      %v3362 = vpop.f32.mrf.mxu0
      %v3363 = vadd.f32 0.0, %v3362
      %v3364 = vpop.f32.mrf.mxu0
      %v3365 = vpop.f32.mrf.mxu0
      %v3366 = vadd.f32 0.0, %v3365
      %v3367 = vpop.f32.mrf.mxu0
      %3368 = vmatprep.mubr.bf16.mxu0 0
      %3369 = vmatmul.mubr.bf16.gmra.mxu0 %v3249
      %v3370 = vpop.f32.mrf.mxu0
      %v3371 = vadd.f32 0.0, %v3370
      %v3372 = vpop.f32.mrf.mxu0
      %v3373 = vpop.f32.mrf.mxu0
      %v3374 = vadd.f32 0.0, %v3373
      %v3375 = vpop.f32.mrf.mxu0
      %3376 = vmatprep.mubr.bf16.mxu0 0
      %3377 = vmatmul.mubr.bf16.gmra.mxu0 %v3250
      %v3378 = vpop.f32.mrf.mxu0
      %v3379 = vadd.f32 0.0, %v3378
      %v3380 = vpop.f32.mrf.mxu0
      %v3381 = vpop.f32.mrf.mxu0
      %v3382 = vadd.f32 0.0, %v3381
      %v3383 = vpop.f32.mrf.mxu0
      %3384 = vmatprep.mubr.bf16.mxu0 0
      %3385 = vmatmul.mubr.bf16.gmra.mxu0 %v3251
      %v3386 = vpop.f32.mrf.mxu0
      %v3387 = vadd.f32 0.0, %v3386
      %v3388 = vpop.f32.mrf.mxu0
      %v3389 = vpop.f32.mrf.mxu0
      %v3390 = vadd.f32 0.0, %v3389
      %v3391 = vpop.f32.mrf.mxu0
      %3392 = vmatprep.mubr.bf16.mxu0 0
      %3393 = vmatmul.mubr.bf16.gmra.mxu0 %v3252
      %v3394 = vpop.f32.mrf.mxu0
      %v3395 = vadd.f32 0.0, %v3394
      %v3396 = vpop.f32.mrf.mxu0
      %v3397 = vpop.f32.mrf.mxu0
      %v3398 = vadd.f32 0.0, %v3397
      %v3399 = vpop.f32.mrf.mxu0
      %3400 = vmatprep.mubr.bf16.mxu0 0
      %3401 = vmatmul.mubr.bf16.gmra.mxu0 %v3253
      %v3402 = vpop.f32.mrf.mxu0
      %v3403 = vadd.f32 0.0, %v3402
      %v3404 = vpop.f32.mrf.mxu0
      %v3405 = vpop.f32.mrf.mxu0
      %v3406 = vadd.f32 0.0, %v3405
      %v3407 = vpop.f32.mrf.mxu0
      %3408 = vmatprep.mubr.bf16.mxu0 0
      %3409 = vmatmul.mubr.bf16.gmra.mxu0 %v3254
      %v3410 = vpop.f32.mrf.mxu0
      %v3411 = vadd.f32 0.0, %v3410
      %v3412 = vpop.f32.mrf.mxu0
      %v3413 = vpop.f32.mrf.mxu0
      %v3414 = vadd.f32 0.0, %v3413
      %v3415 = vpop.f32.mrf.mxu0
      %3416 = vdwg.mxu0
      %v3417 = vadd.f32 %v3215, %v3355
      %v3418 = vadd.f32 %v3216, %v3358
      %v3419 = vadd.f32 %v3217, %v3363
      %v3420 = vadd.f32 %v3218, %v3366
      %v3421 = vadd.f32 %v3219, %v3371
      %v3422 = vadd.f32 %v3220, %v3374
      %v3423 = vadd.f32 %v3221, %v3379
      %v3424 = vadd.f32 %v3222, %v3382
      %v3425 = vadd.f32 %v3223, %v3387
      %v3426 = vadd.f32 %v3224, %v3390
      %v3427 = vadd.f32 %v3225, %v3395
      %v3428 = vadd.f32 %v3226, %v3398
      %v3429 = vadd.f32 %v3227, %v3403
      %v3430 = vadd.f32 %v3228, %v3406
      %v3431 = vadd.f32 %v3229, %v3411
      %v3432 = vadd.f32 %v3230, %v3414
      %s3433 = scalar_lea.vmem [#allocation3], 32
      %v3434 = vld [vmem:[%s3433] sm:$0xff]
      %v3435 = vld [vmem:[%s3433 + $0x10] sm:$0xff]
      %v3436 = vld [vmem:[%s3433 + $0x20] sm:$0xff]
      %v3437 = vld [vmem:[%s3433 + $0x30] sm:$0xff]
      %v3438 = vld [vmem:[%s3433 + $0x40] sm:$0xff]
      %v3439 = vld [vmem:[%s3433 + $0x50] sm:$0xff]
      %v3440 = vld [vmem:[%s3433 + $0x60] sm:$0xff]
      %v3441 = vld [vmem:[%s3433 + $0x70] sm:$0xff]
      %v3442 = vld [vmem:[%s3433 + $0xa0] sm:$0xff]
      %v3443 = vld [vmem:[%s3433 + $0xb0] sm:$0xff]
      %v3444 = vld [vmem:[%s3433 + $0xc0] sm:$0xff]
      %v3445 = vld [vmem:[%s3433 + $0xd0] sm:$0xff]
      %v3446 = vld [vmem:[%s3433 + $0xe0] sm:$0xff]
      %v3447 = vld [vmem:[%s3433 + $0xf0] sm:$0xff]
      %v3448 = vld [vmem:[%s3433 + $0x100] sm:$0xff]
      %v3449 = vld [vmem:[%s3433 + $0x110] sm:$0xff]
      %v3450 = vpack.c.bf16 %v3435, %v3434
      %v3451 = vpack.c.bf16 %v3437, %v3436
      %v3452 = vpack.c.bf16 %v3439, %v3438
      %v3453 = vpack.c.bf16 %v3441, %v3440
      %v3454 = vpack.c.bf16 %v3443, %v3442
      %v3455 = vpack.c.bf16 %v3445, %v3444
      %v3456 = vpack.c.bf16 %v3447, %v3446
      %v3457 = vpack.c.bf16 %v3449, %v3448
      %s3458 = scalar_lea.vmem %s3, 384
      %v3459 = vld [vmem:[%s3458] sm:$0xf]
      %v3460 = vld [vmem:[%s3458 + $0x4] sm:$0xf]
      %v3461 = vld [vmem:[%s3458 + $0x8] sm:$0xf]
      %v3462 = vld [vmem:[%s3458 + $0xc] sm:$0xf]
      %v3463 = vld [vmem:[%s3458 + $0x10] sm:$0xf]
      %v3464 = vld [vmem:[%s3458 + $0x14] sm:$0xf]
      %v3465 = vld [vmem:[%s3458 + $0x18] sm:$0xf]
      %v3466 = vld [vmem:[%s3458 + $0x1c] sm:$0xf]
      %v3467 = vld [vmem:[%s3458 + $0x20] sm:$0xf]
      %v3468 = vld [vmem:[%s3458 + $0x24] sm:$0xf]
      %v3469 = vld [vmem:[%s3458 + $0x28] sm:$0xf]
      %v3470 = vld [vmem:[%s3458 + $0x2c] sm:$0xf]
      %v3471 = vld [vmem:[%s3458 + $0x30] sm:$0xf]
      %v3472 = vld [vmem:[%s3458 + $0x34] sm:$0xf]
      %v3473 = vld [vmem:[%s3458 + $0x38] sm:$0xf]
      %v3474 = vld [vmem:[%s3458 + $0x3c] sm:$0xf]
      %v3491 = vunpack.c.l.b16 %v3459
      %v3492 = vunpack.c.l.b16 %v3460
      %v3493 = vunpack.c.l.b16 %v3461
      %v3494 = vunpack.c.l.b16 %v3462
      %v3495 = vunpack.c.l.b16 %v3463
      %v3496 = vunpack.c.l.b16 %v3464
      %v3497 = vunpack.c.l.b16 %v3465
      %v3498 = vunpack.c.l.b16 %v3466
      %v3499 = vunpack.c.l.b16 %v3467
      %v3500 = vunpack.c.l.b16 %v3468
      %v3501 = vunpack.c.l.b16 %v3469
      %v3502 = vunpack.c.l.b16 %v3470
      %v3503 = vunpack.c.l.b16 %v3471
      %v3504 = vunpack.c.l.b16 %v3472
      %v3505 = vunpack.c.l.b16 %v3473
      %v3506 = vunpack.c.l.b16 %v3474
      %v3507 = vpack.c.b16 %v3492, %v3491
      %v3508 = vpack.c.b16 %v3494, %v3493
      %v3509 = vpack.c.b16 %v3496, %v3495
      %v3510 = vpack.c.b16 %v3498, %v3497
      %v3511 = vpack.c.b16 %v3500, %v3499
      %v3512 = vpack.c.b16 %v3502, %v3501
      %v3513 = vpack.c.b16 %v3504, %v3503
      %v3514 = vpack.c.b16 %v3506, %v3505
      %3523 = vmatprep.subr.bf16.mxu0 0
      %3524 = vmatpush1.bf16.msra.mxu0 %v3514
      %3525 = vmatprep.subr.bf16.mxu0 0
      %3526 = vmatpush1.bf16.msra.mxu0 %v3513
      %3527 = vmatprep.subr.bf16.mxu0 0
      %3528 = vmatpush1.bf16.msra.mxu0 %v3512
      %3529 = vmatprep.subr.bf16.mxu0 0
      %3530 = vmatpush1.bf16.msra.mxu0 %v3511
      %3531 = vmatprep.subr.bf16.mxu0 0
      %3532 = vmatpush1.bf16.msra.mxu0 %v3510
      %3533 = vmatprep.subr.bf16.mxu0 0
      %3534 = vmatpush1.bf16.msra.mxu0 %v3509
      %3535 = vmatprep.subr.bf16.mxu0 0
      %3536 = vmatpush1.bf16.msra.mxu0 %v3508
      %3537 = vmatprep.subr.bf16.mxu0 0
      %3538 = vmatpush1.bf16.msra.mxu0 %v3507
      %3539 = vmatprep.subr.bf16.mxu0 0
      %3540 = vmatpush2.bf16.msra.mxu0 0
      %3541 = vmatprep.subr.bf16.mxu0 0
      %3542 = vmatpush2.bf16.msra.mxu0 0
      %3543 = vmatprep.subr.bf16.mxu0 0
      %3544 = vmatpush2.bf16.msra.mxu0 0
      %3545 = vmatprep.subr.bf16.mxu0 0
      %3546 = vmatpush2.bf16.msra.mxu0 0
      %3547 = vmatprep.subr.bf16.mxu0 0
      %3548 = vmatpush2.bf16.msra.mxu0 0
      %3549 = vmatprep.subr.bf16.mxu0 0
      %3550 = vmatpush2.bf16.msra.mxu0 0
      %3551 = vmatprep.subr.bf16.mxu0 0
      %3552 = vmatpush2.bf16.msra.mxu0 0
      %3553 = vmatprep.subr.bf16.mxu0 0
      %3554 = vmatpush2.bf16.msra.mxu0 0
      %3555 = vmatprep.mubr.bf16.mxu0 0
      %3556 = vmatmul.mubr.bf16.gmra.mxu0 %v3450
      %v3557 = vpop.f32.mrf.mxu0
      %v3558 = vadd.f32 0.0, %v3557
      %v3559 = vpop.f32.mrf.mxu0
      %v3560 = vpop.f32.mrf.mxu0
      %v3561 = vadd.f32 0.0, %v3560
      %v3562 = vpop.f32.mrf.mxu0
      %3563 = vmatprep.mubr.bf16.mxu0 0
      %3564 = vmatmul.mubr.bf16.gmra.mxu0 %v3451
      %v3565 = vpop.f32.mrf.mxu0
      %v3566 = vadd.f32 0.0, %v3565
      %v3567 = vpop.f32.mrf.mxu0
      %v3568 = vpop.f32.mrf.mxu0
      %v3569 = vadd.f32 0.0, %v3568
      %v3570 = vpop.f32.mrf.mxu0
      %3571 = vmatprep.mubr.bf16.mxu0 0
      %3572 = vmatmul.mubr.bf16.gmra.mxu0 %v3452
      %v3573 = vpop.f32.mrf.mxu0
      %v3574 = vadd.f32 0.0, %v3573
      %v3575 = vpop.f32.mrf.mxu0
      %v3576 = vpop.f32.mrf.mxu0
      %v3577 = vadd.f32 0.0, %v3576
      %v3578 = vpop.f32.mrf.mxu0
      %3579 = vmatprep.mubr.bf16.mxu0 0
      %3580 = vmatmul.mubr.bf16.gmra.mxu0 %v3453
      %v3581 = vpop.f32.mrf.mxu0
      %v3582 = vadd.f32 0.0, %v3581
      %v3583 = vpop.f32.mrf.mxu0
      %v3584 = vpop.f32.mrf.mxu0
      %v3585 = vadd.f32 0.0, %v3584
      %v3586 = vpop.f32.mrf.mxu0
      %3587 = vmatprep.mubr.bf16.mxu0 0
      %3588 = vmatmul.mubr.bf16.gmra.mxu0 %v3454
      %v3589 = vpop.f32.mrf.mxu0
      %v3590 = vadd.f32 0.0, %v3589
      %v3591 = vpop.f32.mrf.mxu0
      %v3592 = vpop.f32.mrf.mxu0
      %v3593 = vadd.f32 0.0, %v3592
      %v3594 = vpop.f32.mrf.mxu0
      %3595 = vmatprep.mubr.bf16.mxu0 0
      %3596 = vmatmul.mubr.bf16.gmra.mxu0 %v3455
      %v3597 = vpop.f32.mrf.mxu0
      %v3598 = vadd.f32 0.0, %v3597
      %v3599 = vpop.f32.mrf.mxu0
      %v3600 = vpop.f32.mrf.mxu0
      %v3601 = vadd.f32 0.0, %v3600
      %v3602 = vpop.f32.mrf.mxu0
      %3603 = vmatprep.mubr.bf16.mxu0 0
      %3604 = vmatmul.mubr.bf16.gmra.mxu0 %v3456
      %v3605 = vpop.f32.mrf.mxu0
      %v3606 = vadd.f32 0.0, %v3605
      %v3607 = vpop.f32.mrf.mxu0
      %v3608 = vpop.f32.mrf.mxu0
      %v3609 = vadd.f32 0.0, %v3608
      %v3610 = vpop.f32.mrf.mxu0
      %3611 = vmatprep.mubr.bf16.mxu0 0
      %3612 = vmatmul.mubr.bf16.gmra.mxu0 %v3457
      %v3613 = vpop.f32.mrf.mxu0
      %v3614 = vadd.f32 0.0, %v3613
      %v3615 = vpop.f32.mrf.mxu0
      %v3616 = vpop.f32.mrf.mxu0
      %v3617 = vadd.f32 0.0, %v3616
      %v3618 = vpop.f32.mrf.mxu0
      %3619 = vdwg.mxu0
      %v3620 = vadd.f32 %v3417, %v3558
      %v3621 = vadd.f32 %v3418, %v3561
      %v3622 = vadd.f32 %v3419, %v3566
      %v3623 = vadd.f32 %v3420, %v3569
      %v3624 = vadd.f32 %v3421, %v3574
      %v3625 = vadd.f32 %v3422, %v3577
      %v3626 = vadd.f32 %v3423, %v3582
      %v3627 = vadd.f32 %v3424, %v3585
      %v3628 = vadd.f32 %v3425, %v3590
      %v3629 = vadd.f32 %v3426, %v3593
      %v3630 = vadd.f32 %v3427, %v3598
      %v3631 = vadd.f32 %v3428, %v3601
      %v3632 = vadd.f32 %v3429, %v3606
      %v3633 = vadd.f32 %v3430, %v3609
      %v3634 = vadd.f32 %v3431, %v3614
      %v3635 = vadd.f32 %v3432, %v3617
      %v3636 = vld [vmem:[%s3433 + $0x1] sm:$0xff]
      %v3637 = vld [vmem:[%s3433 + $0x11] sm:$0xff]
      %v3638 = vld [vmem:[%s3433 + $0x21] sm:$0xff]
      %v3639 = vld [vmem:[%s3433 + $0x31] sm:$0xff]
      %v3640 = vld [vmem:[%s3433 + $0x41] sm:$0xff]
      %v3641 = vld [vmem:[%s3433 + $0x51] sm:$0xff]
      %v3642 = vld [vmem:[%s3433 + $0x61] sm:$0xff]
      %v3643 = vld [vmem:[%s3433 + $0x71] sm:$0xff]
      %v3644 = vld [vmem:[%s3433 + $0xa1] sm:$0xff]
      %v3645 = vld [vmem:[%s3433 + $0xb1] sm:$0xff]
      %v3646 = vld [vmem:[%s3433 + $0xc1] sm:$0xff]
      %v3647 = vld [vmem:[%s3433 + $0xd1] sm:$0xff]
      %v3648 = vld [vmem:[%s3433 + $0xe1] sm:$0xff]
      %v3649 = vld [vmem:[%s3433 + $0xf1] sm:$0xff]
      %v3650 = vld [vmem:[%s3433 + $0x101] sm:$0xff]
      %v3651 = vld [vmem:[%s3433 + $0x111] sm:$0xff]
      %v3652 = vpack.c.bf16 %v3637, %v3636
      %v3653 = vpack.c.bf16 %v3639, %v3638
      %v3654 = vpack.c.bf16 %v3641, %v3640
      %v3655 = vpack.c.bf16 %v3643, %v3642
      %v3656 = vpack.c.bf16 %v3645, %v3644
      %v3657 = vpack.c.bf16 %v3647, %v3646
      %v3658 = vpack.c.bf16 %v3649, %v3648
      %v3659 = vpack.c.bf16 %v3651, %v3650
      %s3660 = scalar_lea.vmem %s3, 448
      %v3661 = vld [vmem:[%s3660] sm:$0xf]
      %v3662 = vld [vmem:[%s3660 + $0x4] sm:$0xf]
      %v3663 = vld [vmem:[%s3660 + $0x8] sm:$0xf]
      %v3664 = vld [vmem:[%s3660 + $0xc] sm:$0xf]
      %v3665 = vld [vmem:[%s3660 + $0x10] sm:$0xf]
      %v3666 = vld [vmem:[%s3660 + $0x14] sm:$0xf]
      %v3667 = vld [vmem:[%s3660 + $0x18] sm:$0xf]
      %v3668 = vld [vmem:[%s3660 + $0x1c] sm:$0xf]
      %v3669 = vld [vmem:[%s3660 + $0x20] sm:$0xf]
      %v3670 = vld [vmem:[%s3660 + $0x24] sm:$0xf]
      %v3671 = vld [vmem:[%s3660 + $0x28] sm:$0xf]
      %v3672 = vld [vmem:[%s3660 + $0x2c] sm:$0xf]
      %v3673 = vld [vmem:[%s3660 + $0x30] sm:$0xf]
      %v3674 = vld [vmem:[%s3660 + $0x34] sm:$0xf]
      %v3675 = vld [vmem:[%s3660 + $0x38] sm:$0xf]
      %v3676 = vld [vmem:[%s3660 + $0x3c] sm:$0xf]
      %v3693 = vunpack.c.l.b16 %v3661
      %v3694 = vunpack.c.l.b16 %v3662
      %v3695 = vunpack.c.l.b16 %v3663
      %v3696 = vunpack.c.l.b16 %v3664
      %v3697 = vunpack.c.l.b16 %v3665
      %v3698 = vunpack.c.l.b16 %v3666
      %v3699 = vunpack.c.l.b16 %v3667
      %v3700 = vunpack.c.l.b16 %v3668
      %v3701 = vunpack.c.l.b16 %v3669
      %v3702 = vunpack.c.l.b16 %v3670
      %v3703 = vunpack.c.l.b16 %v3671
      %v3704 = vunpack.c.l.b16 %v3672
      %v3705 = vunpack.c.l.b16 %v3673
      %v3706 = vunpack.c.l.b16 %v3674
      %v3707 = vunpack.c.l.b16 %v3675
      %v3708 = vunpack.c.l.b16 %v3676
      %v3709 = vpack.c.b16 %v3694, %v3693
      %v3710 = vpack.c.b16 %v3696, %v3695
      %v3711 = vpack.c.b16 %v3698, %v3697
      %v3712 = vpack.c.b16 %v3700, %v3699
      %v3713 = vpack.c.b16 %v3702, %v3701
      %v3714 = vpack.c.b16 %v3704, %v3703
      %v3715 = vpack.c.b16 %v3706, %v3705
      %v3716 = vpack.c.b16 %v3708, %v3707
      %3725 = vmatprep.subr.bf16.mxu0 0
      %3726 = vmatpush1.bf16.msra.mxu0 %v3716
      %3727 = vmatprep.subr.bf16.mxu0 0
      %3728 = vmatpush1.bf16.msra.mxu0 %v3715
      %3729 = vmatprep.subr.bf16.mxu0 0
      %3730 = vmatpush1.bf16.msra.mxu0 %v3714
      %3731 = vmatprep.subr.bf16.mxu0 0
      %3732 = vmatpush1.bf16.msra.mxu0 %v3713
      %3733 = vmatprep.subr.bf16.mxu0 0
      %3734 = vmatpush1.bf16.msra.mxu0 %v3712
      %3735 = vmatprep.subr.bf16.mxu0 0
      %3736 = vmatpush1.bf16.msra.mxu0 %v3711
      %3737 = vmatprep.subr.bf16.mxu0 0
      %3738 = vmatpush1.bf16.msra.mxu0 %v3710
      %3739 = vmatprep.subr.bf16.mxu0 0
      %3740 = vmatpush1.bf16.msra.mxu0 %v3709
      %3741 = vmatprep.subr.bf16.mxu0 0
      %3742 = vmatpush2.bf16.msra.mxu0 0
      %3743 = vmatprep.subr.bf16.mxu0 0
      %3744 = vmatpush2.bf16.msra.mxu0 0
      %3745 = vmatprep.subr.bf16.mxu0 0
      %3746 = vmatpush2.bf16.msra.mxu0 0
      %3747 = vmatprep.subr.bf16.mxu0 0
      %3748 = vmatpush2.bf16.msra.mxu0 0
      %3749 = vmatprep.subr.bf16.mxu0 0
      %3750 = vmatpush2.bf16.msra.mxu0 0
      %3751 = vmatprep.subr.bf16.mxu0 0
      %3752 = vmatpush2.bf16.msra.mxu0 0
      %3753 = vmatprep.subr.bf16.mxu0 0
      %3754 = vmatpush2.bf16.msra.mxu0 0
      %3755 = vmatprep.subr.bf16.mxu0 0
      %3756 = vmatpush2.bf16.msra.mxu0 0
      %3757 = vmatprep.mubr.bf16.mxu0 0
      %3758 = vmatmul.mubr.bf16.gmra.mxu0 %v3652
      %v3759 = vpop.f32.mrf.mxu0
      %v3760 = vadd.f32 0.0, %v3759
      %v3761 = vpop.f32.mrf.mxu0
      %v3762 = vpop.f32.mrf.mxu0
      %v3763 = vadd.f32 0.0, %v3762
      %v3764 = vpop.f32.mrf.mxu0
      %3765 = vmatprep.mubr.bf16.mxu0 0
      %3766 = vmatmul.mubr.bf16.gmra.mxu0 %v3653
      %v3767 = vpop.f32.mrf.mxu0
      %v3768 = vadd.f32 0.0, %v3767
      %v3769 = vpop.f32.mrf.mxu0
      %v3770 = vpop.f32.mrf.mxu0
      %v3771 = vadd.f32 0.0, %v3770
      %v3772 = vpop.f32.mrf.mxu0
      %3773 = vmatprep.mubr.bf16.mxu0 0
      %3774 = vmatmul.mubr.bf16.gmra.mxu0 %v3654
      %v3775 = vpop.f32.mrf.mxu0
      %v3776 = vadd.f32 0.0, %v3775
      %v3777 = vpop.f32.mrf.mxu0
      %v3778 = vpop.f32.mrf.mxu0
      %v3779 = vadd.f32 0.0, %v3778
      %v3780 = vpop.f32.mrf.mxu0
      %3781 = vmatprep.mubr.bf16.mxu0 0
      %3782 = vmatmul.mubr.bf16.gmra.mxu0 %v3655
      %v3783 = vpop.f32.mrf.mxu0
      %v3784 = vadd.f32 0.0, %v3783
      %v3785 = vpop.f32.mrf.mxu0
      %v3786 = vpop.f32.mrf.mxu0
      %v3787 = vadd.f32 0.0, %v3786
      %v3788 = vpop.f32.mrf.mxu0
      %3789 = vmatprep.mubr.bf16.mxu0 0
      %3790 = vmatmul.mubr.bf16.gmra.mxu0 %v3656
      %v3791 = vpop.f32.mrf.mxu0
      %v3792 = vadd.f32 0.0, %v3791
      %v3793 = vpop.f32.mrf.mxu0
      %v3794 = vpop.f32.mrf.mxu0
      %v3795 = vadd.f32 0.0, %v3794
      %v3796 = vpop.f32.mrf.mxu0
      %3797 = vmatprep.mubr.bf16.mxu0 0
      %3798 = vmatmul.mubr.bf16.gmra.mxu0 %v3657
      %v3799 = vpop.f32.mrf.mxu0
      %v3800 = vadd.f32 0.0, %v3799
      %v3801 = vpop.f32.mrf.mxu0
      %v3802 = vpop.f32.mrf.mxu0
      %v3803 = vadd.f32 0.0, %v3802
      %v3804 = vpop.f32.mrf.mxu0
      %3805 = vmatprep.mubr.bf16.mxu0 0
      %3806 = vmatmul.mubr.bf16.gmra.mxu0 %v3658
      %v3807 = vpop.f32.mrf.mxu0
      %v3808 = vadd.f32 0.0, %v3807
      %v3809 = vpop.f32.mrf.mxu0
      %v3810 = vpop.f32.mrf.mxu0
      %v3811 = vadd.f32 0.0, %v3810
      %v3812 = vpop.f32.mrf.mxu0
      %3813 = vmatprep.mubr.bf16.mxu0 0
      %3814 = vmatmul.mubr.bf16.gmra.mxu0 %v3659
      %v3815 = vpop.f32.mrf.mxu0
      %v3816 = vadd.f32 0.0, %v3815
      %v3817 = vpop.f32.mrf.mxu0
      %v3818 = vpop.f32.mrf.mxu0
      %v3819 = vadd.f32 0.0, %v3818
      %v3820 = vpop.f32.mrf.mxu0
      %3821 = vdwg.mxu0
      %v3822 = vadd.f32 %v3620, %v3760
      %v3823 = vadd.f32 %v3621, %v3763
      %v3824 = vadd.f32 %v3622, %v3768
      %v3825 = vadd.f32 %v3623, %v3771
      %v3826 = vadd.f32 %v3624, %v3776
      %v3827 = vadd.f32 %v3625, %v3779
      %v3828 = vadd.f32 %v3626, %v3784
      %v3829 = vadd.f32 %v3627, %v3787
      %v3830 = vadd.f32 %v3628, %v3792
      %v3831 = vadd.f32 %v3629, %v3795
      %v3832 = vadd.f32 %v3630, %v3800
      %v3833 = vadd.f32 %v3631, %v3803
      %v3834 = vadd.f32 %v3632, %v3808
      %v3835 = vadd.f32 %v3633, %v3811
      %v3836 = vadd.f32 %v3634, %v3816
      %v3837 = vadd.f32 %v3635, %v3819
      %v3838 = vld [vmem:[%s3433 + $0x2] sm:$0xff]
      %v3839 = vld [vmem:[%s3433 + $0x12] sm:$0xff]
      %v3840 = vld [vmem:[%s3433 + $0x22] sm:$0xff]
      %v3841 = vld [vmem:[%s3433 + $0x32] sm:$0xff]
      %v3842 = vld [vmem:[%s3433 + $0x42] sm:$0xff]
      %v3843 = vld [vmem:[%s3433 + $0x52] sm:$0xff]
      %v3844 = vld [vmem:[%s3433 + $0x62] sm:$0xff]
      %v3845 = vld [vmem:[%s3433 + $0x72] sm:$0xff]
      %v3846 = vld [vmem:[%s3433 + $0xa2] sm:$0xff]
      %v3847 = vld [vmem:[%s3433 + $0xb2] sm:$0xff]
      %v3848 = vld [vmem:[%s3433 + $0xc2] sm:$0xff]
      %v3849 = vld [vmem:[%s3433 + $0xd2] sm:$0xff]
      %v3850 = vld [vmem:[%s3433 + $0xe2] sm:$0xff]
      %v3851 = vld [vmem:[%s3433 + $0xf2] sm:$0xff]
      %v3852 = vld [vmem:[%s3433 + $0x102] sm:$0xff]
      %v3853 = vld [vmem:[%s3433 + $0x112] sm:$0xff]
      %v3854 = vpack.c.bf16 %v3839, %v3838
      %v3855 = vpack.c.bf16 %v3841, %v3840
      %v3856 = vpack.c.bf16 %v3843, %v3842
      %v3857 = vpack.c.bf16 %v3845, %v3844
      %v3858 = vpack.c.bf16 %v3847, %v3846
      %v3859 = vpack.c.bf16 %v3849, %v3848
      %v3860 = vpack.c.bf16 %v3851, %v3850
      %v3861 = vpack.c.bf16 %v3853, %v3852
      %s3862 = scalar_lea.vmem %s3, 512
      %v3863 = vld [vmem:[%s3862] sm:$0xf]
      %v3864 = vld [vmem:[%s3862 + $0x4] sm:$0xf]
      %v3865 = vld [vmem:[%s3862 + $0x8] sm:$0xf]
      %v3866 = vld [vmem:[%s3862 + $0xc] sm:$0xf]
      %v3867 = vld [vmem:[%s3862 + $0x10] sm:$0xf]
      %v3868 = vld [vmem:[%s3862 + $0x14] sm:$0xf]
      %v3869 = vld [vmem:[%s3862 + $0x18] sm:$0xf]
      %v3870 = vld [vmem:[%s3862 + $0x1c] sm:$0xf]
      %v3871 = vld [vmem:[%s3862 + $0x20] sm:$0xf]
      %v3872 = vld [vmem:[%s3862 + $0x24] sm:$0xf]
      %v3873 = vld [vmem:[%s3862 + $0x28] sm:$0xf]
      %v3874 = vld [vmem:[%s3862 + $0x2c] sm:$0xf]
      %v3875 = vld [vmem:[%s3862 + $0x30] sm:$0xf]
      %v3876 = vld [vmem:[%s3862 + $0x34] sm:$0xf]
      %v3877 = vld [vmem:[%s3862 + $0x38] sm:$0xf]
      %v3878 = vld [vmem:[%s3862 + $0x3c] sm:$0xf]
      %v3895 = vunpack.c.l.b16 %v3863
      %v3896 = vunpack.c.l.b16 %v3864
      %v3897 = vunpack.c.l.b16 %v3865
      %v3898 = vunpack.c.l.b16 %v3866
      %v3899 = vunpack.c.l.b16 %v3867
      %v3900 = vunpack.c.l.b16 %v3868
      %v3901 = vunpack.c.l.b16 %v3869
      %v3902 = vunpack.c.l.b16 %v3870
      %v3903 = vunpack.c.l.b16 %v3871
      %v3904 = vunpack.c.l.b16 %v3872
      %v3905 = vunpack.c.l.b16 %v3873
      %v3906 = vunpack.c.l.b16 %v3874
      %v3907 = vunpack.c.l.b16 %v3875
      %v3908 = vunpack.c.l.b16 %v3876
      %v3909 = vunpack.c.l.b16 %v3877
      %v3910 = vunpack.c.l.b16 %v3878
      %v3911 = vpack.c.b16 %v3896, %v3895
      %v3912 = vpack.c.b16 %v3898, %v3897
      %v3913 = vpack.c.b16 %v3900, %v3899
      %v3914 = vpack.c.b16 %v3902, %v3901
      %v3915 = vpack.c.b16 %v3904, %v3903
      %v3916 = vpack.c.b16 %v3906, %v3905
      %v3917 = vpack.c.b16 %v3908, %v3907
      %v3918 = vpack.c.b16 %v3910, %v3909
      %3927 = vmatprep.subr.bf16.mxu0 0
      %3928 = vmatpush1.bf16.msra.mxu0 %v3918
      %3929 = vmatprep.subr.bf16.mxu0 0
      %3930 = vmatpush1.bf16.msra.mxu0 %v3917
      %3931 = vmatprep.subr.bf16.mxu0 0
      %3932 = vmatpush1.bf16.msra.mxu0 %v3916
      %3933 = vmatprep.subr.bf16.mxu0 0
      %3934 = vmatpush1.bf16.msra.mxu0 %v3915
      %3935 = vmatprep.subr.bf16.mxu0 0
      %3936 = vmatpush1.bf16.msra.mxu0 %v3914
      %3937 = vmatprep.subr.bf16.mxu0 0
      %3938 = vmatpush1.bf16.msra.mxu0 %v3913
      %3939 = vmatprep.subr.bf16.mxu0 0
      %3940 = vmatpush1.bf16.msra.mxu0 %v3912
      %3941 = vmatprep.subr.bf16.mxu0 0
      %3942 = vmatpush1.bf16.msra.mxu0 %v3911
      %3943 = vmatprep.subr.bf16.mxu0 0
      %3944 = vmatpush2.bf16.msra.mxu0 0
      %3945 = vmatprep.subr.bf16.mxu0 0
      %3946 = vmatpush2.bf16.msra.mxu0 0
      %3947 = vmatprep.subr.bf16.mxu0 0
      %3948 = vmatpush2.bf16.msra.mxu0 0
      %3949 = vmatprep.subr.bf16.mxu0 0
      %3950 = vmatpush2.bf16.msra.mxu0 0
      %3951 = vmatprep.subr.bf16.mxu0 0
      %3952 = vmatpush2.bf16.msra.mxu0 0
      %3953 = vmatprep.subr.bf16.mxu0 0
      %3954 = vmatpush2.bf16.msra.mxu0 0
      %3955 = vmatprep.subr.bf16.mxu0 0
      %3956 = vmatpush2.bf16.msra.mxu0 0
      %3957 = vmatprep.subr.bf16.mxu0 0
      %3958 = vmatpush2.bf16.msra.mxu0 0
      %3959 = vmatprep.mubr.bf16.mxu0 0
      %3960 = vmatmul.mubr.bf16.gmra.mxu0 %v3854
      %v3961 = vpop.f32.mrf.mxu0
      %v3962 = vadd.f32 0.0, %v3961
      %v3963 = vpop.f32.mrf.mxu0
      %v3964 = vpop.f32.mrf.mxu0
      %v3965 = vadd.f32 0.0, %v3964
      %v3966 = vpop.f32.mrf.mxu0
      %3967 = vmatprep.mubr.bf16.mxu0 0
      %3968 = vmatmul.mubr.bf16.gmra.mxu0 %v3855
      %v3969 = vpop.f32.mrf.mxu0
      %v3970 = vadd.f32 0.0, %v3969
      %v3971 = vpop.f32.mrf.mxu0
      %v3972 = vpop.f32.mrf.mxu0
      %v3973 = vadd.f32 0.0, %v3972
      %v3974 = vpop.f32.mrf.mxu0
      %3975 = vmatprep.mubr.bf16.mxu0 0
      %3976 = vmatmul.mubr.bf16.gmra.mxu0 %v3856
      %v3977 = vpop.f32.mrf.mxu0
      %v3978 = vadd.f32 0.0, %v3977
      %v3979 = vpop.f32.mrf.mxu0
      %v3980 = vpop.f32.mrf.mxu0
      %v3981 = vadd.f32 0.0, %v3980
      %v3982 = vpop.f32.mrf.mxu0
      %3983 = vmatprep.mubr.bf16.mxu0 0
      %3984 = vmatmul.mubr.bf16.gmra.mxu0 %v3857
      %v3985 = vpop.f32.mrf.mxu0
      %v3986 = vadd.f32 0.0, %v3985
      %v3987 = vpop.f32.mrf.mxu0
      %v3988 = vpop.f32.mrf.mxu0
      %v3989 = vadd.f32 0.0, %v3988
      %v3990 = vpop.f32.mrf.mxu0
      %3991 = vmatprep.mubr.bf16.mxu0 0
      %3992 = vmatmul.mubr.bf16.gmra.mxu0 %v3858
      %v3993 = vpop.f32.mrf.mxu0
      %v3994 = vadd.f32 0.0, %v3993
      %v3995 = vpop.f32.mrf.mxu0
      %v3996 = vpop.f32.mrf.mxu0
      %v3997 = vadd.f32 0.0, %v3996
      %v3998 = vpop.f32.mrf.mxu0
      %3999 = vmatprep.mubr.bf16.mxu0 0
      %4000 = vmatmul.mubr.bf16.gmra.mxu0 %v3859
      %v4001 = vpop.f32.mrf.mxu0
      %v4002 = vadd.f32 0.0, %v4001
      %v4003 = vpop.f32.mrf.mxu0
      %v4004 = vpop.f32.mrf.mxu0
      %v4005 = vadd.f32 0.0, %v4004
      %v4006 = vpop.f32.mrf.mxu0
      %4007 = vmatprep.mubr.bf16.mxu0 0
      %4008 = vmatmul.mubr.bf16.gmra.mxu0 %v3860
      %v4009 = vpop.f32.mrf.mxu0
      %v4010 = vadd.f32 0.0, %v4009
      %v4011 = vpop.f32.mrf.mxu0
      %v4012 = vpop.f32.mrf.mxu0
      %v4013 = vadd.f32 0.0, %v4012
      %v4014 = vpop.f32.mrf.mxu0
      %4015 = vmatprep.mubr.bf16.mxu0 0
      %4016 = vmatmul.mubr.bf16.gmra.mxu0 %v3861
      %v4017 = vpop.f32.mrf.mxu0
      %v4018 = vadd.f32 0.0, %v4017
      %v4019 = vpop.f32.mrf.mxu0
      %v4020 = vpop.f32.mrf.mxu0
      %v4021 = vadd.f32 0.0, %v4020
      %v4022 = vpop.f32.mrf.mxu0
      %4023 = vdwg.mxu0
      %v4024 = vadd.f32 %v3822, %v3962
      %v4025 = vadd.f32 %v3823, %v3965
      %v4026 = vadd.f32 %v3824, %v3970
      %v4027 = vadd.f32 %v3825, %v3973
      %v4028 = vadd.f32 %v3826, %v3978
      %v4029 = vadd.f32 %v3827, %v3981
      %v4030 = vadd.f32 %v3828, %v3986
      %v4031 = vadd.f32 %v3829, %v3989
      %v4032 = vadd.f32 %v3830, %v3994
      %v4033 = vadd.f32 %v3831, %v3997
      %v4034 = vadd.f32 %v3832, %v4002
      %v4035 = vadd.f32 %v3833, %v4005
      %v4036 = vadd.f32 %v3834, %v4010
      %v4037 = vadd.f32 %v3835, %v4013
      %v4038 = vadd.f32 %v3836, %v4018
      %v4039 = vadd.f32 %v3837, %v4021
      %v4040 = vld [vmem:[%s4] sm:$0x1]
      %v4042 = vlaneseq
      %v4043 = vshrl.u32 %v4042, 7
      %v4044 = vsub.s32 0, %v4043
      %v4045 = vrot.slane %v4040, %v4044
      %v4047 = vadd.f32 %v4024, %v4045
      %v4048 = vadd.f32 %v4025, %v4045
      %v4049 = vadd.f32 %v4026, %v4045
      %v4050 = vadd.f32 %v4027, %v4045
      %v4051 = vadd.f32 %v4028, %v4045
      %v4052 = vadd.f32 %v4029, %v4045
      %v4053 = vadd.f32 %v4030, %v4045
      %v4054 = vadd.f32 %v4031, %v4045
      %v4055 = vadd.f32 %v4032, %v4045
      %v4056 = vadd.f32 %v4033, %v4045
      %v4057 = vadd.f32 %v4034, %v4045
      %v4058 = vadd.f32 %v4035, %v4045
      %v4059 = vadd.f32 %v4036, %v4045
      %v4060 = vadd.f32 %v4037, %v4045
      %v4061 = vadd.f32 %v4038, %v4045
      %v4062 = vadd.f32 %v4039, %v4045
      %v4063 = vld [vmem:[%s272] sm:$0xff]
      %v4064 = vld [vmem:[%s272 + $0x8] sm:$0xff]
      %v4065 = vld [vmem:[%s272 + $0x10] sm:$0xff]
      %v4066 = vld [vmem:[%s272 + $0x18] sm:$0xff]
      %v4067 = vld [vmem:[%s272 + $0x20] sm:$0xff]
      %v4068 = vld [vmem:[%s272 + $0x28] sm:$0xff]
      %v4069 = vld [vmem:[%s272 + $0x30] sm:$0xff]
      %v4070 = vld [vmem:[%s272 + $0x38] sm:$0xff]
      %v4071 = vld [vmem:[%s272 + $0x40] sm:$0xff]
      %v4072 = vld [vmem:[%s272 + $0x48] sm:$0xff]
      %v4073 = vld [vmem:[%s272 + $0x50] sm:$0xff]
      %v4074 = vld [vmem:[%s272 + $0x58] sm:$0xff]
      %v4075 = vld [vmem:[%s272 + $0x60] sm:$0xff]
      %v4076 = vld [vmem:[%s272 + $0x68] sm:$0xff]
      %v4077 = vld [vmem:[%s272 + $0x70] sm:$0xff]
      %v4078 = vld [vmem:[%s272 + $0x78] sm:$0xff]
      %v4079 = vadd.f32 %v4047, %v4063
      %v4080 = vadd.f32 %v4048, %v4064
      %v4081 = vadd.f32 %v4049, %v4065
      %v4082 = vadd.f32 %v4050, %v4066
      %v4083 = vadd.f32 %v4051, %v4067
      %v4084 = vadd.f32 %v4052, %v4068
      %v4085 = vadd.f32 %v4053, %v4069
      %v4086 = vadd.f32 %v4054, %v4070
      %v4087 = vadd.f32 %v4055, %v4071
      %v4088 = vadd.f32 %v4056, %v4072
      %v4089 = vadd.f32 %v4057, %v4073
      %v4090 = vadd.f32 %v4058, %v4074
      %v4091 = vadd.f32 %v4059, %v4075
      %v4092 = vadd.f32 %v4060, %v4076
      %v4093 = vadd.f32 %v4061, %v4077
      %v4094 = vadd.f32 %v4062, %v4078
      %v4095 = vmax.f32 %v4079, 0.0
      %v4096 = vmax.f32 %v4080, 0.0
      %v4097 = vmax.f32 %v4081, 0.0
      %v4098 = vmax.f32 %v4082, 0.0
      %v4099 = vmax.f32 %v4083, 0.0
      %v4100 = vmax.f32 %v4084, 0.0
      %v4101 = vmax.f32 %v4085, 0.0
      %v4102 = vmax.f32 %v4086, 0.0
      %v4103 = vmax.f32 %v4087, 0.0
      %v4104 = vmax.f32 %v4088, 0.0
      %v4105 = vmax.f32 %v4089, 0.0
      %v4106 = vmax.f32 %v4090, 0.0
      %v4107 = vmax.f32 %v4091, 0.0
      %v4108 = vmax.f32 %v4092, 0.0
      %v4109 = vmax.f32 %v4093, 0.0
      %v4110 = vmax.f32 %v4094, 0.0
      %4111 = vst [vmem:[%s278] sm:$0xff] %v4095
      %4112 = vst [vmem:[%s278 + $0x8] sm:$0xff] %v4096
      %4113 = vst [vmem:[%s278 + $0x10] sm:$0xff] %v4097
      %4114 = vst [vmem:[%s278 + $0x18] sm:$0xff] %v4098
      %4115 = vst [vmem:[%s278 + $0x20] sm:$0xff] %v4099
      %4116 = vst [vmem:[%s278 + $0x28] sm:$0xff] %v4100
      %4117 = vst [vmem:[%s278 + $0x30] sm:$0xff] %v4101
      %4118 = vst [vmem:[%s278 + $0x38] sm:$0xff] %v4102
      %4119 = vst [vmem:[%s278 + $0x40] sm:$0xff] %v4103
      %4120 = vst [vmem:[%s278 + $0x48] sm:$0xff] %v4104
      %4121 = vst [vmem:[%s278 + $0x50] sm:$0xff] %v4105
      %4122 = vst [vmem:[%s278 + $0x58] sm:$0xff] %v4106
      %4123 = vst [vmem:[%s278 + $0x60] sm:$0xff] %v4107
      %4124 = vst [vmem:[%s278 + $0x68] sm:$0xff] %v4108
      %4125 = vst [vmem:[%s278 + $0x70] sm:$0xff] %v4109
      %4126 = vst [vmem:[%s278 + $0x78] sm:$0xff] %v4110
      %s4127 = smul.u32 16, %s17
      %p4128 = scmp.lt.s32.totalorder %s4127, 63
      %s4129 = scalar_select %p4128, %s4127, 63
      %s4130 = smul.addr %s4129, 8
      %s4131 = scalar_lea.vmem %s6, %s4130
      // Predicated region
      $region45: #{basic_block_forward.1} parent=43 // pred_check
        %p4132 = pneg %p171
      $region46: #{basic_block_forward.1} parent=43 // pred_check_branch
        %4134 = sbr.rel (%p4132) target = $region48
      $region47: #{basic_block_forward.1} parent=43 // pred_region
        %s4135 = smul.u32 16, %s17
      $region48: #{basic_block_forward.1} parent=43 // pred_fallthru
        _
    $region44: #{basic_block_forward.1} parent=5 // pred_fallthru
      _
    %p4136 = scmp.le.s32.totalorder 2, %s12
    // Predicated region
    $region49: #{basic_block_forward.1} parent=5 // pred_check
      %p4137 = pneg %p4136
    $region50: #{basic_block_forward.1} parent=5 // pred_check_branch
      %4139 = sbr.rel (%p4137) target = $region52
    $region51: #{basic_block_forward.1} parent=5 // pred_region
      %s4140 = ssub.s32 %s12, 2
      // Predicated region
      $region53: #{basic_block_forward.1} parent=51 // pred_check
        %p4141 = pneg %p177
      $region54: #{basic_block_forward.1} parent=51 // pred_check_branch
        %4143 = sbr.rel (%p4141) target = $region56
      $region55: #{basic_block_forward.1} parent=51 // pred_region
        %s4144 = smul.u32 16, %s18
        %p4145 = scmp.lt.s32.totalorder %s4144, 63
        %s4146 = scalar_select %p4145, %s4144, 63
        %s4147 = smul.addr %s4146, 8
        %s4148 = scalar_lea.vmem %s6, %s4147
      $region56: #{basic_block_forward.1} parent=51 // pred_fallthru
        _
    $region52: #{basic_block_forward.1} parent=5 // pred_fallthru
      _
  $region6: #{basic_block_forward.1} parent=0 // loop_footer
    %s16 = sadd.s32 1, %s12
  $region7: #{basic_block_forward.1} parent=0 // loop_footer_branch
    %11 = sbr.rel target = $region3
  $region8: #{basic_block_forward.1} parent=0 // loop_exit
    _

</llo_original>
